<compile_context>
chip_gen: v7x
topology: tpu7x:2x2x1
jax: 0.10.0
libtpu: 0.0.40
codegen_flags: <defaults>
</compile_context>

<pallas_src>
import jax
import jax.numpy as jnp
from jax import lax
from jax.experimental import pallas as pl
from jax.experimental.pallas import tpu as pltpu


def _zero_pad_hw(a):
    """1-pixel spatial zero pad of (Nb, H, W, C) -> (Nb, H+2, W+2, C).

    Built with jnp.concatenate (well supported by Mosaic) rather than lax.pad.
    """
    nb, h, w, c = a.shape
    zr = jnp.zeros((nb, 1, w, c), a.dtype)
    a = jnp.concatenate([zr, a, zr], axis=1)
    zc = jnp.zeros((nb, h + 2, 1, c), a.dtype)
    return jnp.concatenate([zc, a, zc], axis=2)


def _im2col_3x3(ap, H, W):
    """Build K-packed 3x3 patches from a spatially padded activation.

    ap: (Nb, H+2, W+2, C) padded activations (Ref or value).
    Returns (Nb*H*W, 9*C); tap order (dy, dx, c) matches HWIO weights
    reshaped to (9*C, Cout).  The sublane-misaligned dx shift is materialized
    once per dx (3x per conv), then reused for every dy.
    """
    nb = ap.shape[0]
    # three dx-shifted slabs (the only misaligned slices)
    sh = [ap[:, :, dx:dx + W, :] for dx in range(3)]
    cols = [sh[dx][:, dy:dy + H, :, :] for dy in range(3) for dx in range(3)]
    patch = jnp.concatenate(cols, axis=-1)          # (Nb, H, W, 9*C)
    return patch.reshape(nb * H * W, patch.shape[-1])


def _make_kernel(nb, H, W, Cin, Cmid, Cout):
    """Fused conv1 -> bn1 -> relu -> conv2 -> bn2 -> relu for `nb` images.

    Each conv is a single bf16 MXU matmul (K = 9*C, M = nb*H*W) with f32
    accumulation; eval-mode BN + conv bias are a folded per-channel
    scale/shift applied in f32.
    """

    def kernel(x_ref, w1_ref, ss1_ref, w2_ref, ss2_ref, o_ref):
        # ---- conv1 (one K = 9*Cin matmul) + bn1 + relu --------------------
        xs = _im2col_3x3(x_ref, H, W).astype(jnp.bfloat16)      # (M, 9*Cin)
        acc1 = jnp.dot(xs, w1_ref[...],
                       preferred_element_type=jnp.float32)       # (M, Cmid)
        y = jnp.maximum(acc1 * ss1_ref[0:1, :] + ss1_ref[1:2, :], 0.0)

        # ---- conv2 (one K = 9*Cmid matmul) + bn2 + relu --------------------
        yp = _zero_pad_hw(y.reshape(nb, H, W, Cmid))             # value-resident
        ys = _im2col_3x3(yp, H, W).astype(jnp.bfloat16)          # (M, 9*Cmid)
        acc2 = jnp.dot(ys, w2_ref[...],
                       preferred_element_type=jnp.float32)       # (M, Cout)
        z = jnp.maximum(acc2 * ss2_ref[0:1, :] + ss2_ref[1:2, :], 0.0)

        # true (unpadded) Cout -> no HBM writeback amplification
        o_ref[...] = z.reshape(nb, H, W, Cout)

    return kernel


def _pick_batch_block(N, H, W, cmax):
    """Block several batch elements per grid step for tiny images so the
    per-step overhead is amortized and the matmul M dimension fills up."""
    budget = 2 * 1024 * 1024                    # bytes for largest im2col slab
    per = max(H * W * 9 * cmax * 4, 1)
    nb = max(1, min(N, budget // per))
    while N % nb:
        nb -= 1
    return nb


def conv_block_nested_forward(x_nchw, params):
    """Forward pass matching the PyTorch module (eval-mode BN).

    x_nchw: (N, Cin, H, W) float32 ;  returns (N, Cout, H, W) float32
    """
    eps = 1e-5
    w1, b1, g1, be1, m1, v1 = (params[k] for k in
                               ("w1", "b1", "gamma1", "beta1", "mean1", "var1"))
    w2, b2, g2, be2, m2, v2 = (params[k] for k in
                               ("w2", "b2", "gamma2", "beta2", "mean2", "var2"))

    N, Cin, H, W = x_nchw.shape
    Cmid = w1.shape[0]
    Cout = w2.shape[0]
    nb = _pick_batch_block(N, H, W, max(Cin, Cmid))

    # NCHW -> NHWC + 1-px spatial pad (presented for the PyTorch interface).
    x_nhwc = jnp.transpose(x_nchw, (0, 2, 3, 1)).astype(jnp.float32)
    x_pad = jnp.pad(x_nhwc, ((0, 0), (1, 1), (1, 1), (0, 0)))

    # OIHW -> HWIO -> (9*Cin, Cmid) / (9*Cmid, Cout), pre-cast to bf16 so the
    # weight DMA bytes are halved and the MXU runs its native bf16 path.
    w1_mat = jnp.transpose(w1, (2, 3, 1, 0)).reshape(9 * Cin, Cmid)
    w1_mat = w1_mat.astype(jnp.bfloat16)
    w2_mat = jnp.transpose(w2, (2, 3, 1, 0)).reshape(9 * Cmid, Cout)
    w2_mat = w2_mat.astype(jnp.bfloat16)

    # Fold BN (eval mode) + conv bias into per-channel scale / shift (f32).
    s1 = (g1 / jnp.sqrt(v1 + eps)).astype(jnp.float32)
    sh1 = ((b1 - m1) * s1 + be1).astype(jnp.float32)
    ss1 = jnp.stack([s1, sh1])                                    # (2, Cmid)
    s2 = (g2 / jnp.sqrt(v2 + eps)).astype(jnp.float32)
    sh2 = ((b2 - m2) * s2 + be2).astype(jnp.float32)
    ss2 = jnp.stack([s2, sh2])                                    # (2, Cout)

    kernel = _make_kernel(nb, H, W, Cin, Cmid, Cout)

    # constant-index inputs (weights / scale-shift): DMA'd once, single-buffered
    const1 = pl.Buffered(1)

    out_nhwc = pl.pallas_call(
        kernel,
        out_shape=jax.ShapeDtypeStruct((N, H, W, Cout), jnp.float32),
        grid_spec=pltpu.PrefetchScalarGridSpec(
            num_scalar_prefetch=0,
            grid=(N // nb,),
            in_specs=[
                pl.BlockSpec((nb, H + 2, W + 2, Cin),
                             lambda n: (n, 0, 0, 0)),
                pl.BlockSpec((9 * Cin, Cmid), lambda n: (0, 0),
                             pipeline_mode=const1),
                pl.BlockSpec((2, Cmid), lambda n: (0, 0),
                             pipeline_mode=const1),
                pl.BlockSpec((9 * Cmid, Cout), lambda n: (0, 0),
                             pipeline_mode=const1),
                pl.BlockSpec((2, Cout), lambda n: (0, 0),
                             pipeline_mode=const1),
            ],
            out_specs=pl.BlockSpec((nb, H, W, Cout),
                                   lambda n: (n, 0, 0, 0)),
        ),
        compiler_params=pltpu.CompilerParams(
            dimension_semantics=("parallel",),
            vmem_limit_bytes=32 * 1024 * 1024),
    )(x_pad, w1_mat, ss1, w2_mat, ss2)

    # NHWC -> NCHW (PyTorch interface)
    return jnp.transpose(out_nhwc, (0, 3, 1, 2))


def _reference_forward(x_nchw, params):
    """Plain-JAX f32 reference (eval-mode BN) for numerical checking."""
    eps = 1e-5

    def conv_bn_relu(x, w, b, g, be, m, v):
        y = lax.conv_general_dilated(
            x, w, window_strides=(1, 1), padding="SAME",
            dimension_numbers=("NCHW", "OIHW", "NCHW"))
        y = y + b[None, :, None, None]
        y = (y - m[None, :, None, None]) / jnp.sqrt(v + eps)[None, :, None, None]
        y = y * g[None, :, None, None] + be[None, :, None, None]
        return jnp.maximum(y, 0.0)

    y = conv_bn_relu(x_nchw, params["w1"], params["b1"], params["gamma1"],
                     params["beta1"], params["mean1"], params["var1"])
    y = conv_bn_relu(y, params["w2"], params["b2"], params["gamma2"],
                     params["beta2"], params["mean2"], params["var2"])
    return y


def _init_params(key, in_ch, mid_ch, out_ch):
    ks = jax.random.split(key, 10)
    return {
        "w1": 0.1 * jax.random.normal(ks[0], (mid_ch, in_ch, 3, 3), jnp.float32),
        "b1": 0.1 * jax.random.normal(ks[1], (mid_ch,), jnp.float32),
        "gamma1": 1.0 + 0.1 * jax.random.normal(ks[2], (mid_ch,), jnp.float32),
        "beta1": 0.1 * jax.random.normal(ks[3], (mid_ch,), jnp.float32),
        "mean1": 0.05 * jax.random.normal(ks[4], (mid_ch,), jnp.float32),
        "var1": 1.0 + 0.1 * jax.random.uniform(ks[5], (mid_ch,), jnp.float32),
        "w2": 0.1 * jax.random.normal(ks[6], (out_ch, mid_ch, 3, 3), jnp.float32),
        "b2": 0.1 * jax.random.normal(ks[7], (out_ch,), jnp.float32),
        "gamma2": 1.0 + 0.1 * jax.random.normal(ks[8], (out_ch,), jnp.float32),
        "beta2": 0.1 * jax.random.normal(ks[9], (out_ch,), jnp.float32),
        "mean2": jnp.zeros((out_ch,), jnp.float32),
        "var2": jnp.ones((out_ch,), jnp.float32),
    }


if __name__ == "__main__":
    key = jax.random.PRNGKey(0)
    k_x, k_p = jax.random.split(key)

    N, Cin, Cmid, Cout, H, W = 2, 4, 8, 4, 16, 16
    x = jax.random.normal(k_x, (N, Cin, H, W), jnp.float32)
    params = _init_params(k_p, Cin, Cmid, Cout)

    out = jax.block_until_ready(conv_block_nested_forward(x, params))
    ref = jax.block_until_ready(_reference_forward(x, params))

    assert out.shape == (N, Cout, H, W)
    err = float(jnp.max(jnp.abs(out - ref)))
    # bf16 MXU operands (f32 accumulation) vs an f32 reference -> loosened tol.
    assert jnp.allclose(out, ref, atol=5e-2, rtol=5e-2), f"max abs err {err}"

    print("KERNEL_OK")
</pallas_src>

<mosaic_0001>
module attributes {stable_mosaic.version = 11 : i64} {
  func.func @kernel(%arg0: i32, %arg1: memref<2x18x18x4xf32, #tpu.memory_space<vmem>>, %arg2: memref<36x8xbf16, #tpu.memory_space<vmem>>, %arg3: memref<2x8xf32, #tpu.memory_space<vmem>>, %arg4: memref<72x4xbf16, #tpu.memory_space<vmem>>, %arg5: memref<2x4xf32, #tpu.memory_space<vmem>>, %arg6: memref<2x16x16x4xf32, #tpu.memory_space<vmem>>) attributes {dimension_semantics = [#tpu.dimension_semantics<parallel>], iteration_bounds = array<i64: 1>, scalar_prefetch = 0 : i64, scratch_operands = 0 : i64, tpu.core_type = #tpu.core_type<tc>, window_params = [{transform_indices = @transform_0, window_bounds = array<i64: 2, 18, 18, 4>}, {pipeline_mode = #tpu.pipeline_mode<synchronous>, transform_indices = @transform_1, window_bounds = array<i64: 36, 8>}, {pipeline_mode = #tpu.pipeline_mode<synchronous>, transform_indices = @transform_2, window_bounds = array<i64: 2, 8>}, {pipeline_mode = #tpu.pipeline_mode<synchronous>, transform_indices = @transform_3, window_bounds = array<i64: 72, 4>}, {pipeline_mode = #tpu.pipeline_mode<synchronous>, transform_indices = @transform_4, window_bounds = array<i64: 2, 4>}, {transform_indices = @transform_5, window_bounds = array<i64: 2, 16, 16, 4>}]} {
    %c0 = arith.constant 0 : index
    %c0_0 = arith.constant 0 : index
    %c0_1 = arith.constant 0 : index
    %c0_2 = arith.constant 0 : index
    %0 = vector.load %arg1[%c0, %c0_0, %c0_1, %c0_2] : memref<2x18x18x4xf32, #tpu.memory_space<vmem>>, vector<2x18x16x4xf32>
    %c0_3 = arith.constant 0 : index
    %c0_4 = arith.constant 0 : index
    %c1 = arith.constant 1 : index
    %c0_5 = arith.constant 0 : index
    %1 = vector.load %arg1[%c0_3, %c0_4, %c1, %c0_5] : memref<2x18x18x4xf32, #tpu.memory_space<vmem>>, vector<2x18x16x4xf32>
    %c0_6 = arith.constant 0 : index
    %c0_7 = arith.constant 0 : index
    %c2 = arith.constant 2 : index
    %c0_8 = arith.constant 0 : index
    %2 = vector.load %arg1[%c0_6, %c0_7, %c2, %c0_8] : memref<2x18x18x4xf32, #tpu.memory_space<vmem>>, vector<2x18x16x4xf32>
    %3 = vector.extract_strided_slice %0 {offsets = [0, 0, 0, 0], sizes = [2, 16, 16, 4], strides = [1, 1, 1, 1]} : vector<2x18x16x4xf32> to vector<2x16x16x4xf32>
    %4 = vector.extract_strided_slice %1 {offsets = [0, 0, 0, 0], sizes = [2, 16, 16, 4], strides = [1, 1, 1, 1]} : vector<2x18x16x4xf32> to vector<2x16x16x4xf32>
    %5 = vector.extract_strided_slice %2 {offsets = [0, 0, 0, 0], sizes = [2, 16, 16, 4], strides = [1, 1, 1, 1]} : vector<2x18x16x4xf32> to vector<2x16x16x4xf32>
    %6 = vector.extract_strided_slice %0 {offsets = [0, 1, 0, 0], sizes = [2, 16, 16, 4], strides = [1, 1, 1, 1]} : vector<2x18x16x4xf32> to vector<2x16x16x4xf32>
    %7 = vector.extract_strided_slice %1 {offsets = [0, 1, 0, 0], sizes = [2, 16, 16, 4], strides = [1, 1, 1, 1]} : vector<2x18x16x4xf32> to vector<2x16x16x4xf32>
    %8 = vector.extract_strided_slice %2 {offsets = [0, 1, 0, 0], sizes = [2, 16, 16, 4], strides = [1, 1, 1, 1]} : vector<2x18x16x4xf32> to vector<2x16x16x4xf32>
    %9 = vector.extract_strided_slice %0 {offsets = [0, 2, 0, 0], sizes = [2, 16, 16, 4], strides = [1, 1, 1, 1]} : vector<2x18x16x4xf32> to vector<2x16x16x4xf32>
    %10 = vector.extract_strided_slice %1 {offsets = [0, 2, 0, 0], sizes = [2, 16, 16, 4], strides = [1, 1, 1, 1]} : vector<2x18x16x4xf32> to vector<2x16x16x4xf32>
    %11 = vector.extract_strided_slice %2 {offsets = [0, 2, 0, 0], sizes = [2, 16, 16, 4], strides = [1, 1, 1, 1]} : vector<2x18x16x4xf32> to vector<2x16x16x4xf32>
    %12 = tpu.concatenate %3, %4, %5, %6, %7, %8, %9, %10, %11 in 3 : vector<2x16x16x4xf32>, vector<2x16x16x4xf32>, vector<2x16x16x4xf32>, vector<2x16x16x4xf32>, vector<2x16x16x4xf32>, vector<2x16x16x4xf32>, vector<2x16x16x4xf32>, vector<2x16x16x4xf32>, vector<2x16x16x4xf32> -> vector<2x16x16x36xf32>
    %13 = vector.shape_cast %12 : vector<2x16x16x36xf32> to vector<512x36xf32>
    %14 = arith.truncf %13 : vector<512x36xf32> to vector<512x36xbf16>
    %c0_9 = arith.constant 0 : index
    %c0_10 = arith.constant 0 : index
    %15 = vector.load %arg2[%c0_9, %c0_10] : memref<36x8xbf16, #tpu.memory_space<vmem>>, vector<36x8xbf16>
    %cst = arith.constant dense<0.000000e+00> : vector<512x8xf32>
    %16 = tpu.matmul %14, %15, %cst {dimension_numbers = #tpu.dot_dimension_numbers<[1], [0], [0], [1], [0, 0, 1, 1], [], []>} : vector<512x36xbf16>, vector<36x8xbf16>, vector<512x8xf32> -> vector<512x8xf32>
    %c0_11 = arith.constant 0 : index
    %c0_12 = arith.constant 0 : index
    %17 = vector.load %arg3[%c0_11, %c0_12] : memref<2x8xf32, #tpu.memory_space<vmem>>, vector<1x8xf32>
    %18 = vector.broadcast %17 : vector<1x8xf32> to vector<512x8xf32>
    %19 = arith.mulf %16, %18 : vector<512x8xf32>
    %c1_13 = arith.constant 1 : index
    %c0_14 = arith.constant 0 : index
    %20 = vector.load %arg3[%c1_13, %c0_14] : memref<2x8xf32, #tpu.memory_space<vmem>>, vector<1x8xf32>
    %21 = vector.broadcast %20 : vector<1x8xf32> to vector<512x8xf32>
    %22 = arith.addf %19, %21 : vector<512x8xf32>
    %cst_15 = arith.constant 0.000000e+00 : f32
    %23 = vector.broadcast %cst_15 : f32 to vector<512x8xf32>
    %24 = arith.maximumf %22, %23 : vector<512x8xf32>
    %25 = vector.shape_cast %24 : vector<512x8xf32> to vector<2x16x16x8xf32>
    %cst_16 = arith.constant 0.000000e+00 : f32
    %26 = vector.broadcast %cst_16 : f32 to vector<2x1x16x8xf32>
    %27 = tpu.concatenate %26, %25, %26 in 1 : vector<2x1x16x8xf32>, vector<2x16x16x8xf32>, vector<2x1x16x8xf32> -> vector<2x18x16x8xf32>
    %cst_17 = arith.constant 0.000000e+00 : f32
    %28 = vector.broadcast %cst_17 : f32 to vector<2x18x1x8xf32>
    %29 = tpu.concatenate %28, %27, %28 in 2 : vector<2x18x1x8xf32>, vector<2x18x16x8xf32>, vector<2x18x1x8xf32> -> vector<2x18x18x8xf32>
    %30 = vector.extract_strided_slice %29 {offsets = [0, 0, 0, 0], sizes = [2, 18, 16, 8], strides = [1, 1, 1, 1]} : vector<2x18x18x8xf32> to vector<2x18x16x8xf32>
    %31 = vector.extract_strided_slice %29 {offsets = [0, 0, 1, 0], sizes = [2, 18, 16, 8], strides = [1, 1, 1, 1]} : vector<2x18x18x8xf32> to vector<2x18x16x8xf32>
    %32 = vector.extract_strided_slice %29 {offsets = [0, 0, 2, 0], sizes = [2, 18, 16, 8], strides = [1, 1, 1, 1]} : vector<2x18x18x8xf32> to vector<2x18x16x8xf32>
    %33 = vector.extract_strided_slice %30 {offsets = [0, 0, 0, 0], sizes = [2, 16, 16, 8], strides = [1, 1, 1, 1]} : vector<2x18x16x8xf32> to vector<2x16x16x8xf32>
    %34 = vector.extract_strided_slice %31 {offsets = [0, 0, 0, 0], sizes = [2, 16, 16, 8], strides = [1, 1, 1, 1]} : vector<2x18x16x8xf32> to vector<2x16x16x8xf32>
    %35 = vector.extract_strided_slice %32 {offsets = [0, 0, 0, 0], sizes = [2, 16, 16, 8], strides = [1, 1, 1, 1]} : vector<2x18x16x8xf32> to vector<2x16x16x8xf32>
    %36 = vector.extract_strided_slice %30 {offsets = [0, 1, 0, 0], sizes = [2, 16, 16, 8], strides = [1, 1, 1, 1]} : vector<2x18x16x8xf32> to vector<2x16x16x8xf32>
    %37 = vector.extract_strided_slice %31 {offsets = [0, 1, 0, 0], sizes = [2, 16, 16, 8], strides = [1, 1, 1, 1]} : vector<2x18x16x8xf32> to vector<2x16x16x8xf32>
    %38 = vector.extract_strided_slice %32 {offsets = [0, 1, 0, 0], sizes = [2, 16, 16, 8], strides = [1, 1, 1, 1]} : vector<2x18x16x8xf32> to vector<2x16x16x8xf32>
    %39 = vector.extract_strided_slice %30 {offsets = [0, 2, 0, 0], sizes = [2, 16, 16, 8], strides = [1, 1, 1, 1]} : vector<2x18x16x8xf32> to vector<2x16x16x8xf32>
    %40 = vector.extract_strided_slice %31 {offsets = [0, 2, 0, 0], sizes = [2, 16, 16, 8], strides = [1, 1, 1, 1]} : vector<2x18x16x8xf32> to vector<2x16x16x8xf32>
    %41 = vector.extract_strided_slice %32 {offsets = [0, 2, 0, 0], sizes = [2, 16, 16, 8], strides = [1, 1, 1, 1]} : vector<2x18x16x8xf32> to vector<2x16x16x8xf32>
    %42 = tpu.concatenate %33, %34, %35, %36, %37, %38, %39, %40, %41 in 3 : vector<2x16x16x8xf32>, vector<2x16x16x8xf32>, vector<2x16x16x8xf32>, vector<2x16x16x8xf32>, vector<2x16x16x8xf32>, vector<2x16x16x8xf32>, vector<2x16x16x8xf32>, vector<2x16x16x8xf32>, vector<2x16x16x8xf32> -> vector<2x16x16x72xf32>
    %43 = vector.shape_cast %42 : vector<2x16x16x72xf32> to vector<512x72xf32>
    %44 = arith.truncf %43 : vector<512x72xf32> to vector<512x72xbf16>
    %c0_18 = arith.constant 0 : index
    %c0_19 = arith.constant 0 : index
    %45 = vector.load %arg4[%c0_18, %c0_19] : memref<72x4xbf16, #tpu.memory_space<vmem>>, vector<72x4xbf16>
    %cst_20 = arith.constant dense<0.000000e+00> : vector<512x4xf32>
    %46 = tpu.matmul %44, %45, %cst_20 {dimension_numbers = #tpu.dot_dimension_numbers<[1], [0], [0], [1], [0, 0, 1, 1], [], []>} : vector<512x72xbf16>, vector<72x4xbf16>, vector<512x4xf32> -> vector<512x4xf32>
    %c0_21 = arith.constant 0 : index
    %c0_22 = arith.constant 0 : index
    %47 = vector.load %arg5[%c0_21, %c0_22] : memref<2x4xf32, #tpu.memory_space<vmem>>, vector<1x4xf32>
    %48 = vector.broadcast %47 : vector<1x4xf32> to vector<512x4xf32>
    %49 = arith.mulf %46, %48 : vector<512x4xf32>
    %c1_23 = arith.constant 1 : index
    %c0_24 = arith.constant 0 : index
    %50 = vector.load %arg5[%c1_23, %c0_24] : memref<2x4xf32, #tpu.memory_space<vmem>>, vector<1x4xf32>
    %51 = vector.broadcast %50 : vector<1x4xf32> to vector<512x4xf32>
    %52 = arith.addf %49, %51 : vector<512x4xf32>
    %cst_25 = arith.constant 0.000000e+00 : f32
    %53 = vector.broadcast %cst_25 : f32 to vector<512x4xf32>
    %54 = arith.maximumf %52, %53 : vector<512x4xf32>
    %55 = vector.shape_cast %54 : vector<512x4xf32> to vector<2x16x16x4xf32>
    %c0_26 = arith.constant 0 : index
    %c0_27 = arith.constant 0 : index
    %c0_28 = arith.constant 0 : index
    %c0_29 = arith.constant 0 : index
    %56 = vector.load %arg6[%c0_26, %c0_27, %c0_28, %c0_29] : memref<2x16x16x4xf32, #tpu.memory_space<vmem>>, vector<2x16x16x4xf32>
    tpu.vector_store %arg6[%c0_26, %c0_27, %c0_28, %c0_29], %55 {strides = array<i32>} : memref<2x16x16x4xf32, #tpu.memory_space<vmem>>, vector<2x16x16x4xf32>,
    return
  }
  func.func @transform_0(%arg0: i32) -> (i32, i32, i32, i32) {
    %c0_i32 = arith.constant 0 : i32
    %c0_i32_0 = arith.constant 0 : i32
    %c0_i32_1 = arith.constant 0 : i32
    %c0_i32_2 = arith.constant 0 : i32
    return %arg0, %c0_i32, %c0_i32_0, %c0_i32_1 : i32, i32, i32, i32
  }
  func.func @transform_1(%arg0: i32) -> (i32, i32) {
    %c0_i32 = arith.constant 0 : i32
    %c0_i32_0 = arith.constant 0 : i32
    %c0_i32_1 = arith.constant 0 : i32
    return %c0_i32, %c0_i32_0 : i32, i32
  }
  func.func @transform_2(%arg0: i32) -> (i32, i32) {
    %c0_i32 = arith.constant 0 : i32
    %c0_i32_0 = arith.constant 0 : i32
    %c0_i32_1 = arith.constant 0 : i32
    return %c0_i32, %c0_i32_0 : i32, i32
  }
  func.func @transform_3(%arg0: i32) -> (i32, i32) {
    %c0_i32 = arith.constant 0 : i32
    %c0_i32_0 = arith.constant 0 : i32
    %c0_i32_1 = arith.constant 0 : i32
    return %c0_i32, %c0_i32_0 : i32, i32
  }
  func.func @transform_4(%arg0: i32) -> (i32, i32) {
    %c0_i32 = arith.constant 0 : i32
    %c0_i32_0 = arith.constant 0 : i32
    %c0_i32_1 = arith.constant 0 : i32
    return %c0_i32, %c0_i32_0 : i32, i32
  }
  func.func @transform_5(%arg0: i32) -> (i32, i32, i32, i32) {
    %c0_i32 = arith.constant 0 : i32
    %c0_i32_0 = arith.constant 0 : i32
    %c0_i32_1 = arith.constant 0 : i32
    %c0_i32_2 = arith.constant 0 : i32
    return %arg0, %c0_i32, %c0_i32_0, %c0_i32_1 : i32, i32, i32, i32
  }
}

</mosaic_0001>

<llo_original>
// kernel: tpu_custom_call.1
$region0: #{tpu_custom_call.1}
  #allocation0 [shape = 'u32[]', space=smem, size = 0x4, offset = 0x4, fixed_abs, tag = 'smem constant byte address 0x4 - core index']
  #allocation1 [shape = 'u32[144,128]{1,0:T(1,128)}', space=vmem, size = 0x12000, scoped, tag = 'internal scratch']
  %s0 = inlined_call_operand.vmem [shape: f32[2,18,18,4], index: 0, kind: input, shape index: {}]
  %s1 = inlined_call_operand.vmem [shape: bf16[36,8], index: 1, kind: input, shape index: {}]
  %s2 = inlined_call_operand.vmem [shape: f32[2,8], index: 2, kind: input, shape index: {}]
  %s3 = inlined_call_operand.vmem [shape: bf16[72,4], index: 3, kind: input, shape index: {}]
  %s4 = inlined_call_operand.vmem [shape: f32[2,4], index: 4, kind: input, shape index: {}]
  %s5 = inlined_call_operand.vmem [shape: f32[2,16,16,4], index: 5, kind: output, shape index: {}]
  %s6 = sld [smem:[#allocation0]]
  $region30: #{tpu_custom_call.1} parent=0
    _
  %s8 = ssub.s32 1, %s6
  %s9 = scalar_select 0, %s8, %s6
  // Predicated region
  $region2: #{tpu_custom_call.1} parent=0 // pred_check
    _
  $region3: #{tpu_custom_call.1} parent=0 // pred_check_branch
    %11 = sbr.rel (0) target = $region5
  $region4: #{tpu_custom_call.1} parent=0 // pred_region
    _
  $region5: #{tpu_custom_call.1} parent=0 // pred_fallthru
    _
  // Predicated region
  $region6: #{tpu_custom_call.1} parent=0 // pred_check
    _
  $region7: #{tpu_custom_call.1} parent=0 // pred_check_branch
    %13 = sbr.rel (0) target = $region9
  $region8: #{tpu_custom_call.1} parent=0 // pred_region
    _
  $region9: #{tpu_custom_call.1} parent=0 // pred_fallthru
    _
  // Predicated region
  $region10: #{tpu_custom_call.1} parent=0 // pred_check
    _
  $region11: #{tpu_custom_call.1} parent=0 // pred_check_branch
    %15 = sbr.rel (0) target = $region13
  $region12: #{tpu_custom_call.1} parent=0 // pred_region
    _
  $region13: #{tpu_custom_call.1} parent=0 // pred_fallthru
    _
  // Predicated region
  $region14: #{tpu_custom_call.1} parent=0 // pred_check
    _
  $region15: #{tpu_custom_call.1} parent=0 // pred_check_branch
    %17 = sbr.rel (0) target = $region17
  $region16: #{tpu_custom_call.1} parent=0 // pred_region
    _
  $region17: #{tpu_custom_call.1} parent=0 // pred_fallthru
    _
  // Predicated region
  $region18: #{tpu_custom_call.1} parent=0 // pred_check
    _
  $region19: #{tpu_custom_call.1} parent=0 // pred_check_branch
    %19 = sbr.rel (0) target = $region21
  $region20: #{tpu_custom_call.1} parent=0 // pred_region
    _
  $region21: #{tpu_custom_call.1} parent=0 // pred_fallthru
    _
  %v21 = vld [vmem:[%s0] sm:$0xff]
  %v22 = vld [vmem:[%s0 + $0x8] sm:$0xff]
  %v23 = vld [vmem:[%s0 + $0x18] sm:$0xff]
  %v24 = vld [vmem:[%s0 + $0x20] sm:$0xff]
  %v25 = vld [vmem:[%s0 + $0x30] sm:$0xff]
  %v26 = vld [vmem:[%s0 + $0x38] sm:$0xff]
  %v27 = vld [vmem:[%s0 + $0x48] sm:$0xff]
  %v28 = vld [vmem:[%s0 + $0x50] sm:$0xff]
  %v29 = vld [vmem:[%s0 + $0x60] sm:$0xff]
  %v30 = vld [vmem:[%s0 + $0x68] sm:$0xff]
  %v31 = vld [vmem:[%s0 + $0x78] sm:$0xff]
  %v32 = vld [vmem:[%s0 + $0x80] sm:$0xff]
  %v33 = vld [vmem:[%s0 + $0x90] sm:$0xff]
  %v34 = vld [vmem:[%s0 + $0x98] sm:$0xff]
  %v35 = vld [vmem:[%s0 + $0xa8] sm:$0xff]
  %v36 = vld [vmem:[%s0 + $0xb0] sm:$0xff]
  %v37 = vld [vmem:[%s0 + $0xc0] sm:$0xff]
  %v38 = vld [vmem:[%s0 + $0xc8] sm:$0xff]
  %v39 = vld [vmem:[%s0 + $0xd8] sm:$0xff]
  %v40 = vld [vmem:[%s0 + $0xe0] sm:$0xff]
  %v41 = vld [vmem:[%s0 + $0xf0] sm:$0xff]
  %v42 = vld [vmem:[%s0 + $0xf8] sm:$0xff]
  %v43 = vld [vmem:[%s0 + $0x108] sm:$0xff]
  %v44 = vld [vmem:[%s0 + $0x110] sm:$0xff]
  %v45 = vld [vmem:[%s0 + $0x120] sm:$0xff]
  %v46 = vld [vmem:[%s0 + $0x128] sm:$0xff]
  %v47 = vld [vmem:[%s0 + $0x138] sm:$0xff]
  %v48 = vld [vmem:[%s0 + $0x140] sm:$0xff]
  %v49 = vld [vmem:[%s0 + $0x150] sm:$0xff]
  %v50 = vld [vmem:[%s0 + $0x158] sm:$0xff]
  %v51 = vld [vmem:[%s0 + $0x168] sm:$0xff]
  %v52 = vld [vmem:[%s0 + $0x170] sm:$0xff]
  %v53 = vld [vmem:[%s0 + $0x180] sm:$0xff]
  %v54 = vld [vmem:[%s0 + $0x188] sm:$0xff]
  %v55 = vld [vmem:[%s0 + $0x198] sm:$0xff]
  %v56 = vld [vmem:[%s0 + $0x1a0] sm:$0xff]
  %v57 = vld [vmem:[%s0 + $0x1b0] sm:$0xff]
  %v58 = vld [vmem:[%s0 + $0x1b8] sm:$0xff]
  %v59 = vld [vmem:[%s0 + $0x1c8] sm:$0xff]
  %v60 = vld [vmem:[%s0 + $0x1d0] sm:$0xff]
  %v61 = vld [vmem:[%s0 + $0x1e0] sm:$0xff]
  %v62 = vld [vmem:[%s0 + $0x1e8] sm:$0xff]
  %v63 = vld [vmem:[%s0 + $0x1f8] sm:$0xff]
  %v64 = vld [vmem:[%s0 + $0x200] sm:$0xff]
  %v65 = vld [vmem:[%s0 + $0x210] sm:$0xff]
  %v66 = vld [vmem:[%s0 + $0x218] sm:$0xff]
  %v67 = vld [vmem:[%s0 + $0x228] sm:$0xff]
  %v68 = vld [vmem:[%s0 + $0x230] sm:$0xff]
  %v69 = vld [vmem:[%s0 + $0x240] sm:$0xff]
  %v70 = vld [vmem:[%s0 + $0x248] sm:$0xff]
  %v71 = vld [vmem:[%s0 + $0x258] sm:$0xff]
  %v72 = vld [vmem:[%s0 + $0x260] sm:$0xff]
  %v73 = vld [vmem:[%s0 + $0x270] sm:$0xff]
  %v74 = vld [vmem:[%s0 + $0x278] sm:$0xff]
  %v75 = vld [vmem:[%s0 + $0x288] sm:$0xff]
  %v76 = vld [vmem:[%s0 + $0x290] sm:$0xff]
  %v77 = vld [vmem:[%s0 + $0x2a0] sm:$0xff]
  %v78 = vld [vmem:[%s0 + $0x2a8] sm:$0xff]
  %v79 = vld [vmem:[%s0 + $0x2b8] sm:$0xff]
  %v80 = vld [vmem:[%s0 + $0x2c0] sm:$0xff]
  %v81 = vld [vmem:[%s0 + $0x2d0] sm:$0xff]
  %v82 = vld [vmem:[%s0 + $0x2d8] sm:$0xff]
  %v83 = vld [vmem:[%s0 + $0x2e8] sm:$0xff]
  %v84 = vld [vmem:[%s0 + $0x2f0] sm:$0xff]
  %v85 = vld [vmem:[%s0 + $0x300] sm:$0xff]
  %v86 = vld [vmem:[%s0 + $0x308] sm:$0xff]
  %v87 = vld [vmem:[%s0 + $0x318] sm:$0xff]
  %v88 = vld [vmem:[%s0 + $0x320] sm:$0xff]
  %v89 = vld [vmem:[%s0 + $0x330] sm:$0xff]
  %v90 = vld [vmem:[%s0 + $0x338] sm:$0xff]
  %v91 = vld [vmem:[%s0 + $0x348] sm:$0xff]
  %v92 = vld [vmem:[%s0 + $0x350] sm:$0xff]
  %v93 = vld [vmem:[%s0 + $0x1] sm:$0xff]
  %v94 = vld [vmem:[%s0 + $0x9] sm:$0xff]
  %v95 = vld [vmem:[%s0 + $0x19] sm:$0xff]
  %v96 = vld [vmem:[%s0 + $0x21] sm:$0xff]
  %v97 = vld [vmem:[%s0 + $0x31] sm:$0xff]
  %v98 = vld [vmem:[%s0 + $0x39] sm:$0xff]
  %v99 = vld [vmem:[%s0 + $0x49] sm:$0xff]
  %v100 = vld [vmem:[%s0 + $0x51] sm:$0xff]
  %v101 = vld [vmem:[%s0 + $0x61] sm:$0xff]
  %v102 = vld [vmem:[%s0 + $0x69] sm:$0xff]
  %v103 = vld [vmem:[%s0 + $0x79] sm:$0xff]
  %v104 = vld [vmem:[%s0 + $0x81] sm:$0xff]
  %v105 = vld [vmem:[%s0 + $0x91] sm:$0xff]
  %v106 = vld [vmem:[%s0 + $0x99] sm:$0xff]
  %v107 = vld [vmem:[%s0 + $0xa9] sm:$0xff]
  %v108 = vld [vmem:[%s0 + $0xb1] sm:$0xff]
  %v109 = vld [vmem:[%s0 + $0xc1] sm:$0xff]
  %v110 = vld [vmem:[%s0 + $0xc9] sm:$0xff]
  %v111 = vld [vmem:[%s0 + $0xd9] sm:$0xff]
  %v112 = vld [vmem:[%s0 + $0xe1] sm:$0xff]
  %v113 = vld [vmem:[%s0 + $0xf1] sm:$0xff]
  %v114 = vld [vmem:[%s0 + $0xf9] sm:$0xff]
  %v115 = vld [vmem:[%s0 + $0x109] sm:$0xff]
  %v116 = vld [vmem:[%s0 + $0x111] sm:$0xff]
  %v117 = vld [vmem:[%s0 + $0x121] sm:$0xff]
  %v118 = vld [vmem:[%s0 + $0x129] sm:$0xff]
  %v119 = vld [vmem:[%s0 + $0x139] sm:$0xff]
  %v120 = vld [vmem:[%s0 + $0x141] sm:$0xff]
  %v121 = vld [vmem:[%s0 + $0x151] sm:$0xff]
  %v122 = vld [vmem:[%s0 + $0x159] sm:$0xff]
  %v123 = vld [vmem:[%s0 + $0x169] sm:$0xff]
  %v124 = vld [vmem:[%s0 + $0x171] sm:$0xff]
  %v125 = vld [vmem:[%s0 + $0x181] sm:$0xff]
  %v126 = vld [vmem:[%s0 + $0x189] sm:$0xff]
  %v127 = vld [vmem:[%s0 + $0x199] sm:$0xff]
  %v128 = vld [vmem:[%s0 + $0x1a1] sm:$0xff]
  %v129 = vld [vmem:[%s0 + $0x1b1] sm:$0xff]
  %v130 = vld [vmem:[%s0 + $0x1b9] sm:$0xff]
  %v131 = vld [vmem:[%s0 + $0x1c9] sm:$0xff]
  %v132 = vld [vmem:[%s0 + $0x1d1] sm:$0xff]
  %v133 = vld [vmem:[%s0 + $0x1e1] sm:$0xff]
  %v134 = vld [vmem:[%s0 + $0x1e9] sm:$0xff]
  %v135 = vld [vmem:[%s0 + $0x1f9] sm:$0xff]
  %v136 = vld [vmem:[%s0 + $0x201] sm:$0xff]
  %v137 = vld [vmem:[%s0 + $0x211] sm:$0xff]
  %v138 = vld [vmem:[%s0 + $0x219] sm:$0xff]
  %v139 = vld [vmem:[%s0 + $0x229] sm:$0xff]
  %v140 = vld [vmem:[%s0 + $0x231] sm:$0xff]
  %v141 = vld [vmem:[%s0 + $0x241] sm:$0xff]
  %v142 = vld [vmem:[%s0 + $0x249] sm:$0xff]
  %v143 = vld [vmem:[%s0 + $0x259] sm:$0xff]
  %v144 = vld [vmem:[%s0 + $0x261] sm:$0xff]
  %v145 = vld [vmem:[%s0 + $0x271] sm:$0xff]
  %v146 = vld [vmem:[%s0 + $0x279] sm:$0xff]
  %v147 = vld [vmem:[%s0 + $0x289] sm:$0xff]
  %v148 = vld [vmem:[%s0 + $0x291] sm:$0xff]
  %v149 = vld [vmem:[%s0 + $0x2a1] sm:$0xff]
  %v150 = vld [vmem:[%s0 + $0x2a9] sm:$0xff]
  %v151 = vld [vmem:[%s0 + $0x2b9] sm:$0xff]
  %v152 = vld [vmem:[%s0 + $0x2c1] sm:$0xff]
  %v153 = vld [vmem:[%s0 + $0x2d1] sm:$0xff]
  %v154 = vld [vmem:[%s0 + $0x2d9] sm:$0xff]
  %v155 = vld [vmem:[%s0 + $0x2e9] sm:$0xff]
  %v156 = vld [vmem:[%s0 + $0x2f1] sm:$0xff]
  %v157 = vld [vmem:[%s0 + $0x301] sm:$0xff]
  %v158 = vld [vmem:[%s0 + $0x309] sm:$0xff]
  %v159 = vld [vmem:[%s0 + $0x319] sm:$0xff]
  %v160 = vld [vmem:[%s0 + $0x321] sm:$0xff]
  %v161 = vld [vmem:[%s0 + $0x331] sm:$0xff]
  %v162 = vld [vmem:[%s0 + $0x339] sm:$0xff]
  %v163 = vld [vmem:[%s0 + $0x349] sm:$0xff]
  %v164 = vld [vmem:[%s0 + $0x351] sm:$0xff]
  %v165 = vld [vmem:[%s0 + $0x2] sm:$0xff]
  %v166 = vld [vmem:[%s0 + $0xa] sm:$0xff]
  %v167 = vld [vmem:[%s0 + $0x1a] sm:$0xff]
  %v168 = vld [vmem:[%s0 + $0x22] sm:$0xff]
  %v169 = vld [vmem:[%s0 + $0x32] sm:$0xff]
  %v170 = vld [vmem:[%s0 + $0x3a] sm:$0xff]
  %v171 = vld [vmem:[%s0 + $0x4a] sm:$0xff]
  %v172 = vld [vmem:[%s0 + $0x52] sm:$0xff]
  %v173 = vld [vmem:[%s0 + $0x62] sm:$0xff]
  %v174 = vld [vmem:[%s0 + $0x6a] sm:$0xff]
  %v175 = vld [vmem:[%s0 + $0x7a] sm:$0xff]
  %v176 = vld [vmem:[%s0 + $0x82] sm:$0xff]
  %v177 = vld [vmem:[%s0 + $0x92] sm:$0xff]
  %v178 = vld [vmem:[%s0 + $0x9a] sm:$0xff]
  %v179 = vld [vmem:[%s0 + $0xaa] sm:$0xff]
  %v180 = vld [vmem:[%s0 + $0xb2] sm:$0xff]
  %v181 = vld [vmem:[%s0 + $0xc2] sm:$0xff]
  %v182 = vld [vmem:[%s0 + $0xca] sm:$0xff]
  %v183 = vld [vmem:[%s0 + $0xda] sm:$0xff]
  %v184 = vld [vmem:[%s0 + $0xe2] sm:$0xff]
  %v185 = vld [vmem:[%s0 + $0xf2] sm:$0xff]
  %v186 = vld [vmem:[%s0 + $0xfa] sm:$0xff]
  %v187 = vld [vmem:[%s0 + $0x10a] sm:$0xff]
  %v188 = vld [vmem:[%s0 + $0x112] sm:$0xff]
  %v189 = vld [vmem:[%s0 + $0x122] sm:$0xff]
  %v190 = vld [vmem:[%s0 + $0x12a] sm:$0xff]
  %v191 = vld [vmem:[%s0 + $0x13a] sm:$0xff]
  %v192 = vld [vmem:[%s0 + $0x142] sm:$0xff]
  %v193 = vld [vmem:[%s0 + $0x152] sm:$0xff]
  %v194 = vld [vmem:[%s0 + $0x15a] sm:$0xff]
  %v195 = vld [vmem:[%s0 + $0x16a] sm:$0xff]
  %v196 = vld [vmem:[%s0 + $0x172] sm:$0xff]
  %v197 = vld [vmem:[%s0 + $0x182] sm:$0xff]
  %v198 = vld [vmem:[%s0 + $0x18a] sm:$0xff]
  %v199 = vld [vmem:[%s0 + $0x19a] sm:$0xff]
  %v200 = vld [vmem:[%s0 + $0x1a2] sm:$0xff]
  %v201 = vld [vmem:[%s0 + $0x1b2] sm:$0xff]
  %v202 = vld [vmem:[%s0 + $0x1ba] sm:$0xff]
  %v203 = vld [vmem:[%s0 + $0x1ca] sm:$0xff]
  %v204 = vld [vmem:[%s0 + $0x1d2] sm:$0xff]
  %v205 = vld [vmem:[%s0 + $0x1e2] sm:$0xff]
  %v206 = vld [vmem:[%s0 + $0x1ea] sm:$0xff]
  %v207 = vld [vmem:[%s0 + $0x1fa] sm:$0xff]
  %v208 = vld [vmem:[%s0 + $0x202] sm:$0xff]
  %v209 = vld [vmem:[%s0 + $0x212] sm:$0xff]
  %v210 = vld [vmem:[%s0 + $0x21a] sm:$0xff]
  %v211 = vld [vmem:[%s0 + $0x22a] sm:$0xff]
  %v212 = vld [vmem:[%s0 + $0x232] sm:$0xff]
  %v213 = vld [vmem:[%s0 + $0x242] sm:$0xff]
  %v214 = vld [vmem:[%s0 + $0x24a] sm:$0xff]
  %v215 = vld [vmem:[%s0 + $0x25a] sm:$0xff]
  %v216 = vld [vmem:[%s0 + $0x262] sm:$0xff]
  %v217 = vld [vmem:[%s0 + $0x272] sm:$0xff]
  %v218 = vld [vmem:[%s0 + $0x27a] sm:$0xff]
  %v219 = vld [vmem:[%s0 + $0x28a] sm:$0xff]
  %v220 = vld [vmem:[%s0 + $0x292] sm:$0xff]
  %v221 = vld [vmem:[%s0 + $0x2a2] sm:$0xff]
  %v222 = vld [vmem:[%s0 + $0x2aa] sm:$0xff]
  %v223 = vld [vmem:[%s0 + $0x2ba] sm:$0xff]
  %v224 = vld [vmem:[%s0 + $0x2c2] sm:$0xff]
  %v225 = vld [vmem:[%s0 + $0x2d2] sm:$0xff]
  %v226 = vld [vmem:[%s0 + $0x2da] sm:$0xff]
  %v227 = vld [vmem:[%s0 + $0x2ea] sm:$0xff]
  %v228 = vld [vmem:[%s0 + $0x2f2] sm:$0xff]
  %v229 = vld [vmem:[%s0 + $0x302] sm:$0xff]
  %v230 = vld [vmem:[%s0 + $0x30a] sm:$0xff]
  %v231 = vld [vmem:[%s0 + $0x31a] sm:$0xff]
  %v232 = vld [vmem:[%s0 + $0x322] sm:$0xff]
  %v233 = vld [vmem:[%s0 + $0x332] sm:$0xff]
  %v234 = vld [vmem:[%s0 + $0x33a] sm:$0xff]
  %v235 = vld [vmem:[%s0 + $0x34a] sm:$0xff]
  %v236 = vld [vmem:[%s0 + $0x352] sm:$0xff]
  %301 = vrot.lane.b32.xlu0 %v93, 4
  %v302 = vpop.permute.xlu0 %301
  %303 = vrot.lane.b32.xlu0 %v94, 4
  %v304 = vpop.permute.xlu0 %303
  %305 = vrot.lane.b32.xlu0 %v95, 4
  %v306 = vpop.permute.xlu0 %305
  %307 = vrot.lane.b32.xlu0 %v96, 4
  %v308 = vpop.permute.xlu0 %307
  %309 = vrot.lane.b32.xlu0 %v97, 4
  %v310 = vpop.permute.xlu0 %309
  %311 = vrot.lane.b32.xlu0 %v98, 4
  %v312 = vpop.permute.xlu0 %311
  %313 = vrot.lane.b32.xlu0 %v99, 4
  %v314 = vpop.permute.xlu0 %313
  %315 = vrot.lane.b32.xlu0 %v100, 4
  %v316 = vpop.permute.xlu0 %315
  %317 = vrot.lane.b32.xlu0 %v101, 4
  %v318 = vpop.permute.xlu0 %317
  %319 = vrot.lane.b32.xlu0 %v102, 4
  %v320 = vpop.permute.xlu0 %319
  %321 = vrot.lane.b32.xlu0 %v103, 4
  %v322 = vpop.permute.xlu0 %321
  %323 = vrot.lane.b32.xlu0 %v104, 4
  %v324 = vpop.permute.xlu0 %323
  %325 = vrot.lane.b32.xlu0 %v105, 4
  %v326 = vpop.permute.xlu0 %325
  %327 = vrot.lane.b32.xlu0 %v106, 4
  %v328 = vpop.permute.xlu0 %327
  %329 = vrot.lane.b32.xlu0 %v107, 4
  %v330 = vpop.permute.xlu0 %329
  %331 = vrot.lane.b32.xlu0 %v108, 4
  %v332 = vpop.permute.xlu0 %331
  %333 = vrot.lane.b32.xlu0 %v109, 4
  %v334 = vpop.permute.xlu0 %333
  %335 = vrot.lane.b32.xlu0 %v110, 4
  %v336 = vpop.permute.xlu0 %335
  %337 = vrot.lane.b32.xlu0 %v111, 4
  %v338 = vpop.permute.xlu0 %337
  %339 = vrot.lane.b32.xlu0 %v112, 4
  %v340 = vpop.permute.xlu0 %339
  %341 = vrot.lane.b32.xlu0 %v113, 4
  %v342 = vpop.permute.xlu0 %341
  %343 = vrot.lane.b32.xlu0 %v114, 4
  %v344 = vpop.permute.xlu0 %343
  %345 = vrot.lane.b32.xlu0 %v115, 4
  %v346 = vpop.permute.xlu0 %345
  %347 = vrot.lane.b32.xlu0 %v116, 4
  %v348 = vpop.permute.xlu0 %347
  %349 = vrot.lane.b32.xlu0 %v117, 4
  %v350 = vpop.permute.xlu0 %349
  %351 = vrot.lane.b32.xlu0 %v118, 4
  %v352 = vpop.permute.xlu0 %351
  %353 = vrot.lane.b32.xlu0 %v119, 4
  %v354 = vpop.permute.xlu0 %353
  %355 = vrot.lane.b32.xlu0 %v120, 4
  %v356 = vpop.permute.xlu0 %355
  %357 = vrot.lane.b32.xlu0 %v121, 4
  %v358 = vpop.permute.xlu0 %357
  %359 = vrot.lane.b32.xlu0 %v122, 4
  %v360 = vpop.permute.xlu0 %359
  %361 = vrot.lane.b32.xlu0 %v123, 4
  %v362 = vpop.permute.xlu0 %361
  %363 = vrot.lane.b32.xlu0 %v124, 4
  %v364 = vpop.permute.xlu0 %363
  %365 = vrot.lane.b32.xlu0 %v129, 4
  %v366 = vpop.permute.xlu0 %365
  %367 = vrot.lane.b32.xlu0 %v130, 4
  %v368 = vpop.permute.xlu0 %367
  %369 = vrot.lane.b32.xlu0 %v131, 4
  %v370 = vpop.permute.xlu0 %369
  %371 = vrot.lane.b32.xlu0 %v132, 4
  %v372 = vpop.permute.xlu0 %371
  %373 = vrot.lane.b32.xlu0 %v133, 4
  %v374 = vpop.permute.xlu0 %373
  %375 = vrot.lane.b32.xlu0 %v134, 4
  %v376 = vpop.permute.xlu0 %375
  %377 = vrot.lane.b32.xlu0 %v135, 4
  %v378 = vpop.permute.xlu0 %377
  %379 = vrot.lane.b32.xlu0 %v136, 4
  %v380 = vpop.permute.xlu0 %379
  %381 = vrot.lane.b32.xlu0 %v137, 4
  %v382 = vpop.permute.xlu0 %381
  %383 = vrot.lane.b32.xlu0 %v138, 4
  %v384 = vpop.permute.xlu0 %383
  %385 = vrot.lane.b32.xlu0 %v139, 4
  %v386 = vpop.permute.xlu0 %385
  %387 = vrot.lane.b32.xlu0 %v140, 4
  %v388 = vpop.permute.xlu0 %387
  %389 = vrot.lane.b32.xlu0 %v141, 4
  %v390 = vpop.permute.xlu0 %389
  %391 = vrot.lane.b32.xlu0 %v142, 4
  %v392 = vpop.permute.xlu0 %391
  %393 = vrot.lane.b32.xlu0 %v143, 4
  %v394 = vpop.permute.xlu0 %393
  %395 = vrot.lane.b32.xlu0 %v144, 4
  %v396 = vpop.permute.xlu0 %395
  %397 = vrot.lane.b32.xlu0 %v145, 4
  %v398 = vpop.permute.xlu0 %397
  %399 = vrot.lane.b32.xlu0 %v146, 4
  %v400 = vpop.permute.xlu0 %399
  %401 = vrot.lane.b32.xlu0 %v147, 4
  %v402 = vpop.permute.xlu0 %401
  %403 = vrot.lane.b32.xlu0 %v148, 4
  %v404 = vpop.permute.xlu0 %403
  %405 = vrot.lane.b32.xlu0 %v149, 4
  %v406 = vpop.permute.xlu0 %405
  %407 = vrot.lane.b32.xlu0 %v150, 4
  %v408 = vpop.permute.xlu0 %407
  %409 = vrot.lane.b32.xlu0 %v151, 4
  %v410 = vpop.permute.xlu0 %409
  %411 = vrot.lane.b32.xlu0 %v152, 4
  %v412 = vpop.permute.xlu0 %411
  %413 = vrot.lane.b32.xlu0 %v153, 4
  %v414 = vpop.permute.xlu0 %413
  %415 = vrot.lane.b32.xlu0 %v154, 4
  %v416 = vpop.permute.xlu0 %415
  %417 = vrot.lane.b32.xlu0 %v155, 4
  %v418 = vpop.permute.xlu0 %417
  %419 = vrot.lane.b32.xlu0 %v156, 4
  %v420 = vpop.permute.xlu0 %419
  %421 = vrot.lane.b32.xlu0 %v157, 4
  %v422 = vpop.permute.xlu0 %421
  %423 = vrot.lane.b32.xlu0 %v158, 4
  %v424 = vpop.permute.xlu0 %423
  %425 = vrot.lane.b32.xlu0 %v159, 4
  %v426 = vpop.permute.xlu0 %425
  %427 = vrot.lane.b32.xlu0 %v160, 4
  %v428 = vpop.permute.xlu0 %427
  %557 = vrot.lane.b32.xlu0 %v165, 8
  %v558 = vpop.permute.xlu0 %557
  %559 = vrot.lane.b32.xlu0 %v166, 8
  %v560 = vpop.permute.xlu0 %559
  %561 = vrot.lane.b32.xlu0 %v167, 8
  %v562 = vpop.permute.xlu0 %561
  %563 = vrot.lane.b32.xlu0 %v168, 8
  %v564 = vpop.permute.xlu0 %563
  %565 = vrot.lane.b32.xlu0 %v169, 8
  %v566 = vpop.permute.xlu0 %565
  %567 = vrot.lane.b32.xlu0 %v170, 8
  %v568 = vpop.permute.xlu0 %567
  %569 = vrot.lane.b32.xlu0 %v171, 8
  %v570 = vpop.permute.xlu0 %569
  %571 = vrot.lane.b32.xlu0 %v172, 8
  %v572 = vpop.permute.xlu0 %571
  %573 = vrot.lane.b32.xlu0 %v173, 8
  %v574 = vpop.permute.xlu0 %573
  %575 = vrot.lane.b32.xlu0 %v174, 8
  %v576 = vpop.permute.xlu0 %575
  %577 = vrot.lane.b32.xlu0 %v175, 8
  %v578 = vpop.permute.xlu0 %577
  %579 = vrot.lane.b32.xlu0 %v176, 8
  %v580 = vpop.permute.xlu0 %579
  %581 = vrot.lane.b32.xlu0 %v177, 8
  %v582 = vpop.permute.xlu0 %581
  %583 = vrot.lane.b32.xlu0 %v178, 8
  %v584 = vpop.permute.xlu0 %583
  %585 = vrot.lane.b32.xlu0 %v179, 8
  %v586 = vpop.permute.xlu0 %585
  %587 = vrot.lane.b32.xlu0 %v180, 8
  %v588 = vpop.permute.xlu0 %587
  %589 = vrot.lane.b32.xlu0 %v181, 8
  %v590 = vpop.permute.xlu0 %589
  %591 = vrot.lane.b32.xlu0 %v182, 8
  %v592 = vpop.permute.xlu0 %591
  %593 = vrot.lane.b32.xlu0 %v183, 8
  %v594 = vpop.permute.xlu0 %593
  %595 = vrot.lane.b32.xlu0 %v184, 8
  %v596 = vpop.permute.xlu0 %595
  %597 = vrot.lane.b32.xlu0 %v185, 8
  %v598 = vpop.permute.xlu0 %597
  %599 = vrot.lane.b32.xlu0 %v186, 8
  %v600 = vpop.permute.xlu0 %599
  %601 = vrot.lane.b32.xlu0 %v187, 8
  %v602 = vpop.permute.xlu0 %601
  %603 = vrot.lane.b32.xlu0 %v188, 8
  %v604 = vpop.permute.xlu0 %603
  %605 = vrot.lane.b32.xlu0 %v189, 8
  %v606 = vpop.permute.xlu0 %605
  %607 = vrot.lane.b32.xlu0 %v190, 8
  %v608 = vpop.permute.xlu0 %607
  %609 = vrot.lane.b32.xlu0 %v191, 8
  %v610 = vpop.permute.xlu0 %609
  %611 = vrot.lane.b32.xlu0 %v192, 8
  %v612 = vpop.permute.xlu0 %611
  %613 = vrot.lane.b32.xlu0 %v193, 8
  %v614 = vpop.permute.xlu0 %613
  %615 = vrot.lane.b32.xlu0 %v194, 8
  %v616 = vpop.permute.xlu0 %615
  %617 = vrot.lane.b32.xlu0 %v195, 8
  %v618 = vpop.permute.xlu0 %617
  %619 = vrot.lane.b32.xlu0 %v196, 8
  %v620 = vpop.permute.xlu0 %619
  %621 = vrot.lane.b32.xlu0 %v201, 8
  %v622 = vpop.permute.xlu0 %621
  %623 = vrot.lane.b32.xlu0 %v202, 8
  %v624 = vpop.permute.xlu0 %623
  %625 = vrot.lane.b32.xlu0 %v203, 8
  %v626 = vpop.permute.xlu0 %625
  %627 = vrot.lane.b32.xlu0 %v204, 8
  %v628 = vpop.permute.xlu0 %627
  %629 = vrot.lane.b32.xlu0 %v205, 8
  %v630 = vpop.permute.xlu0 %629
  %631 = vrot.lane.b32.xlu0 %v206, 8
  %v632 = vpop.permute.xlu0 %631
  %633 = vrot.lane.b32.xlu0 %v207, 8
  %v634 = vpop.permute.xlu0 %633
  %635 = vrot.lane.b32.xlu0 %v208, 8
  %v636 = vpop.permute.xlu0 %635
  %637 = vrot.lane.b32.xlu0 %v209, 8
  %v638 = vpop.permute.xlu0 %637
  %639 = vrot.lane.b32.xlu0 %v210, 8
  %v640 = vpop.permute.xlu0 %639
  %641 = vrot.lane.b32.xlu0 %v211, 8
  %v642 = vpop.permute.xlu0 %641
  %643 = vrot.lane.b32.xlu0 %v212, 8
  %v644 = vpop.permute.xlu0 %643
  %645 = vrot.lane.b32.xlu0 %v213, 8
  %v646 = vpop.permute.xlu0 %645
  %647 = vrot.lane.b32.xlu0 %v214, 8
  %v648 = vpop.permute.xlu0 %647
  %649 = vrot.lane.b32.xlu0 %v215, 8
  %v650 = vpop.permute.xlu0 %649
  %651 = vrot.lane.b32.xlu0 %v216, 8
  %v652 = vpop.permute.xlu0 %651
  %653 = vrot.lane.b32.xlu0 %v217, 8
  %v654 = vpop.permute.xlu0 %653
  %655 = vrot.lane.b32.xlu0 %v218, 8
  %v656 = vpop.permute.xlu0 %655
  %657 = vrot.lane.b32.xlu0 %v219, 8
  %v658 = vpop.permute.xlu0 %657
  %659 = vrot.lane.b32.xlu0 %v220, 8
  %v660 = vpop.permute.xlu0 %659
  %661 = vrot.lane.b32.xlu0 %v221, 8
  %v662 = vpop.permute.xlu0 %661
  %663 = vrot.lane.b32.xlu0 %v222, 8
  %v664 = vpop.permute.xlu0 %663
  %665 = vrot.lane.b32.xlu0 %v223, 8
  %v666 = vpop.permute.xlu0 %665
  %667 = vrot.lane.b32.xlu0 %v224, 8
  %v668 = vpop.permute.xlu0 %667
  %669 = vrot.lane.b32.xlu0 %v225, 8
  %v670 = vpop.permute.xlu0 %669
  %671 = vrot.lane.b32.xlu0 %v226, 8
  %v672 = vpop.permute.xlu0 %671
  %673 = vrot.lane.b32.xlu0 %v227, 8
  %v674 = vpop.permute.xlu0 %673
  %675 = vrot.lane.b32.xlu0 %v228, 8
  %v676 = vpop.permute.xlu0 %675
  %677 = vrot.lane.b32.xlu0 %v229, 8
  %v678 = vpop.permute.xlu0 %677
  %679 = vrot.lane.b32.xlu0 %v230, 8
  %v680 = vpop.permute.xlu0 %679
  %681 = vrot.lane.b32.xlu0 %v231, 8
  %v682 = vpop.permute.xlu0 %681
  %683 = vrot.lane.b32.xlu0 %v232, 8
  %v684 = vpop.permute.xlu0 %683
  %813 = vrot.lane.b32.xlu0 %v23, 12
  %v814 = vpop.permute.xlu0 %813
  %815 = vrot.lane.b32.xlu0 %v24, 12
  %v816 = vpop.permute.xlu0 %815
  %817 = vrot.lane.b32.xlu0 %v25, 12
  %v818 = vpop.permute.xlu0 %817
  %819 = vrot.lane.b32.xlu0 %v26, 12
  %v820 = vpop.permute.xlu0 %819
  %821 = vrot.lane.b32.xlu0 %v27, 12
  %v822 = vpop.permute.xlu0 %821
  %823 = vrot.lane.b32.xlu0 %v28, 12
  %v824 = vpop.permute.xlu0 %823
  %825 = vrot.lane.b32.xlu0 %v29, 12
  %v826 = vpop.permute.xlu0 %825
  %827 = vrot.lane.b32.xlu0 %v30, 12
  %v828 = vpop.permute.xlu0 %827
  %829 = vrot.lane.b32.xlu0 %v31, 12
  %v830 = vpop.permute.xlu0 %829
  %831 = vrot.lane.b32.xlu0 %v32, 12
  %v832 = vpop.permute.xlu0 %831
  %833 = vrot.lane.b32.xlu0 %v33, 12
  %v834 = vpop.permute.xlu0 %833
  %835 = vrot.lane.b32.xlu0 %v34, 12
  %v836 = vpop.permute.xlu0 %835
  %837 = vrot.lane.b32.xlu0 %v35, 12
  %v838 = vpop.permute.xlu0 %837
  %839 = vrot.lane.b32.xlu0 %v36, 12
  %v840 = vpop.permute.xlu0 %839
  %841 = vrot.lane.b32.xlu0 %v37, 12
  %v842 = vpop.permute.xlu0 %841
  %843 = vrot.lane.b32.xlu0 %v38, 12
  %v844 = vpop.permute.xlu0 %843
  %845 = vrot.lane.b32.xlu0 %v39, 12
  %v846 = vpop.permute.xlu0 %845
  %847 = vrot.lane.b32.xlu0 %v40, 12
  %v848 = vpop.permute.xlu0 %847
  %849 = vrot.lane.b32.xlu0 %v41, 12
  %v850 = vpop.permute.xlu0 %849
  %851 = vrot.lane.b32.xlu0 %v42, 12
  %v852 = vpop.permute.xlu0 %851
  %853 = vrot.lane.b32.xlu0 %v43, 12
  %v854 = vpop.permute.xlu0 %853
  %855 = vrot.lane.b32.xlu0 %v44, 12
  %v856 = vpop.permute.xlu0 %855
  %857 = vrot.lane.b32.xlu0 %v45, 12
  %v858 = vpop.permute.xlu0 %857
  %859 = vrot.lane.b32.xlu0 %v46, 12
  %v860 = vpop.permute.xlu0 %859
  %861 = vrot.lane.b32.xlu0 %v47, 12
  %v862 = vpop.permute.xlu0 %861
  %863 = vrot.lane.b32.xlu0 %v48, 12
  %v864 = vpop.permute.xlu0 %863
  %865 = vrot.lane.b32.xlu0 %v49, 12
  %v866 = vpop.permute.xlu0 %865
  %867 = vrot.lane.b32.xlu0 %v50, 12
  %v868 = vpop.permute.xlu0 %867
  %869 = vrot.lane.b32.xlu0 %v51, 12
  %v870 = vpop.permute.xlu0 %869
  %871 = vrot.lane.b32.xlu0 %v52, 12
  %v872 = vpop.permute.xlu0 %871
  %873 = vrot.lane.b32.xlu0 %v53, 12
  %v874 = vpop.permute.xlu0 %873
  %875 = vrot.lane.b32.xlu0 %v54, 12
  %v876 = vpop.permute.xlu0 %875
  %877 = vrot.lane.b32.xlu0 %v59, 12
  %v878 = vpop.permute.xlu0 %877
  %879 = vrot.lane.b32.xlu0 %v60, 12
  %v880 = vpop.permute.xlu0 %879
  %881 = vrot.lane.b32.xlu0 %v61, 12
  %v882 = vpop.permute.xlu0 %881
  %883 = vrot.lane.b32.xlu0 %v62, 12
  %v884 = vpop.permute.xlu0 %883
  %885 = vrot.lane.b32.xlu0 %v63, 12
  %v886 = vpop.permute.xlu0 %885
  %887 = vrot.lane.b32.xlu0 %v64, 12
  %v888 = vpop.permute.xlu0 %887
  %889 = vrot.lane.b32.xlu0 %v65, 12
  %v890 = vpop.permute.xlu0 %889
  %891 = vrot.lane.b32.xlu0 %v66, 12
  %v892 = vpop.permute.xlu0 %891
  %893 = vrot.lane.b32.xlu0 %v67, 12
  %v894 = vpop.permute.xlu0 %893
  %895 = vrot.lane.b32.xlu0 %v68, 12
  %v896 = vpop.permute.xlu0 %895
  %897 = vrot.lane.b32.xlu0 %v69, 12
  %v898 = vpop.permute.xlu0 %897
  %899 = vrot.lane.b32.xlu0 %v70, 12
  %v900 = vpop.permute.xlu0 %899
  %901 = vrot.lane.b32.xlu0 %v71, 12
  %v902 = vpop.permute.xlu0 %901
  %903 = vrot.lane.b32.xlu0 %v72, 12
  %v904 = vpop.permute.xlu0 %903
  %905 = vrot.lane.b32.xlu0 %v73, 12
  %v906 = vpop.permute.xlu0 %905
  %907 = vrot.lane.b32.xlu0 %v74, 12
  %v908 = vpop.permute.xlu0 %907
  %909 = vrot.lane.b32.xlu0 %v75, 12
  %v910 = vpop.permute.xlu0 %909
  %911 = vrot.lane.b32.xlu0 %v76, 12
  %v912 = vpop.permute.xlu0 %911
  %913 = vrot.lane.b32.xlu0 %v77, 12
  %v914 = vpop.permute.xlu0 %913
  %915 = vrot.lane.b32.xlu0 %v78, 12
  %v916 = vpop.permute.xlu0 %915
  %917 = vrot.lane.b32.xlu0 %v79, 12
  %v918 = vpop.permute.xlu0 %917
  %919 = vrot.lane.b32.xlu0 %v80, 12
  %v920 = vpop.permute.xlu0 %919
  %921 = vrot.lane.b32.xlu0 %v81, 12
  %v922 = vpop.permute.xlu0 %921
  %923 = vrot.lane.b32.xlu0 %v82, 12
  %v924 = vpop.permute.xlu0 %923
  %925 = vrot.lane.b32.xlu0 %v83, 12
  %v926 = vpop.permute.xlu0 %925
  %927 = vrot.lane.b32.xlu0 %v84, 12
  %v928 = vpop.permute.xlu0 %927
  %929 = vrot.lane.b32.xlu0 %v85, 12
  %v930 = vpop.permute.xlu0 %929
  %931 = vrot.lane.b32.xlu0 %v86, 12
  %v932 = vpop.permute.xlu0 %931
  %933 = vrot.lane.b32.xlu0 %v87, 12
  %v934 = vpop.permute.xlu0 %933
  %935 = vrot.lane.b32.xlu0 %v88, 12
  %v936 = vpop.permute.xlu0 %935
  %937 = vrot.lane.b32.xlu0 %v89, 12
  %v938 = vpop.permute.xlu0 %937
  %939 = vrot.lane.b32.xlu0 %v90, 12
  %v940 = vpop.permute.xlu0 %939
  %1009 = vrot.lane.b32.xlu0 %v95, 16
  %v1010 = vpop.permute.xlu0 %1009
  %1011 = vrot.lane.b32.xlu0 %v96, 16
  %v1012 = vpop.permute.xlu0 %1011
  %1013 = vrot.lane.b32.xlu0 %v97, 16
  %v1014 = vpop.permute.xlu0 %1013
  %1015 = vrot.lane.b32.xlu0 %v98, 16
  %v1016 = vpop.permute.xlu0 %1015
  %1017 = vrot.lane.b32.xlu0 %v99, 16
  %v1018 = vpop.permute.xlu0 %1017
  %1019 = vrot.lane.b32.xlu0 %v100, 16
  %v1020 = vpop.permute.xlu0 %1019
  %1021 = vrot.lane.b32.xlu0 %v101, 16
  %v1022 = vpop.permute.xlu0 %1021
  %1023 = vrot.lane.b32.xlu0 %v102, 16
  %v1024 = vpop.permute.xlu0 %1023
  %1025 = vrot.lane.b32.xlu0 %v103, 16
  %v1026 = vpop.permute.xlu0 %1025
  %1027 = vrot.lane.b32.xlu0 %v104, 16
  %v1028 = vpop.permute.xlu0 %1027
  %1029 = vrot.lane.b32.xlu0 %v105, 16
  %v1030 = vpop.permute.xlu0 %1029
  %1031 = vrot.lane.b32.xlu0 %v106, 16
  %v1032 = vpop.permute.xlu0 %1031
  %1033 = vrot.lane.b32.xlu0 %v107, 16
  %v1034 = vpop.permute.xlu0 %1033
  %1035 = vrot.lane.b32.xlu0 %v108, 16
  %v1036 = vpop.permute.xlu0 %1035
  %1037 = vrot.lane.b32.xlu0 %v109, 16
  %v1038 = vpop.permute.xlu0 %1037
  %1039 = vrot.lane.b32.xlu0 %v110, 16
  %v1040 = vpop.permute.xlu0 %1039
  %1041 = vrot.lane.b32.xlu0 %v111, 16
  %v1042 = vpop.permute.xlu0 %1041
  %1043 = vrot.lane.b32.xlu0 %v112, 16
  %v1044 = vpop.permute.xlu0 %1043
  %1045 = vrot.lane.b32.xlu0 %v113, 16
  %v1046 = vpop.permute.xlu0 %1045
  %1047 = vrot.lane.b32.xlu0 %v114, 16
  %v1048 = vpop.permute.xlu0 %1047
  %1049 = vrot.lane.b32.xlu0 %v115, 16
  %v1050 = vpop.permute.xlu0 %1049
  %1051 = vrot.lane.b32.xlu0 %v116, 16
  %v1052 = vpop.permute.xlu0 %1051
  %1053 = vrot.lane.b32.xlu0 %v117, 16
  %v1054 = vpop.permute.xlu0 %1053
  %1055 = vrot.lane.b32.xlu0 %v118, 16
  %v1056 = vpop.permute.xlu0 %1055
  %1057 = vrot.lane.b32.xlu0 %v119, 16
  %v1058 = vpop.permute.xlu0 %1057
  %1059 = vrot.lane.b32.xlu0 %v120, 16
  %v1060 = vpop.permute.xlu0 %1059
  %1061 = vrot.lane.b32.xlu0 %v121, 16
  %v1062 = vpop.permute.xlu0 %1061
  %1063 = vrot.lane.b32.xlu0 %v122, 16
  %v1064 = vpop.permute.xlu0 %1063
  %1065 = vrot.lane.b32.xlu0 %v123, 16
  %v1066 = vpop.permute.xlu0 %1065
  %1067 = vrot.lane.b32.xlu0 %v124, 16
  %v1068 = vpop.permute.xlu0 %1067
  %1069 = vrot.lane.b32.xlu0 %v125, 16
  %v1070 = vpop.permute.xlu0 %1069
  %1071 = vrot.lane.b32.xlu0 %v126, 16
  %v1072 = vpop.permute.xlu0 %1071
  %1073 = vrot.lane.b32.xlu0 %v131, 16
  %v1074 = vpop.permute.xlu0 %1073
  %1075 = vrot.lane.b32.xlu0 %v132, 16
  %v1076 = vpop.permute.xlu0 %1075
  %1077 = vrot.lane.b32.xlu0 %v133, 16
  %v1078 = vpop.permute.xlu0 %1077
  %1079 = vrot.lane.b32.xlu0 %v134, 16
  %v1080 = vpop.permute.xlu0 %1079
  %1081 = vrot.lane.b32.xlu0 %v135, 16
  %v1082 = vpop.permute.xlu0 %1081
  %1083 = vrot.lane.b32.xlu0 %v136, 16
  %v1084 = vpop.permute.xlu0 %1083
  %1085 = vrot.lane.b32.xlu0 %v137, 16
  %v1086 = vpop.permute.xlu0 %1085
  %1087 = vrot.lane.b32.xlu0 %v138, 16
  %v1088 = vpop.permute.xlu0 %1087
  %1089 = vrot.lane.b32.xlu0 %v139, 16
  %v1090 = vpop.permute.xlu0 %1089
  %1091 = vrot.lane.b32.xlu0 %v140, 16
  %v1092 = vpop.permute.xlu0 %1091
  %1093 = vrot.lane.b32.xlu0 %v141, 16
  %v1094 = vpop.permute.xlu0 %1093
  %1095 = vrot.lane.b32.xlu0 %v142, 16
  %v1096 = vpop.permute.xlu0 %1095
  %1097 = vrot.lane.b32.xlu0 %v143, 16
  %v1098 = vpop.permute.xlu0 %1097
  %1099 = vrot.lane.b32.xlu0 %v144, 16
  %v1100 = vpop.permute.xlu0 %1099
  %1101 = vrot.lane.b32.xlu0 %v145, 16
  %v1102 = vpop.permute.xlu0 %1101
  %1103 = vrot.lane.b32.xlu0 %v146, 16
  %v1104 = vpop.permute.xlu0 %1103
  %1105 = vrot.lane.b32.xlu0 %v147, 16
  %v1106 = vpop.permute.xlu0 %1105
  %1107 = vrot.lane.b32.xlu0 %v148, 16
  %v1108 = vpop.permute.xlu0 %1107
  %1109 = vrot.lane.b32.xlu0 %v149, 16
  %v1110 = vpop.permute.xlu0 %1109
  %1111 = vrot.lane.b32.xlu0 %v150, 16
  %v1112 = vpop.permute.xlu0 %1111
  %1113 = vrot.lane.b32.xlu0 %v151, 16
  %v1114 = vpop.permute.xlu0 %1113
  %1115 = vrot.lane.b32.xlu0 %v152, 16
  %v1116 = vpop.permute.xlu0 %1115
  %1117 = vrot.lane.b32.xlu0 %v153, 16
  %v1118 = vpop.permute.xlu0 %1117
  %1119 = vrot.lane.b32.xlu0 %v154, 16
  %v1120 = vpop.permute.xlu0 %1119
  %1121 = vrot.lane.b32.xlu0 %v155, 16
  %v1122 = vpop.permute.xlu0 %1121
  %1123 = vrot.lane.b32.xlu0 %v156, 16
  %v1124 = vpop.permute.xlu0 %1123
  %1125 = vrot.lane.b32.xlu0 %v157, 16
  %v1126 = vpop.permute.xlu0 %1125
  %1127 = vrot.lane.b32.xlu0 %v158, 16
  %v1128 = vpop.permute.xlu0 %1127
  %1129 = vrot.lane.b32.xlu0 %v159, 16
  %v1130 = vpop.permute.xlu0 %1129
  %1131 = vrot.lane.b32.xlu0 %v160, 16
  %v1132 = vpop.permute.xlu0 %1131
  %1133 = vrot.lane.b32.xlu0 %v161, 16
  %v1134 = vpop.permute.xlu0 %1133
  %1135 = vrot.lane.b32.xlu0 %v162, 16
  %v1136 = vpop.permute.xlu0 %1135
  %1205 = vrot.lane.b32.xlu0 %v167, 20
  %v1206 = vpop.permute.xlu0 %1205
  %1207 = vrot.lane.b32.xlu0 %v168, 20
  %v1208 = vpop.permute.xlu0 %1207
  %1209 = vrot.lane.b32.xlu0 %v169, 20
  %v1210 = vpop.permute.xlu0 %1209
  %1211 = vrot.lane.b32.xlu0 %v170, 20
  %v1212 = vpop.permute.xlu0 %1211
  %1213 = vrot.lane.b32.xlu0 %v171, 20
  %v1214 = vpop.permute.xlu0 %1213
  %1215 = vrot.lane.b32.xlu0 %v172, 20
  %v1216 = vpop.permute.xlu0 %1215
  %1217 = vrot.lane.b32.xlu0 %v173, 20
  %v1218 = vpop.permute.xlu0 %1217
  %1219 = vrot.lane.b32.xlu0 %v174, 20
  %v1220 = vpop.permute.xlu0 %1219
  %1221 = vrot.lane.b32.xlu0 %v175, 20
  %v1222 = vpop.permute.xlu0 %1221
  %1223 = vrot.lane.b32.xlu0 %v176, 20
  %v1224 = vpop.permute.xlu0 %1223
  %1225 = vrot.lane.b32.xlu0 %v177, 20
  %v1226 = vpop.permute.xlu0 %1225
  %1227 = vrot.lane.b32.xlu0 %v178, 20
  %v1228 = vpop.permute.xlu0 %1227
  %1229 = vrot.lane.b32.xlu0 %v179, 20
  %v1230 = vpop.permute.xlu0 %1229
  %1231 = vrot.lane.b32.xlu0 %v180, 20
  %v1232 = vpop.permute.xlu0 %1231
  %1233 = vrot.lane.b32.xlu0 %v181, 20
  %v1234 = vpop.permute.xlu0 %1233
  %1235 = vrot.lane.b32.xlu0 %v182, 20
  %v1236 = vpop.permute.xlu0 %1235
  %1237 = vrot.lane.b32.xlu0 %v183, 20
  %v1238 = vpop.permute.xlu0 %1237
  %1239 = vrot.lane.b32.xlu0 %v184, 20
  %v1240 = vpop.permute.xlu0 %1239
  %1241 = vrot.lane.b32.xlu0 %v185, 20
  %v1242 = vpop.permute.xlu0 %1241
  %1243 = vrot.lane.b32.xlu0 %v186, 20
  %v1244 = vpop.permute.xlu0 %1243
  %1245 = vrot.lane.b32.xlu0 %v187, 20
  %v1246 = vpop.permute.xlu0 %1245
  %1247 = vrot.lane.b32.xlu0 %v188, 20
  %v1248 = vpop.permute.xlu0 %1247
  %1249 = vrot.lane.b32.xlu0 %v189, 20
  %v1250 = vpop.permute.xlu0 %1249
  %1251 = vrot.lane.b32.xlu0 %v190, 20
  %v1252 = vpop.permute.xlu0 %1251
  %1253 = vrot.lane.b32.xlu0 %v191, 20
  %v1254 = vpop.permute.xlu0 %1253
  %1255 = vrot.lane.b32.xlu0 %v192, 20
  %v1256 = vpop.permute.xlu0 %1255
  %1257 = vrot.lane.b32.xlu0 %v193, 20
  %v1258 = vpop.permute.xlu0 %1257
  %1259 = vrot.lane.b32.xlu0 %v194, 20
  %v1260 = vpop.permute.xlu0 %1259
  %1261 = vrot.lane.b32.xlu0 %v195, 20
  %v1262 = vpop.permute.xlu0 %1261
  %1263 = vrot.lane.b32.xlu0 %v196, 20
  %v1264 = vpop.permute.xlu0 %1263
  %1265 = vrot.lane.b32.xlu0 %v197, 20
  %v1266 = vpop.permute.xlu0 %1265
  %1267 = vrot.lane.b32.xlu0 %v198, 20
  %v1268 = vpop.permute.xlu0 %1267
  %1269 = vrot.lane.b32.xlu0 %v203, 20
  %v1270 = vpop.permute.xlu0 %1269
  %1271 = vrot.lane.b32.xlu0 %v204, 20
  %v1272 = vpop.permute.xlu0 %1271
  %1273 = vrot.lane.b32.xlu0 %v205, 20
  %v1274 = vpop.permute.xlu0 %1273
  %1275 = vrot.lane.b32.xlu0 %v206, 20
  %v1276 = vpop.permute.xlu0 %1275
  %1277 = vrot.lane.b32.xlu0 %v207, 20
  %v1278 = vpop.permute.xlu0 %1277
  %1279 = vrot.lane.b32.xlu0 %v208, 20
  %v1280 = vpop.permute.xlu0 %1279
  %1281 = vrot.lane.b32.xlu0 %v209, 20
  %v1282 = vpop.permute.xlu0 %1281
  %1283 = vrot.lane.b32.xlu0 %v210, 20
  %v1284 = vpop.permute.xlu0 %1283
  %1285 = vrot.lane.b32.xlu0 %v211, 20
  %v1286 = vpop.permute.xlu0 %1285
  %1287 = vrot.lane.b32.xlu0 %v212, 20
  %v1288 = vpop.permute.xlu0 %1287
  %1289 = vrot.lane.b32.xlu0 %v213, 20
  %v1290 = vpop.permute.xlu0 %1289
  %1291 = vrot.lane.b32.xlu0 %v214, 20
  %v1292 = vpop.permute.xlu0 %1291
  %1293 = vrot.lane.b32.xlu0 %v215, 20
  %v1294 = vpop.permute.xlu0 %1293
  %1295 = vrot.lane.b32.xlu0 %v216, 20
  %v1296 = vpop.permute.xlu0 %1295
  %1297 = vrot.lane.b32.xlu0 %v217, 20
  %v1298 = vpop.permute.xlu0 %1297
  %1299 = vrot.lane.b32.xlu0 %v218, 20
  %v1300 = vpop.permute.xlu0 %1299
  %1301 = vrot.lane.b32.xlu0 %v219, 20
  %v1302 = vpop.permute.xlu0 %1301
  %1303 = vrot.lane.b32.xlu0 %v220, 20
  %v1304 = vpop.permute.xlu0 %1303
  %1305 = vrot.lane.b32.xlu0 %v221, 20
  %v1306 = vpop.permute.xlu0 %1305
  %1307 = vrot.lane.b32.xlu0 %v222, 20
  %v1308 = vpop.permute.xlu0 %1307
  %1309 = vrot.lane.b32.xlu0 %v223, 20
  %v1310 = vpop.permute.xlu0 %1309
  %1311 = vrot.lane.b32.xlu0 %v224, 20
  %v1312 = vpop.permute.xlu0 %1311
  %1313 = vrot.lane.b32.xlu0 %v225, 20
  %v1314 = vpop.permute.xlu0 %1313
  %1315 = vrot.lane.b32.xlu0 %v226, 20
  %v1316 = vpop.permute.xlu0 %1315
  %1317 = vrot.lane.b32.xlu0 %v227, 20
  %v1318 = vpop.permute.xlu0 %1317
  %1319 = vrot.lane.b32.xlu0 %v228, 20
  %v1320 = vpop.permute.xlu0 %1319
  %1321 = vrot.lane.b32.xlu0 %v229, 20
  %v1322 = vpop.permute.xlu0 %1321
  %1323 = vrot.lane.b32.xlu0 %v230, 20
  %v1324 = vpop.permute.xlu0 %1323
  %1325 = vrot.lane.b32.xlu0 %v231, 20
  %v1326 = vpop.permute.xlu0 %1325
  %1327 = vrot.lane.b32.xlu0 %v232, 20
  %v1328 = vpop.permute.xlu0 %1327
  %1329 = vrot.lane.b32.xlu0 %v233, 20
  %v1330 = vpop.permute.xlu0 %1329
  %1331 = vrot.lane.b32.xlu0 %v234, 20
  %v1332 = vpop.permute.xlu0 %1331
  %1401 = vrot.lane.b32.xlu0 %v25, 24
  %v1402 = vpop.permute.xlu0 %1401
  %1403 = vrot.lane.b32.xlu0 %v26, 24
  %v1404 = vpop.permute.xlu0 %1403
  %1405 = vrot.lane.b32.xlu0 %v27, 24
  %v1406 = vpop.permute.xlu0 %1405
  %1407 = vrot.lane.b32.xlu0 %v28, 24
  %v1408 = vpop.permute.xlu0 %1407
  %1409 = vrot.lane.b32.xlu0 %v29, 24
  %v1410 = vpop.permute.xlu0 %1409
  %1411 = vrot.lane.b32.xlu0 %v30, 24
  %v1412 = vpop.permute.xlu0 %1411
  %1413 = vrot.lane.b32.xlu0 %v31, 24
  %v1414 = vpop.permute.xlu0 %1413
  %1415 = vrot.lane.b32.xlu0 %v32, 24
  %v1416 = vpop.permute.xlu0 %1415
  %1417 = vrot.lane.b32.xlu0 %v33, 24
  %v1418 = vpop.permute.xlu0 %1417
  %1419 = vrot.lane.b32.xlu0 %v34, 24
  %v1420 = vpop.permute.xlu0 %1419
  %1421 = vrot.lane.b32.xlu0 %v35, 24
  %v1422 = vpop.permute.xlu0 %1421
  %1423 = vrot.lane.b32.xlu0 %v36, 24
  %v1424 = vpop.permute.xlu0 %1423
  %1425 = vrot.lane.b32.xlu0 %v37, 24
  %v1426 = vpop.permute.xlu0 %1425
  %1427 = vrot.lane.b32.xlu0 %v38, 24
  %v1428 = vpop.permute.xlu0 %1427
  %1429 = vrot.lane.b32.xlu0 %v39, 24
  %v1430 = vpop.permute.xlu0 %1429
  %1431 = vrot.lane.b32.xlu0 %v40, 24
  %v1432 = vpop.permute.xlu0 %1431
  %1433 = vrot.lane.b32.xlu0 %v41, 24
  %v1434 = vpop.permute.xlu0 %1433
  %1435 = vrot.lane.b32.xlu0 %v42, 24
  %v1436 = vpop.permute.xlu0 %1435
  %1437 = vrot.lane.b32.xlu0 %v43, 24
  %v1438 = vpop.permute.xlu0 %1437
  %1439 = vrot.lane.b32.xlu0 %v44, 24
  %v1440 = vpop.permute.xlu0 %1439
  %1441 = vrot.lane.b32.xlu0 %v45, 24
  %v1442 = vpop.permute.xlu0 %1441
  %1443 = vrot.lane.b32.xlu0 %v46, 24
  %v1444 = vpop.permute.xlu0 %1443
  %1445 = vrot.lane.b32.xlu0 %v47, 24
  %v1446 = vpop.permute.xlu0 %1445
  %1447 = vrot.lane.b32.xlu0 %v48, 24
  %v1448 = vpop.permute.xlu0 %1447
  %1449 = vrot.lane.b32.xlu0 %v49, 24
  %v1450 = vpop.permute.xlu0 %1449
  %1451 = vrot.lane.b32.xlu0 %v50, 24
  %v1452 = vpop.permute.xlu0 %1451
  %1453 = vrot.lane.b32.xlu0 %v51, 24
  %v1454 = vpop.permute.xlu0 %1453
  %1455 = vrot.lane.b32.xlu0 %v52, 24
  %v1456 = vpop.permute.xlu0 %1455
  %1457 = vrot.lane.b32.xlu0 %v53, 24
  %v1458 = vpop.permute.xlu0 %1457
  %1459 = vrot.lane.b32.xlu0 %v54, 24
  %v1460 = vpop.permute.xlu0 %1459
  %1461 = vrot.lane.b32.xlu0 %v55, 24
  %v1462 = vpop.permute.xlu0 %1461
  %1463 = vrot.lane.b32.xlu0 %v56, 24
  %v1464 = vpop.permute.xlu0 %1463
  %1465 = vrot.lane.b32.xlu0 %v61, 24
  %v1466 = vpop.permute.xlu0 %1465
  %1467 = vrot.lane.b32.xlu0 %v62, 24
  %v1468 = vpop.permute.xlu0 %1467
  %1469 = vrot.lane.b32.xlu0 %v63, 24
  %v1470 = vpop.permute.xlu0 %1469
  %1471 = vrot.lane.b32.xlu0 %v64, 24
  %v1472 = vpop.permute.xlu0 %1471
  %1473 = vrot.lane.b32.xlu0 %v65, 24
  %v1474 = vpop.permute.xlu0 %1473
  %1475 = vrot.lane.b32.xlu0 %v66, 24
  %v1476 = vpop.permute.xlu0 %1475
  %1477 = vrot.lane.b32.xlu0 %v67, 24
  %v1478 = vpop.permute.xlu0 %1477
  %1479 = vrot.lane.b32.xlu0 %v68, 24
  %v1480 = vpop.permute.xlu0 %1479
  %1481 = vrot.lane.b32.xlu0 %v69, 24
  %v1482 = vpop.permute.xlu0 %1481
  %1483 = vrot.lane.b32.xlu0 %v70, 24
  %v1484 = vpop.permute.xlu0 %1483
  %1485 = vrot.lane.b32.xlu0 %v71, 24
  %v1486 = vpop.permute.xlu0 %1485
  %1487 = vrot.lane.b32.xlu0 %v72, 24
  %v1488 = vpop.permute.xlu0 %1487
  %1489 = vrot.lane.b32.xlu0 %v73, 24
  %v1490 = vpop.permute.xlu0 %1489
  %1491 = vrot.lane.b32.xlu0 %v74, 24
  %v1492 = vpop.permute.xlu0 %1491
  %1493 = vrot.lane.b32.xlu0 %v75, 24
  %v1494 = vpop.permute.xlu0 %1493
  %1495 = vrot.lane.b32.xlu0 %v76, 24
  %v1496 = vpop.permute.xlu0 %1495
  %1497 = vrot.lane.b32.xlu0 %v77, 24
  %v1498 = vpop.permute.xlu0 %1497
  %1499 = vrot.lane.b32.xlu0 %v78, 24
  %v1500 = vpop.permute.xlu0 %1499
  %1501 = vrot.lane.b32.xlu0 %v79, 24
  %v1502 = vpop.permute.xlu0 %1501
  %1503 = vrot.lane.b32.xlu0 %v80, 24
  %v1504 = vpop.permute.xlu0 %1503
  %1505 = vrot.lane.b32.xlu0 %v81, 24
  %v1506 = vpop.permute.xlu0 %1505
  %1507 = vrot.lane.b32.xlu0 %v82, 24
  %v1508 = vpop.permute.xlu0 %1507
  %1509 = vrot.lane.b32.xlu0 %v83, 24
  %v1510 = vpop.permute.xlu0 %1509
  %1511 = vrot.lane.b32.xlu0 %v84, 24
  %v1512 = vpop.permute.xlu0 %1511
  %1513 = vrot.lane.b32.xlu0 %v85, 24
  %v1514 = vpop.permute.xlu0 %1513
  %1515 = vrot.lane.b32.xlu0 %v86, 24
  %v1516 = vpop.permute.xlu0 %1515
  %1517 = vrot.lane.b32.xlu0 %v87, 24
  %v1518 = vpop.permute.xlu0 %1517
  %1519 = vrot.lane.b32.xlu0 %v88, 24
  %v1520 = vpop.permute.xlu0 %1519
  %1521 = vrot.lane.b32.xlu0 %v89, 24
  %v1522 = vpop.permute.xlu0 %1521
  %1523 = vrot.lane.b32.xlu0 %v90, 24
  %v1524 = vpop.permute.xlu0 %1523
  %1525 = vrot.lane.b32.xlu0 %v91, 24
  %v1526 = vpop.permute.xlu0 %1525
  %1527 = vrot.lane.b32.xlu0 %v92, 24
  %v1528 = vpop.permute.xlu0 %1527
  %1597 = vrot.lane.b32.xlu0 %v97, 28
  %v1598 = vpop.permute.xlu0 %1597
  %1599 = vrot.lane.b32.xlu0 %v98, 28
  %v1600 = vpop.permute.xlu0 %1599
  %1601 = vrot.lane.b32.xlu0 %v99, 28
  %v1602 = vpop.permute.xlu0 %1601
  %1603 = vrot.lane.b32.xlu0 %v100, 28
  %v1604 = vpop.permute.xlu0 %1603
  %1605 = vrot.lane.b32.xlu0 %v101, 28
  %v1606 = vpop.permute.xlu0 %1605
  %1607 = vrot.lane.b32.xlu0 %v102, 28
  %v1608 = vpop.permute.xlu0 %1607
  %1609 = vrot.lane.b32.xlu0 %v103, 28
  %v1610 = vpop.permute.xlu0 %1609
  %1611 = vrot.lane.b32.xlu0 %v104, 28
  %v1612 = vpop.permute.xlu0 %1611
  %1613 = vrot.lane.b32.xlu0 %v105, 28
  %v1614 = vpop.permute.xlu0 %1613
  %1615 = vrot.lane.b32.xlu0 %v106, 28
  %v1616 = vpop.permute.xlu0 %1615
  %1617 = vrot.lane.b32.xlu0 %v107, 28
  %v1618 = vpop.permute.xlu0 %1617
  %1619 = vrot.lane.b32.xlu0 %v108, 28
  %v1620 = vpop.permute.xlu0 %1619
  %1621 = vrot.lane.b32.xlu0 %v109, 28
  %v1622 = vpop.permute.xlu0 %1621
  %1623 = vrot.lane.b32.xlu0 %v110, 28
  %v1624 = vpop.permute.xlu0 %1623
  %1625 = vrot.lane.b32.xlu0 %v111, 28
  %v1626 = vpop.permute.xlu0 %1625
  %1627 = vrot.lane.b32.xlu0 %v112, 28
  %v1628 = vpop.permute.xlu0 %1627
  %1629 = vrot.lane.b32.xlu0 %v113, 28
  %v1630 = vpop.permute.xlu0 %1629
  %1631 = vrot.lane.b32.xlu0 %v114, 28
  %v1632 = vpop.permute.xlu0 %1631
  %1633 = vrot.lane.b32.xlu0 %v115, 28
  %v1634 = vpop.permute.xlu0 %1633
  %1635 = vrot.lane.b32.xlu0 %v116, 28
  %v1636 = vpop.permute.xlu0 %1635
  %1637 = vrot.lane.b32.xlu0 %v117, 28
  %v1638 = vpop.permute.xlu0 %1637
  %1639 = vrot.lane.b32.xlu0 %v118, 28
  %v1640 = vpop.permute.xlu0 %1639
  %1641 = vrot.lane.b32.xlu0 %v119, 28
  %v1642 = vpop.permute.xlu0 %1641
  %1643 = vrot.lane.b32.xlu0 %v120, 28
  %v1644 = vpop.permute.xlu0 %1643
  %1645 = vrot.lane.b32.xlu0 %v121, 28
  %v1646 = vpop.permute.xlu0 %1645
  %1647 = vrot.lane.b32.xlu0 %v122, 28
  %v1648 = vpop.permute.xlu0 %1647
  %1649 = vrot.lane.b32.xlu0 %v123, 28
  %v1650 = vpop.permute.xlu0 %1649
  %1651 = vrot.lane.b32.xlu0 %v124, 28
  %v1652 = vpop.permute.xlu0 %1651
  %1653 = vrot.lane.b32.xlu0 %v125, 28
  %v1654 = vpop.permute.xlu0 %1653
  %1655 = vrot.lane.b32.xlu0 %v126, 28
  %v1656 = vpop.permute.xlu0 %1655
  %1657 = vrot.lane.b32.xlu0 %v127, 28
  %v1658 = vpop.permute.xlu0 %1657
  %1659 = vrot.lane.b32.xlu0 %v128, 28
  %v1660 = vpop.permute.xlu0 %1659
  %1661 = vrot.lane.b32.xlu0 %v133, 28
  %v1662 = vpop.permute.xlu0 %1661
  %1663 = vrot.lane.b32.xlu0 %v134, 28
  %v1664 = vpop.permute.xlu0 %1663
  %1665 = vrot.lane.b32.xlu0 %v135, 28
  %v1666 = vpop.permute.xlu0 %1665
  %1667 = vrot.lane.b32.xlu0 %v136, 28
  %v1668 = vpop.permute.xlu0 %1667
  %1669 = vrot.lane.b32.xlu0 %v137, 28
  %v1670 = vpop.permute.xlu0 %1669
  %1671 = vrot.lane.b32.xlu0 %v138, 28
  %v1672 = vpop.permute.xlu0 %1671
  %1673 = vrot.lane.b32.xlu0 %v139, 28
  %v1674 = vpop.permute.xlu0 %1673
  %1675 = vrot.lane.b32.xlu0 %v140, 28
  %v1676 = vpop.permute.xlu0 %1675
  %1677 = vrot.lane.b32.xlu0 %v141, 28
  %v1678 = vpop.permute.xlu0 %1677
  %1679 = vrot.lane.b32.xlu0 %v142, 28
  %v1680 = vpop.permute.xlu0 %1679
  %1681 = vrot.lane.b32.xlu0 %v143, 28
  %v1682 = vpop.permute.xlu0 %1681
  %1683 = vrot.lane.b32.xlu0 %v144, 28
  %v1684 = vpop.permute.xlu0 %1683
  %1685 = vrot.lane.b32.xlu0 %v145, 28
  %v1686 = vpop.permute.xlu0 %1685
  %1687 = vrot.lane.b32.xlu0 %v146, 28
  %v1688 = vpop.permute.xlu0 %1687
  %1689 = vrot.lane.b32.xlu0 %v147, 28
  %v1690 = vpop.permute.xlu0 %1689
  %1691 = vrot.lane.b32.xlu0 %v148, 28
  %v1692 = vpop.permute.xlu0 %1691
  %1693 = vrot.lane.b32.xlu0 %v149, 28
  %v1694 = vpop.permute.xlu0 %1693
  %1695 = vrot.lane.b32.xlu0 %v150, 28
  %v1696 = vpop.permute.xlu0 %1695
  %1697 = vrot.lane.b32.xlu0 %v151, 28
  %v1698 = vpop.permute.xlu0 %1697
  %1699 = vrot.lane.b32.xlu0 %v152, 28
  %v1700 = vpop.permute.xlu0 %1699
  %1701 = vrot.lane.b32.xlu0 %v153, 28
  %v1702 = vpop.permute.xlu0 %1701
  %1703 = vrot.lane.b32.xlu0 %v154, 28
  %v1704 = vpop.permute.xlu0 %1703
  %1705 = vrot.lane.b32.xlu0 %v155, 28
  %v1706 = vpop.permute.xlu0 %1705
  %1707 = vrot.lane.b32.xlu0 %v156, 28
  %v1708 = vpop.permute.xlu0 %1707
  %1709 = vrot.lane.b32.xlu0 %v157, 28
  %v1710 = vpop.permute.xlu0 %1709
  %1711 = vrot.lane.b32.xlu0 %v158, 28
  %v1712 = vpop.permute.xlu0 %1711
  %1713 = vrot.lane.b32.xlu0 %v159, 28
  %v1714 = vpop.permute.xlu0 %1713
  %1715 = vrot.lane.b32.xlu0 %v160, 28
  %v1716 = vpop.permute.xlu0 %1715
  %1717 = vrot.lane.b32.xlu0 %v161, 28
  %v1718 = vpop.permute.xlu0 %1717
  %1719 = vrot.lane.b32.xlu0 %v162, 28
  %v1720 = vpop.permute.xlu0 %1719
  %1721 = vrot.lane.b32.xlu0 %v163, 28
  %v1722 = vpop.permute.xlu0 %1721
  %1723 = vrot.lane.b32.xlu0 %v164, 28
  %v1724 = vpop.permute.xlu0 %1723
  %1793 = vrot.lane.b32.xlu0 %v169, 32
  %v1794 = vpop.permute.xlu0 %1793
  %1795 = vrot.lane.b32.xlu0 %v170, 32
  %v1796 = vpop.permute.xlu0 %1795
  %1797 = vrot.lane.b32.xlu0 %v171, 32
  %v1798 = vpop.permute.xlu0 %1797
  %1799 = vrot.lane.b32.xlu0 %v172, 32
  %v1800 = vpop.permute.xlu0 %1799
  %1801 = vrot.lane.b32.xlu0 %v173, 32
  %v1802 = vpop.permute.xlu0 %1801
  %1803 = vrot.lane.b32.xlu0 %v174, 32
  %v1804 = vpop.permute.xlu0 %1803
  %1805 = vrot.lane.b32.xlu0 %v175, 32
  %v1806 = vpop.permute.xlu0 %1805
  %1807 = vrot.lane.b32.xlu0 %v176, 32
  %v1808 = vpop.permute.xlu0 %1807
  %1809 = vrot.lane.b32.xlu0 %v177, 32
  %v1810 = vpop.permute.xlu0 %1809
  %1811 = vrot.lane.b32.xlu0 %v178, 32
  %v1812 = vpop.permute.xlu0 %1811
  %1813 = vrot.lane.b32.xlu0 %v179, 32
  %v1814 = vpop.permute.xlu0 %1813
  %1815 = vrot.lane.b32.xlu0 %v180, 32
  %v1816 = vpop.permute.xlu0 %1815
  %1817 = vrot.lane.b32.xlu0 %v181, 32
  %v1818 = vpop.permute.xlu0 %1817
  %1819 = vrot.lane.b32.xlu0 %v182, 32
  %v1820 = vpop.permute.xlu0 %1819
  %1821 = vrot.lane.b32.xlu0 %v183, 32
  %v1822 = vpop.permute.xlu0 %1821
  %1823 = vrot.lane.b32.xlu0 %v184, 32
  %v1824 = vpop.permute.xlu0 %1823
  %1825 = vrot.lane.b32.xlu0 %v185, 32
  %v1826 = vpop.permute.xlu0 %1825
  %1827 = vrot.lane.b32.xlu0 %v186, 32
  %v1828 = vpop.permute.xlu0 %1827
  %1829 = vrot.lane.b32.xlu0 %v187, 32
  %v1830 = vpop.permute.xlu0 %1829
  %1831 = vrot.lane.b32.xlu0 %v188, 32
  %v1832 = vpop.permute.xlu0 %1831
  %1833 = vrot.lane.b32.xlu0 %v189, 32
  %v1834 = vpop.permute.xlu0 %1833
  %1835 = vrot.lane.b32.xlu0 %v190, 32
  %v1836 = vpop.permute.xlu0 %1835
  %1837 = vrot.lane.b32.xlu0 %v191, 32
  %v1838 = vpop.permute.xlu0 %1837
  %1839 = vrot.lane.b32.xlu0 %v192, 32
  %v1840 = vpop.permute.xlu0 %1839
  %1841 = vrot.lane.b32.xlu0 %v193, 32
  %v1842 = vpop.permute.xlu0 %1841
  %1843 = vrot.lane.b32.xlu0 %v194, 32
  %v1844 = vpop.permute.xlu0 %1843
  %1845 = vrot.lane.b32.xlu0 %v195, 32
  %v1846 = vpop.permute.xlu0 %1845
  %1847 = vrot.lane.b32.xlu0 %v196, 32
  %v1848 = vpop.permute.xlu0 %1847
  %1849 = vrot.lane.b32.xlu0 %v197, 32
  %v1850 = vpop.permute.xlu0 %1849
  %1851 = vrot.lane.b32.xlu0 %v198, 32
  %v1852 = vpop.permute.xlu0 %1851
  %1853 = vrot.lane.b32.xlu0 %v199, 32
  %v1854 = vpop.permute.xlu0 %1853
  %1855 = vrot.lane.b32.xlu0 %v200, 32
  %v1856 = vpop.permute.xlu0 %1855
  %1857 = vrot.lane.b32.xlu0 %v205, 32
  %v1858 = vpop.permute.xlu0 %1857
  %1859 = vrot.lane.b32.xlu0 %v206, 32
  %v1860 = vpop.permute.xlu0 %1859
  %1861 = vrot.lane.b32.xlu0 %v207, 32
  %v1862 = vpop.permute.xlu0 %1861
  %1863 = vrot.lane.b32.xlu0 %v208, 32
  %v1864 = vpop.permute.xlu0 %1863
  %1865 = vrot.lane.b32.xlu0 %v209, 32
  %v1866 = vpop.permute.xlu0 %1865
  %1867 = vrot.lane.b32.xlu0 %v210, 32
  %v1868 = vpop.permute.xlu0 %1867
  %1869 = vrot.lane.b32.xlu0 %v211, 32
  %v1870 = vpop.permute.xlu0 %1869
  %1871 = vrot.lane.b32.xlu0 %v212, 32
  %v1872 = vpop.permute.xlu0 %1871
  %1873 = vrot.lane.b32.xlu0 %v213, 32
  %v1874 = vpop.permute.xlu0 %1873
  %1875 = vrot.lane.b32.xlu0 %v214, 32
  %v1876 = vpop.permute.xlu0 %1875
  %1877 = vrot.lane.b32.xlu0 %v215, 32
  %v1878 = vpop.permute.xlu0 %1877
  %1879 = vrot.lane.b32.xlu0 %v216, 32
  %v1880 = vpop.permute.xlu0 %1879
  %1881 = vrot.lane.b32.xlu0 %v217, 32
  %v1882 = vpop.permute.xlu0 %1881
  %1883 = vrot.lane.b32.xlu0 %v218, 32
  %v1884 = vpop.permute.xlu0 %1883
  %1885 = vrot.lane.b32.xlu0 %v219, 32
  %v1886 = vpop.permute.xlu0 %1885
  %1887 = vrot.lane.b32.xlu0 %v220, 32
  %v1888 = vpop.permute.xlu0 %1887
  %1889 = vrot.lane.b32.xlu0 %v221, 32
  %v1890 = vpop.permute.xlu0 %1889
  %1891 = vrot.lane.b32.xlu0 %v222, 32
  %v1892 = vpop.permute.xlu0 %1891
  %1893 = vrot.lane.b32.xlu0 %v223, 32
  %v1894 = vpop.permute.xlu0 %1893
  %1895 = vrot.lane.b32.xlu0 %v224, 32
  %v1896 = vpop.permute.xlu0 %1895
  %1897 = vrot.lane.b32.xlu0 %v225, 32
  %v1898 = vpop.permute.xlu0 %1897
  %1899 = vrot.lane.b32.xlu0 %v226, 32
  %v1900 = vpop.permute.xlu0 %1899
  %1901 = vrot.lane.b32.xlu0 %v227, 32
  %v1902 = vpop.permute.xlu0 %1901
  %1903 = vrot.lane.b32.xlu0 %v228, 32
  %v1904 = vpop.permute.xlu0 %1903
  %1905 = vrot.lane.b32.xlu0 %v229, 32
  %v1906 = vpop.permute.xlu0 %1905
  %1907 = vrot.lane.b32.xlu0 %v230, 32
  %v1908 = vpop.permute.xlu0 %1907
  %1909 = vrot.lane.b32.xlu0 %v231, 32
  %v1910 = vpop.permute.xlu0 %1909
  %1911 = vrot.lane.b32.xlu0 %v232, 32
  %v1912 = vpop.permute.xlu0 %1911
  %1913 = vrot.lane.b32.xlu0 %v233, 32
  %v1914 = vpop.permute.xlu0 %1913
  %1915 = vrot.lane.b32.xlu0 %v234, 32
  %v1916 = vpop.permute.xlu0 %1915
  %1917 = vrot.lane.b32.xlu0 %v235, 32
  %v1918 = vpop.permute.xlu0 %1917
  %1919 = vrot.lane.b32.xlu0 %v236, 32
  %v1920 = vpop.permute.xlu0 %1919
  %vm1985 = vcmask 31744
  %v1986 = vsel %vm1985, %v21, %v302
  %v1987 = vsel %vm1985, %v22, %v304
  %v1988 = vsel %vm1985, %v23, %v306
  %v1989 = vsel %vm1985, %v24, %v308
  %v1990 = vsel %vm1985, %v25, %v310
  %v1991 = vsel %vm1985, %v26, %v312
  %v1992 = vsel %vm1985, %v27, %v314
  %v1993 = vsel %vm1985, %v28, %v316
  %v1994 = vsel %vm1985, %v29, %v318
  %v1995 = vsel %vm1985, %v30, %v320
  %v1996 = vsel %vm1985, %v31, %v322
  %v1997 = vsel %vm1985, %v32, %v324
  %v1998 = vsel %vm1985, %v33, %v326
  %v1999 = vsel %vm1985, %v34, %v328
  %v2000 = vsel %vm1985, %v35, %v330
  %v2001 = vsel %vm1985, %v36, %v332
  %v2002 = vsel %vm1985, %v37, %v334
  %v2003 = vsel %vm1985, %v38, %v336
  %v2004 = vsel %vm1985, %v39, %v338
  %v2005 = vsel %vm1985, %v40, %v340
  %v2006 = vsel %vm1985, %v41, %v342
  %v2007 = vsel %vm1985, %v42, %v344
  %v2008 = vsel %vm1985, %v43, %v346
  %v2009 = vsel %vm1985, %v44, %v348
  %v2010 = vsel %vm1985, %v45, %v350
  %v2011 = vsel %vm1985, %v46, %v352
  %v2012 = vsel %vm1985, %v47, %v354
  %v2013 = vsel %vm1985, %v48, %v356
  %v2014 = vsel %vm1985, %v49, %v358
  %v2015 = vsel %vm1985, %v50, %v360
  %v2016 = vsel %vm1985, %v51, %v362
  %v2017 = vsel %vm1985, %v52, %v364
  %v2018 = vsel %vm1985, %v57, %v366
  %v2019 = vsel %vm1985, %v58, %v368
  %v2020 = vsel %vm1985, %v59, %v370
  %v2021 = vsel %vm1985, %v60, %v372
  %v2022 = vsel %vm1985, %v61, %v374
  %v2023 = vsel %vm1985, %v62, %v376
  %v2024 = vsel %vm1985, %v63, %v378
  %v2025 = vsel %vm1985, %v64, %v380
  %v2026 = vsel %vm1985, %v65, %v382
  %v2027 = vsel %vm1985, %v66, %v384
  %v2028 = vsel %vm1985, %v67, %v386
  %v2029 = vsel %vm1985, %v68, %v388
  %v2030 = vsel %vm1985, %v69, %v390
  %v2031 = vsel %vm1985, %v70, %v392
  %v2032 = vsel %vm1985, %v71, %v394
  %v2033 = vsel %vm1985, %v72, %v396
  %v2034 = vsel %vm1985, %v73, %v398
  %v2035 = vsel %vm1985, %v74, %v400
  %v2036 = vsel %vm1985, %v75, %v402
  %v2037 = vsel %vm1985, %v76, %v404
  %v2038 = vsel %vm1985, %v77, %v406
  %v2039 = vsel %vm1985, %v78, %v408
  %v2040 = vsel %vm1985, %v79, %v410
  %v2041 = vsel %vm1985, %v80, %v412
  %v2042 = vsel %vm1985, %v81, %v414
  %v2043 = vsel %vm1985, %v82, %v416
  %v2044 = vsel %vm1985, %v83, %v418
  %v2045 = vsel %vm1985, %v84, %v420
  %v2046 = vsel %vm1985, %v85, %v422
  %v2047 = vsel %vm1985, %v86, %v424
  %v2048 = vsel %vm1985, %v87, %v426
  %v2049 = vsel %vm1985, %v88, %v428
  %vm2050 = vcmask 64512
  %v2051 = vsel %vm2050, %v1986, %v558
  %v2052 = vsel %vm2050, %v1987, %v560
  %v2053 = vsel %vm2050, %v1988, %v562
  %v2054 = vsel %vm2050, %v1989, %v564
  %v2055 = vsel %vm2050, %v1990, %v566
  %v2056 = vsel %vm2050, %v1991, %v568
  %v2057 = vsel %vm2050, %v1992, %v570
  %v2058 = vsel %vm2050, %v1993, %v572
  %v2059 = vsel %vm2050, %v1994, %v574
  %v2060 = vsel %vm2050, %v1995, %v576
  %v2061 = vsel %vm2050, %v1996, %v578
  %v2062 = vsel %vm2050, %v1997, %v580
  %v2063 = vsel %vm2050, %v1998, %v582
  %v2064 = vsel %vm2050, %v1999, %v584
  %v2065 = vsel %vm2050, %v2000, %v586
  %v2066 = vsel %vm2050, %v2001, %v588
  %v2067 = vsel %vm2050, %v2002, %v590
  %v2068 = vsel %vm2050, %v2003, %v592
  %v2069 = vsel %vm2050, %v2004, %v594
  %v2070 = vsel %vm2050, %v2005, %v596
  %v2071 = vsel %vm2050, %v2006, %v598
  %v2072 = vsel %vm2050, %v2007, %v600
  %v2073 = vsel %vm2050, %v2008, %v602
  %v2074 = vsel %vm2050, %v2009, %v604
  %v2075 = vsel %vm2050, %v2010, %v606
  %v2076 = vsel %vm2050, %v2011, %v608
  %v2077 = vsel %vm2050, %v2012, %v610
  %v2078 = vsel %vm2050, %v2013, %v612
  %v2079 = vsel %vm2050, %v2014, %v614
  %v2080 = vsel %vm2050, %v2015, %v616
  %v2081 = vsel %vm2050, %v2016, %v618
  %v2082 = vsel %vm2050, %v2017, %v620
  %v2083 = vsel %vm2050, %v2018, %v622
  %v2084 = vsel %vm2050, %v2019, %v624
  %v2085 = vsel %vm2050, %v2020, %v626
  %v2086 = vsel %vm2050, %v2021, %v628
  %v2087 = vsel %vm2050, %v2022, %v630
  %v2088 = vsel %vm2050, %v2023, %v632
  %v2089 = vsel %vm2050, %v2024, %v634
  %v2090 = vsel %vm2050, %v2025, %v636
  %v2091 = vsel %vm2050, %v2026, %v638
  %v2092 = vsel %vm2050, %v2027, %v640
  %v2093 = vsel %vm2050, %v2028, %v642
  %v2094 = vsel %vm2050, %v2029, %v644
  %v2095 = vsel %vm2050, %v2030, %v646
  %v2096 = vsel %vm2050, %v2031, %v648
  %v2097 = vsel %vm2050, %v2032, %v650
  %v2098 = vsel %vm2050, %v2033, %v652
  %v2099 = vsel %vm2050, %v2034, %v654
  %v2100 = vsel %vm2050, %v2035, %v656
  %v2101 = vsel %vm2050, %v2036, %v658
  %v2102 = vsel %vm2050, %v2037, %v660
  %v2103 = vsel %vm2050, %v2038, %v662
  %v2104 = vsel %vm2050, %v2039, %v664
  %v2105 = vsel %vm2050, %v2040, %v666
  %v2106 = vsel %vm2050, %v2041, %v668
  %v2107 = vsel %vm2050, %v2042, %v670
  %v2108 = vsel %vm2050, %v2043, %v672
  %v2109 = vsel %vm2050, %v2044, %v674
  %v2110 = vsel %vm2050, %v2045, %v676
  %v2111 = vsel %vm2050, %v2046, %v678
  %v2112 = vsel %vm2050, %v2047, %v680
  %v2113 = vsel %vm2050, %v2048, %v682
  %v2114 = vsel %vm2050, %v2049, %v684
  %vm2115 = vcmask 97280
  %v2116 = vsel %vm2115, %v2051, %v814
  %v2117 = vsel %vm2115, %v2052, %v816
  %v2118 = vsel %vm2115, %v2053, %v818
  %v2119 = vsel %vm2115, %v2054, %v820
  %v2120 = vsel %vm2115, %v2055, %v822
  %v2121 = vsel %vm2115, %v2056, %v824
  %v2122 = vsel %vm2115, %v2057, %v826
  %v2123 = vsel %vm2115, %v2058, %v828
  %v2124 = vsel %vm2115, %v2059, %v830
  %v2125 = vsel %vm2115, %v2060, %v832
  %v2126 = vsel %vm2115, %v2061, %v834
  %v2127 = vsel %vm2115, %v2062, %v836
  %v2128 = vsel %vm2115, %v2063, %v838
  %v2129 = vsel %vm2115, %v2064, %v840
  %v2130 = vsel %vm2115, %v2065, %v842
  %v2131 = vsel %vm2115, %v2066, %v844
  %v2132 = vsel %vm2115, %v2067, %v846
  %v2133 = vsel %vm2115, %v2068, %v848
  %v2134 = vsel %vm2115, %v2069, %v850
  %v2135 = vsel %vm2115, %v2070, %v852
  %v2136 = vsel %vm2115, %v2071, %v854
  %v2137 = vsel %vm2115, %v2072, %v856
  %v2138 = vsel %vm2115, %v2073, %v858
  %v2139 = vsel %vm2115, %v2074, %v860
  %v2140 = vsel %vm2115, %v2075, %v862
  %v2141 = vsel %vm2115, %v2076, %v864
  %v2142 = vsel %vm2115, %v2077, %v866
  %v2143 = vsel %vm2115, %v2078, %v868
  %v2144 = vsel %vm2115, %v2079, %v870
  %v2145 = vsel %vm2115, %v2080, %v872
  %v2146 = vsel %vm2115, %v2081, %v874
  %v2147 = vsel %vm2115, %v2082, %v876
  %v2148 = vsel %vm2115, %v2083, %v878
  %v2149 = vsel %vm2115, %v2084, %v880
  %v2150 = vsel %vm2115, %v2085, %v882
  %v2151 = vsel %vm2115, %v2086, %v884
  %v2152 = vsel %vm2115, %v2087, %v886
  %v2153 = vsel %vm2115, %v2088, %v888
  %v2154 = vsel %vm2115, %v2089, %v890
  %v2155 = vsel %vm2115, %v2090, %v892
  %v2156 = vsel %vm2115, %v2091, %v894
  %v2157 = vsel %vm2115, %v2092, %v896
  %v2158 = vsel %vm2115, %v2093, %v898
  %v2159 = vsel %vm2115, %v2094, %v900
  %v2160 = vsel %vm2115, %v2095, %v902
  %v2161 = vsel %vm2115, %v2096, %v904
  %v2162 = vsel %vm2115, %v2097, %v906
  %v2163 = vsel %vm2115, %v2098, %v908
  %v2164 = vsel %vm2115, %v2099, %v910
  %v2165 = vsel %vm2115, %v2100, %v912
  %v2166 = vsel %vm2115, %v2101, %v914
  %v2167 = vsel %vm2115, %v2102, %v916
  %v2168 = vsel %vm2115, %v2103, %v918
  %v2169 = vsel %vm2115, %v2104, %v920
  %v2170 = vsel %vm2115, %v2105, %v922
  %v2171 = vsel %vm2115, %v2106, %v924
  %v2172 = vsel %vm2115, %v2107, %v926
  %v2173 = vsel %vm2115, %v2108, %v928
  %v2174 = vsel %vm2115, %v2109, %v930
  %v2175 = vsel %vm2115, %v2110, %v932
  %v2176 = vsel %vm2115, %v2111, %v934
  %v2177 = vsel %vm2115, %v2112, %v936
  %v2178 = vsel %vm2115, %v2113, %v938
  %v2179 = vsel %vm2115, %v2114, %v940
  %vm2180 = vcmask 130048
  %v2181 = vsel %vm2180, %v2116, %v1010
  %v2182 = vsel %vm2180, %v2117, %v1012
  %v2183 = vsel %vm2180, %v2118, %v1014
  %v2184 = vsel %vm2180, %v2119, %v1016
  %v2185 = vsel %vm2180, %v2120, %v1018
  %v2186 = vsel %vm2180, %v2121, %v1020
  %v2187 = vsel %vm2180, %v2122, %v1022
  %v2188 = vsel %vm2180, %v2123, %v1024
  %v2189 = vsel %vm2180, %v2124, %v1026
  %v2190 = vsel %vm2180, %v2125, %v1028
  %v2191 = vsel %vm2180, %v2126, %v1030
  %v2192 = vsel %vm2180, %v2127, %v1032
  %v2193 = vsel %vm2180, %v2128, %v1034
  %v2194 = vsel %vm2180, %v2129, %v1036
  %v2195 = vsel %vm2180, %v2130, %v1038
  %v2196 = vsel %vm2180, %v2131, %v1040
  %v2197 = vsel %vm2180, %v2132, %v1042
  %v2198 = vsel %vm2180, %v2133, %v1044
  %v2199 = vsel %vm2180, %v2134, %v1046
  %v2200 = vsel %vm2180, %v2135, %v1048
  %v2201 = vsel %vm2180, %v2136, %v1050
  %v2202 = vsel %vm2180, %v2137, %v1052
  %v2203 = vsel %vm2180, %v2138, %v1054
  %v2204 = vsel %vm2180, %v2139, %v1056
  %v2205 = vsel %vm2180, %v2140, %v1058
  %v2206 = vsel %vm2180, %v2141, %v1060
  %v2207 = vsel %vm2180, %v2142, %v1062
  %v2208 = vsel %vm2180, %v2143, %v1064
  %v2209 = vsel %vm2180, %v2144, %v1066
  %v2210 = vsel %vm2180, %v2145, %v1068
  %v2211 = vsel %vm2180, %v2146, %v1070
  %v2212 = vsel %vm2180, %v2147, %v1072
  %v2213 = vsel %vm2180, %v2148, %v1074
  %v2214 = vsel %vm2180, %v2149, %v1076
  %v2215 = vsel %vm2180, %v2150, %v1078
  %v2216 = vsel %vm2180, %v2151, %v1080
  %v2217 = vsel %vm2180, %v2152, %v1082
  %v2218 = vsel %vm2180, %v2153, %v1084
  %v2219 = vsel %vm2180, %v2154, %v1086
  %v2220 = vsel %vm2180, %v2155, %v1088
  %v2221 = vsel %vm2180, %v2156, %v1090
  %v2222 = vsel %vm2180, %v2157, %v1092
  %v2223 = vsel %vm2180, %v2158, %v1094
  %v2224 = vsel %vm2180, %v2159, %v1096
  %v2225 = vsel %vm2180, %v2160, %v1098
  %v2226 = vsel %vm2180, %v2161, %v1100
  %v2227 = vsel %vm2180, %v2162, %v1102
  %v2228 = vsel %vm2180, %v2163, %v1104
  %v2229 = vsel %vm2180, %v2164, %v1106
  %v2230 = vsel %vm2180, %v2165, %v1108
  %v2231 = vsel %vm2180, %v2166, %v1110
  %v2232 = vsel %vm2180, %v2167, %v1112
  %v2233 = vsel %vm2180, %v2168, %v1114
  %v2234 = vsel %vm2180, %v2169, %v1116
  %v2235 = vsel %vm2180, %v2170, %v1118
  %v2236 = vsel %vm2180, %v2171, %v1120
  %v2237 = vsel %vm2180, %v2172, %v1122
  %v2238 = vsel %vm2180, %v2173, %v1124
  %v2239 = vsel %vm2180, %v2174, %v1126
  %v2240 = vsel %vm2180, %v2175, %v1128
  %v2241 = vsel %vm2180, %v2176, %v1130
  %v2242 = vsel %vm2180, %v2177, %v1132
  %v2243 = vsel %vm2180, %v2178, %v1134
  %v2244 = vsel %vm2180, %v2179, %v1136
  %vm2245 = vcmask 162816
  %v2246 = vsel %vm2245, %v2181, %v1206
  %v2247 = vsel %vm2245, %v2182, %v1208
  %v2248 = vsel %vm2245, %v2183, %v1210
  %v2249 = vsel %vm2245, %v2184, %v1212
  %v2250 = vsel %vm2245, %v2185, %v1214
  %v2251 = vsel %vm2245, %v2186, %v1216
  %v2252 = vsel %vm2245, %v2187, %v1218
  %v2253 = vsel %vm2245, %v2188, %v1220
  %v2254 = vsel %vm2245, %v2189, %v1222
  %v2255 = vsel %vm2245, %v2190, %v1224
  %v2256 = vsel %vm2245, %v2191, %v1226
  %v2257 = vsel %vm2245, %v2192, %v1228
  %v2258 = vsel %vm2245, %v2193, %v1230
  %v2259 = vsel %vm2245, %v2194, %v1232
  %v2260 = vsel %vm2245, %v2195, %v1234
  %v2261 = vsel %vm2245, %v2196, %v1236
  %v2262 = vsel %vm2245, %v2197, %v1238
  %v2263 = vsel %vm2245, %v2198, %v1240
  %v2264 = vsel %vm2245, %v2199, %v1242
  %v2265 = vsel %vm2245, %v2200, %v1244
  %v2266 = vsel %vm2245, %v2201, %v1246
  %v2267 = vsel %vm2245, %v2202, %v1248
  %v2268 = vsel %vm2245, %v2203, %v1250
  %v2269 = vsel %vm2245, %v2204, %v1252
  %v2270 = vsel %vm2245, %v2205, %v1254
  %v2271 = vsel %vm2245, %v2206, %v1256
  %v2272 = vsel %vm2245, %v2207, %v1258
  %v2273 = vsel %vm2245, %v2208, %v1260
  %v2274 = vsel %vm2245, %v2209, %v1262
  %v2275 = vsel %vm2245, %v2210, %v1264
  %v2276 = vsel %vm2245, %v2211, %v1266
  %v2277 = vsel %vm2245, %v2212, %v1268
  %v2278 = vsel %vm2245, %v2213, %v1270
  %v2279 = vsel %vm2245, %v2214, %v1272
  %v2280 = vsel %vm2245, %v2215, %v1274
  %v2281 = vsel %vm2245, %v2216, %v1276
  %v2282 = vsel %vm2245, %v2217, %v1278
  %v2283 = vsel %vm2245, %v2218, %v1280
  %v2284 = vsel %vm2245, %v2219, %v1282
  %v2285 = vsel %vm2245, %v2220, %v1284
  %v2286 = vsel %vm2245, %v2221, %v1286
  %v2287 = vsel %vm2245, %v2222, %v1288
  %v2288 = vsel %vm2245, %v2223, %v1290
  %v2289 = vsel %vm2245, %v2224, %v1292
  %v2290 = vsel %vm2245, %v2225, %v1294
  %v2291 = vsel %vm2245, %v2226, %v1296
  %v2292 = vsel %vm2245, %v2227, %v1298
  %v2293 = vsel %vm2245, %v2228, %v1300
  %v2294 = vsel %vm2245, %v2229, %v1302
  %v2295 = vsel %vm2245, %v2230, %v1304
  %v2296 = vsel %vm2245, %v2231, %v1306
  %v2297 = vsel %vm2245, %v2232, %v1308
  %v2298 = vsel %vm2245, %v2233, %v1310
  %v2299 = vsel %vm2245, %v2234, %v1312
  %v2300 = vsel %vm2245, %v2235, %v1314
  %v2301 = vsel %vm2245, %v2236, %v1316
  %v2302 = vsel %vm2245, %v2237, %v1318
  %v2303 = vsel %vm2245, %v2238, %v1320
  %v2304 = vsel %vm2245, %v2239, %v1322
  %v2305 = vsel %vm2245, %v2240, %v1324
  %v2306 = vsel %vm2245, %v2241, %v1326
  %v2307 = vsel %vm2245, %v2242, %v1328
  %v2308 = vsel %vm2245, %v2243, %v1330
  %v2309 = vsel %vm2245, %v2244, %v1332
  %vm2310 = vcmask 195584
  %v2311 = vsel %vm2310, %v2246, %v1402
  %v2312 = vsel %vm2310, %v2247, %v1404
  %v2313 = vsel %vm2310, %v2248, %v1406
  %v2314 = vsel %vm2310, %v2249, %v1408
  %v2315 = vsel %vm2310, %v2250, %v1410
  %v2316 = vsel %vm2310, %v2251, %v1412
  %v2317 = vsel %vm2310, %v2252, %v1414
  %v2318 = vsel %vm2310, %v2253, %v1416
  %v2319 = vsel %vm2310, %v2254, %v1418
  %v2320 = vsel %vm2310, %v2255, %v1420
  %v2321 = vsel %vm2310, %v2256, %v1422
  %v2322 = vsel %vm2310, %v2257, %v1424
  %v2323 = vsel %vm2310, %v2258, %v1426
  %v2324 = vsel %vm2310, %v2259, %v1428
  %v2325 = vsel %vm2310, %v2260, %v1430
  %v2326 = vsel %vm2310, %v2261, %v1432
  %v2327 = vsel %vm2310, %v2262, %v1434
  %v2328 = vsel %vm2310, %v2263, %v1436
  %v2329 = vsel %vm2310, %v2264, %v1438
  %v2330 = vsel %vm2310, %v2265, %v1440
  %v2331 = vsel %vm2310, %v2266, %v1442
  %v2332 = vsel %vm2310, %v2267, %v1444
  %v2333 = vsel %vm2310, %v2268, %v1446
  %v2334 = vsel %vm2310, %v2269, %v1448
  %v2335 = vsel %vm2310, %v2270, %v1450
  %v2336 = vsel %vm2310, %v2271, %v1452
  %v2337 = vsel %vm2310, %v2272, %v1454
  %v2338 = vsel %vm2310, %v2273, %v1456
  %v2339 = vsel %vm2310, %v2274, %v1458
  %v2340 = vsel %vm2310, %v2275, %v1460
  %v2341 = vsel %vm2310, %v2276, %v1462
  %v2342 = vsel %vm2310, %v2277, %v1464
  %v2343 = vsel %vm2310, %v2278, %v1466
  %v2344 = vsel %vm2310, %v2279, %v1468
  %v2345 = vsel %vm2310, %v2280, %v1470
  %v2346 = vsel %vm2310, %v2281, %v1472
  %v2347 = vsel %vm2310, %v2282, %v1474
  %v2348 = vsel %vm2310, %v2283, %v1476
  %v2349 = vsel %vm2310, %v2284, %v1478
  %v2350 = vsel %vm2310, %v2285, %v1480
  %v2351 = vsel %vm2310, %v2286, %v1482
  %v2352 = vsel %vm2310, %v2287, %v1484
  %v2353 = vsel %vm2310, %v2288, %v1486
  %v2354 = vsel %vm2310, %v2289, %v1488
  %v2355 = vsel %vm2310, %v2290, %v1490
  %v2356 = vsel %vm2310, %v2291, %v1492
  %v2357 = vsel %vm2310, %v2292, %v1494
  %v2358 = vsel %vm2310, %v2293, %v1496
  %v2359 = vsel %vm2310, %v2294, %v1498
  %v2360 = vsel %vm2310, %v2295, %v1500
  %v2361 = vsel %vm2310, %v2296, %v1502
  %v2362 = vsel %vm2310, %v2297, %v1504
  %v2363 = vsel %vm2310, %v2298, %v1506
  %v2364 = vsel %vm2310, %v2299, %v1508
  %v2365 = vsel %vm2310, %v2300, %v1510
  %v2366 = vsel %vm2310, %v2301, %v1512
  %v2367 = vsel %vm2310, %v2302, %v1514
  %v2368 = vsel %vm2310, %v2303, %v1516
  %v2369 = vsel %vm2310, %v2304, %v1518
  %v2370 = vsel %vm2310, %v2305, %v1520
  %v2371 = vsel %vm2310, %v2306, %v1522
  %v2372 = vsel %vm2310, %v2307, %v1524
  %v2373 = vsel %vm2310, %v2308, %v1526
  %v2374 = vsel %vm2310, %v2309, %v1528
  %vm2375 = vcmask 228352
  %v2376 = vsel %vm2375, %v2311, %v1598
  %v2377 = vsel %vm2375, %v2312, %v1600
  %v2378 = vsel %vm2375, %v2313, %v1602
  %v2379 = vsel %vm2375, %v2314, %v1604
  %v2380 = vsel %vm2375, %v2315, %v1606
  %v2381 = vsel %vm2375, %v2316, %v1608
  %v2382 = vsel %vm2375, %v2317, %v1610
  %v2383 = vsel %vm2375, %v2318, %v1612
  %v2384 = vsel %vm2375, %v2319, %v1614
  %v2385 = vsel %vm2375, %v2320, %v1616
  %v2386 = vsel %vm2375, %v2321, %v1618
  %v2387 = vsel %vm2375, %v2322, %v1620
  %v2388 = vsel %vm2375, %v2323, %v1622
  %v2389 = vsel %vm2375, %v2324, %v1624
  %v2390 = vsel %vm2375, %v2325, %v1626
  %v2391 = vsel %vm2375, %v2326, %v1628
  %v2392 = vsel %vm2375, %v2327, %v1630
  %v2393 = vsel %vm2375, %v2328, %v1632
  %v2394 = vsel %vm2375, %v2329, %v1634
  %v2395 = vsel %vm2375, %v2330, %v1636
  %v2396 = vsel %vm2375, %v2331, %v1638
  %v2397 = vsel %vm2375, %v2332, %v1640
  %v2398 = vsel %vm2375, %v2333, %v1642
  %v2399 = vsel %vm2375, %v2334, %v1644
  %v2400 = vsel %vm2375, %v2335, %v1646
  %v2401 = vsel %vm2375, %v2336, %v1648
  %v2402 = vsel %vm2375, %v2337, %v1650
  %v2403 = vsel %vm2375, %v2338, %v1652
  %v2404 = vsel %vm2375, %v2339, %v1654
  %v2405 = vsel %vm2375, %v2340, %v1656
  %v2406 = vsel %vm2375, %v2341, %v1658
  %v2407 = vsel %vm2375, %v2342, %v1660
  %v2408 = vsel %vm2375, %v2343, %v1662
  %v2409 = vsel %vm2375, %v2344, %v1664
  %v2410 = vsel %vm2375, %v2345, %v1666
  %v2411 = vsel %vm2375, %v2346, %v1668
  %v2412 = vsel %vm2375, %v2347, %v1670
  %v2413 = vsel %vm2375, %v2348, %v1672
  %v2414 = vsel %vm2375, %v2349, %v1674
  %v2415 = vsel %vm2375, %v2350, %v1676
  %v2416 = vsel %vm2375, %v2351, %v1678
  %v2417 = vsel %vm2375, %v2352, %v1680
  %v2418 = vsel %vm2375, %v2353, %v1682
  %v2419 = vsel %vm2375, %v2354, %v1684
  %v2420 = vsel %vm2375, %v2355, %v1686
  %v2421 = vsel %vm2375, %v2356, %v1688
  %v2422 = vsel %vm2375, %v2357, %v1690
  %v2423 = vsel %vm2375, %v2358, %v1692
  %v2424 = vsel %vm2375, %v2359, %v1694
  %v2425 = vsel %vm2375, %v2360, %v1696
  %v2426 = vsel %vm2375, %v2361, %v1698
  %v2427 = vsel %vm2375, %v2362, %v1700
  %v2428 = vsel %vm2375, %v2363, %v1702
  %v2429 = vsel %vm2375, %v2364, %v1704
  %v2430 = vsel %vm2375, %v2365, %v1706
  %v2431 = vsel %vm2375, %v2366, %v1708
  %v2432 = vsel %vm2375, %v2367, %v1710
  %v2433 = vsel %vm2375, %v2368, %v1712
  %v2434 = vsel %vm2375, %v2369, %v1714
  %v2435 = vsel %vm2375, %v2370, %v1716
  %v2436 = vsel %vm2375, %v2371, %v1718
  %v2437 = vsel %vm2375, %v2372, %v1720
  %v2438 = vsel %vm2375, %v2373, %v1722
  %v2439 = vsel %vm2375, %v2374, %v1724
  %vm2440 = vcmask 261120
  %v2441 = vsel %vm2440, %v2376, %v1794
  %v2442 = vsel %vm2440, %v2377, %v1796
  %v2443 = vsel %vm2440, %v2378, %v1798
  %v2444 = vsel %vm2440, %v2379, %v1800
  %v2445 = vsel %vm2440, %v2380, %v1802
  %v2446 = vsel %vm2440, %v2381, %v1804
  %v2447 = vsel %vm2440, %v2382, %v1806
  %v2448 = vsel %vm2440, %v2383, %v1808
  %v2449 = vsel %vm2440, %v2384, %v1810
  %v2450 = vsel %vm2440, %v2385, %v1812
  %v2451 = vsel %vm2440, %v2386, %v1814
  %v2452 = vsel %vm2440, %v2387, %v1816
  %v2453 = vsel %vm2440, %v2388, %v1818
  %v2454 = vsel %vm2440, %v2389, %v1820
  %v2455 = vsel %vm2440, %v2390, %v1822
  %v2456 = vsel %vm2440, %v2391, %v1824
  %v2457 = vsel %vm2440, %v2392, %v1826
  %v2458 = vsel %vm2440, %v2393, %v1828
  %v2459 = vsel %vm2440, %v2394, %v1830
  %v2460 = vsel %vm2440, %v2395, %v1832
  %v2461 = vsel %vm2440, %v2396, %v1834
  %v2462 = vsel %vm2440, %v2397, %v1836
  %v2463 = vsel %vm2440, %v2398, %v1838
  %v2464 = vsel %vm2440, %v2399, %v1840
  %v2465 = vsel %vm2440, %v2400, %v1842
  %v2466 = vsel %vm2440, %v2401, %v1844
  %v2467 = vsel %vm2440, %v2402, %v1846
  %v2468 = vsel %vm2440, %v2403, %v1848
  %v2469 = vsel %vm2440, %v2404, %v1850
  %v2470 = vsel %vm2440, %v2405, %v1852
  %v2471 = vsel %vm2440, %v2406, %v1854
  %v2472 = vsel %vm2440, %v2407, %v1856
  %v2473 = vsel %vm2440, %v2408, %v1858
  %v2474 = vsel %vm2440, %v2409, %v1860
  %v2475 = vsel %vm2440, %v2410, %v1862
  %v2476 = vsel %vm2440, %v2411, %v1864
  %v2477 = vsel %vm2440, %v2412, %v1866
  %v2478 = vsel %vm2440, %v2413, %v1868
  %v2479 = vsel %vm2440, %v2414, %v1870
  %v2480 = vsel %vm2440, %v2415, %v1872
  %v2481 = vsel %vm2440, %v2416, %v1874
  %v2482 = vsel %vm2440, %v2417, %v1876
  %v2483 = vsel %vm2440, %v2418, %v1878
  %v2484 = vsel %vm2440, %v2419, %v1880
  %v2485 = vsel %vm2440, %v2420, %v1882
  %v2486 = vsel %vm2440, %v2421, %v1884
  %v2487 = vsel %vm2440, %v2422, %v1886
  %v2488 = vsel %vm2440, %v2423, %v1888
  %v2489 = vsel %vm2440, %v2424, %v1890
  %v2490 = vsel %vm2440, %v2425, %v1892
  %v2491 = vsel %vm2440, %v2426, %v1894
  %v2492 = vsel %vm2440, %v2427, %v1896
  %v2493 = vsel %vm2440, %v2428, %v1898
  %v2494 = vsel %vm2440, %v2429, %v1900
  %v2495 = vsel %vm2440, %v2430, %v1902
  %v2496 = vsel %vm2440, %v2431, %v1904
  %v2497 = vsel %vm2440, %v2432, %v1906
  %v2498 = vsel %vm2440, %v2433, %v1908
  %v2499 = vsel %vm2440, %v2434, %v1910
  %v2500 = vsel %vm2440, %v2435, %v1912
  %v2501 = vsel %vm2440, %v2436, %v1914
  %v2502 = vsel %vm2440, %v2437, %v1916
  %v2503 = vsel %vm2440, %v2438, %v1918
  %v2504 = vsel %vm2440, %v2439, %v1920
  %v2505 = vpack.c.bf16 %v2442, %v2441
  %v2506 = vpack.c.bf16 %v2444, %v2443
  %v2507 = vpack.c.bf16 %v2446, %v2445
  %v2508 = vpack.c.bf16 %v2448, %v2447
  %v2509 = vpack.c.bf16 %v2450, %v2449
  %v2510 = vpack.c.bf16 %v2452, %v2451
  %v2511 = vpack.c.bf16 %v2454, %v2453
  %v2512 = vpack.c.bf16 %v2456, %v2455
  %v2513 = vpack.c.bf16 %v2458, %v2457
  %v2514 = vpack.c.bf16 %v2460, %v2459
  %v2515 = vpack.c.bf16 %v2462, %v2461
  %v2516 = vpack.c.bf16 %v2464, %v2463
  %v2517 = vpack.c.bf16 %v2466, %v2465
  %v2518 = vpack.c.bf16 %v2468, %v2467
  %v2519 = vpack.c.bf16 %v2470, %v2469
  %v2520 = vpack.c.bf16 %v2472, %v2471
  %v2521 = vpack.c.bf16 %v2474, %v2473
  %v2522 = vpack.c.bf16 %v2476, %v2475
  %v2523 = vpack.c.bf16 %v2478, %v2477
  %v2524 = vpack.c.bf16 %v2480, %v2479
  %v2525 = vpack.c.bf16 %v2482, %v2481
  %v2526 = vpack.c.bf16 %v2484, %v2483
  %v2527 = vpack.c.bf16 %v2486, %v2485
  %v2528 = vpack.c.bf16 %v2488, %v2487
  %v2529 = vpack.c.bf16 %v2490, %v2489
  %v2530 = vpack.c.bf16 %v2492, %v2491
  %v2531 = vpack.c.bf16 %v2494, %v2493
  %v2532 = vpack.c.bf16 %v2496, %v2495
  %v2533 = vpack.c.bf16 %v2498, %v2497
  %v2534 = vpack.c.bf16 %v2500, %v2499
  %v2535 = vpack.c.bf16 %v2502, %v2501
  %v2536 = vpack.c.bf16 %v2504, %v2503
  %v2537 = vld [vmem:[%s1] sm:$0xf]
  %v2538 = vld [vmem:[%s1 + $0x4] sm:$0xf]
  %v2539 = vld [vmem:[%s1 + $0x8] sm:$0xf]
  %v2540 = vld [vmem:[%s1 + $0xc] sm:$0xf]
  %v2541 = vld [vmem:[%s1 + $0x10] sm:$0x3]
  %v2547 = vunpack.c.l.b16 %v2537
  %v2548 = vunpack.c.l.b16 %v2538
  %v2549 = vunpack.c.l.b16 %v2539
  %v2550 = vunpack.c.l.b16 %v2540
  %v2551 = vunpack.c.l.b16 %v2541
  %v2552 = vpack.c.b16 %v2548, %v2547
  %v2553 = vpack.c.b16 %v2550, %v2549
  %v2554 = vpack.c.b16 %v2551, %v2551
  %vm2557 = vcmask 293888
  %v2559 = vsel %vm2557, %v2505, 0
  %v2562 = vsel %vm2557, %v2506, 0
  %v2565 = vsel %vm2557, %v2507, 0
  %v2568 = vsel %vm2557, %v2508, 0
  %v2571 = vsel %vm2557, %v2509, 0
  %v2574 = vsel %vm2557, %v2510, 0
  %v2577 = vsel %vm2557, %v2511, 0
  %v2580 = vsel %vm2557, %v2512, 0
  %v2583 = vsel %vm2557, %v2513, 0
  %v2586 = vsel %vm2557, %v2514, 0
  %v2589 = vsel %vm2557, %v2515, 0
  %v2592 = vsel %vm2557, %v2516, 0
  %v2595 = vsel %vm2557, %v2517, 0
  %v2598 = vsel %vm2557, %v2518, 0
  %v2601 = vsel %vm2557, %v2519, 0
  %v2604 = vsel %vm2557, %v2520, 0
  %v2607 = vsel %vm2557, %v2521, 0
  %v2610 = vsel %vm2557, %v2522, 0
  %v2613 = vsel %vm2557, %v2523, 0
  %v2616 = vsel %vm2557, %v2524, 0
  %v2619 = vsel %vm2557, %v2525, 0
  %v2622 = vsel %vm2557, %v2526, 0
  %v2625 = vsel %vm2557, %v2527, 0
  %v2628 = vsel %vm2557, %v2528, 0
  %v2631 = vsel %vm2557, %v2529, 0
  %v2634 = vsel %vm2557, %v2530, 0
  %v2637 = vsel %vm2557, %v2531, 0
  %v2640 = vsel %vm2557, %v2532, 0
  %v2643 = vsel %vm2557, %v2533, 0
  %v2646 = vsel %vm2557, %v2534, 0
  %v2649 = vsel %vm2557, %v2535, 0
  %v2652 = vsel %vm2557, %v2536, 0
  %vm2654 = vcmask 1041408
  %v2656 = vsel %vm2654, %v2554, 0
  %2658 = vmatprep.subr.bf16.mxu0 0
  %2659 = vmatpush1.bf16.msra.mxu0 %v2552
  %2660 = vmatprep.subr.bf16.mxu0 0
  %2661 = vmatpush1.bf16.msra.mxu0 %v2553
  %2662 = vmatprep.subr.bf16.mxu0 0
  %2663 = vmatpush1.bf16.msra.mxu0 %v2656
  %2664 = vmatprep.subr.bf16.mxu0 0
  %2665 = vmatpush1.bf16.msra.mxu0 0
  %2666 = vmatprep.subr.bf16.mxu0 0
  %2667 = vmatpush1.bf16.msra.mxu0 0
  %2668 = vmatprep.subr.bf16.mxu0 0
  %2669 = vmatpush1.bf16.msra.mxu0 0
  %2670 = vmatprep.subr.bf16.mxu0 0
  %2671 = vmatpush1.bf16.msra.mxu0 0
  %2672 = vmatprep.subr.bf16.mxu0 0
  %2673 = vmatpush1.bf16.msra.mxu0 0
  %2674 = vmatprep.subr.bf16.mxu0 0
  %2675 = vmatpush1.bf16.msra.mxu0 0
  %2676 = vmatprep.subr.bf16.mxu0 0
  %2677 = vmatpush1.bf16.msra.mxu0 0
  %2678 = vmatprep.subr.bf16.mxu0 0
  %2679 = vmatpush1.bf16.msra.mxu0 0
  %2680 = vmatprep.subr.bf16.mxu0 0
  %2681 = vmatpush1.bf16.msra.mxu0 0
  %2682 = vmatprep.subr.bf16.mxu0 0
  %2683 = vmatpush1.bf16.msra.mxu0 0
  %2684 = vmatprep.subr.bf16.mxu0 0
  %2685 = vmatpush1.bf16.msra.mxu0 0
  %2686 = vmatprep.subr.bf16.mxu0 0
  %2687 = vmatpush1.bf16.msra.mxu0 0
  %2688 = vmatprep.subr.bf16.mxu0 0
  %2689 = vmatpush1.bf16.msra.mxu0 0
  %2690 = vmatprep.mubr.bf16.mxu0 0
  %2691 = vmatmul.mubr.bf16.gmra.mrb[0].mxu0 %v2559
  %v2692 = vpop.f32.mrb[0].mxu0
  %v2693 = vadd.f32 0.0, %v2692
  %v2694 = vpop.f32.mrb[0].mxu0
  %v2695 = vpop.f32.mrb[0].mxu0
  %v2696 = vadd.f32 0.0, %v2695
  %v2697 = vpop.f32.mrb[0].mxu0
  %2698 = vmatprep.mubr.bf16.mxu0 0
  %2699 = vmatmul.mubr.bf16.gmra.mrb[0].mxu0 %v2562
  %v2700 = vpop.f32.mrb[0].mxu0
  %v2701 = vadd.f32 0.0, %v2700
  %v2702 = vpop.f32.mrb[0].mxu0
  %v2703 = vpop.f32.mrb[0].mxu0
  %v2704 = vadd.f32 0.0, %v2703
  %v2705 = vpop.f32.mrb[0].mxu0
  %2706 = vmatprep.mubr.bf16.mxu0 0
  %2707 = vmatmul.mubr.bf16.gmra.mrb[0].mxu0 %v2565
  %v2708 = vpop.f32.mrb[0].mxu0
  %v2709 = vadd.f32 0.0, %v2708
  %v2710 = vpop.f32.mrb[0].mxu0
  %v2711 = vpop.f32.mrb[0].mxu0
  %v2712 = vadd.f32 0.0, %v2711
  %v2713 = vpop.f32.mrb[0].mxu0
  %2714 = vmatprep.mubr.bf16.mxu0 0
  %2715 = vmatmul.mubr.bf16.gmra.mrb[0].mxu0 %v2568
  %v2716 = vpop.f32.mrb[0].mxu0
  %v2717 = vadd.f32 0.0, %v2716
  %v2718 = vpop.f32.mrb[0].mxu0
  %v2719 = vpop.f32.mrb[0].mxu0
  %v2720 = vadd.f32 0.0, %v2719
  %v2721 = vpop.f32.mrb[0].mxu0
  %2722 = vmatprep.mubr.bf16.mxu0 0
  %2723 = vmatmul.mubr.bf16.gmra.mrb[0].mxu0 %v2571
  %v2724 = vpop.f32.mrb[0].mxu0
  %v2725 = vadd.f32 0.0, %v2724
  %v2726 = vpop.f32.mrb[0].mxu0
  %v2727 = vpop.f32.mrb[0].mxu0
  %v2728 = vadd.f32 0.0, %v2727
  %v2729 = vpop.f32.mrb[0].mxu0
  %2730 = vmatprep.mubr.bf16.mxu0 0
  %2731 = vmatmul.mubr.bf16.gmra.mrb[0].mxu0 %v2574
  %v2732 = vpop.f32.mrb[0].mxu0
  %v2733 = vadd.f32 0.0, %v2732
  %v2734 = vpop.f32.mrb[0].mxu0
  %v2735 = vpop.f32.mrb[0].mxu0
  %v2736 = vadd.f32 0.0, %v2735
  %v2737 = vpop.f32.mrb[0].mxu0
  %2738 = vmatprep.mubr.bf16.mxu0 0
  %2739 = vmatmul.mubr.bf16.gmra.mrb[0].mxu0 %v2577
  %v2740 = vpop.f32.mrb[0].mxu0
  %v2741 = vadd.f32 0.0, %v2740
  %v2742 = vpop.f32.mrb[0].mxu0
  %v2743 = vpop.f32.mrb[0].mxu0
  %v2744 = vadd.f32 0.0, %v2743
  %v2745 = vpop.f32.mrb[0].mxu0
  %2746 = vmatprep.mubr.bf16.mxu0 0
  %2747 = vmatmul.mubr.bf16.gmra.mrb[0].mxu0 %v2580
  %v2748 = vpop.f32.mrb[0].mxu0
  %v2749 = vadd.f32 0.0, %v2748
  %v2750 = vpop.f32.mrb[0].mxu0
  %v2751 = vpop.f32.mrb[0].mxu0
  %v2752 = vadd.f32 0.0, %v2751
  %v2753 = vpop.f32.mrb[0].mxu0
  %2754 = vmatprep.mubr.bf16.mxu0 0
  %2755 = vmatmul.mubr.bf16.gmra.mrb[0].mxu0 %v2583
  %v2756 = vpop.f32.mrb[0].mxu0
  %v2757 = vadd.f32 0.0, %v2756
  %v2758 = vpop.f32.mrb[0].mxu0
  %v2759 = vpop.f32.mrb[0].mxu0
  %v2760 = vadd.f32 0.0, %v2759
  %v2761 = vpop.f32.mrb[0].mxu0
  %2762 = vmatprep.mubr.bf16.mxu0 0
  %2763 = vmatmul.mubr.bf16.gmra.mrb[0].mxu0 %v2586
  %v2764 = vpop.f32.mrb[0].mxu0
  %v2765 = vadd.f32 0.0, %v2764
  %v2766 = vpop.f32.mrb[0].mxu0
  %v2767 = vpop.f32.mrb[0].mxu0
  %v2768 = vadd.f32 0.0, %v2767
  %v2769 = vpop.f32.mrb[0].mxu0
  %2770 = vmatprep.mubr.bf16.mxu0 0
  %2771 = vmatmul.mubr.bf16.gmra.mrb[0].mxu0 %v2589
  %v2772 = vpop.f32.mrb[0].mxu0
  %v2773 = vadd.f32 0.0, %v2772
  %v2774 = vpop.f32.mrb[0].mxu0
  %v2775 = vpop.f32.mrb[0].mxu0
  %v2776 = vadd.f32 0.0, %v2775
  %v2777 = vpop.f32.mrb[0].mxu0
  %2778 = vmatprep.mubr.bf16.mxu0 0
  %2779 = vmatmul.mubr.bf16.gmra.mrb[0].mxu0 %v2592
  %v2780 = vpop.f32.mrb[0].mxu0
  %v2781 = vadd.f32 0.0, %v2780
  %v2782 = vpop.f32.mrb[0].mxu0
  %v2783 = vpop.f32.mrb[0].mxu0
  %v2784 = vadd.f32 0.0, %v2783
  %v2785 = vpop.f32.mrb[0].mxu0
  %2786 = vmatprep.mubr.bf16.mxu0 0
  %2787 = vmatmul.mubr.bf16.gmra.mrb[0].mxu0 %v2595
  %v2788 = vpop.f32.mrb[0].mxu0
  %v2789 = vadd.f32 0.0, %v2788
  %v2790 = vpop.f32.mrb[0].mxu0
  %v2791 = vpop.f32.mrb[0].mxu0
  %v2792 = vadd.f32 0.0, %v2791
  %v2793 = vpop.f32.mrb[0].mxu0
  %2794 = vmatprep.mubr.bf16.mxu0 0
  %2795 = vmatmul.mubr.bf16.gmra.mrb[0].mxu0 %v2598
  %v2796 = vpop.f32.mrb[0].mxu0
  %v2797 = vadd.f32 0.0, %v2796
  %v2798 = vpop.f32.mrb[0].mxu0
  %v2799 = vpop.f32.mrb[0].mxu0
  %v2800 = vadd.f32 0.0, %v2799
  %v2801 = vpop.f32.mrb[0].mxu0
  %2802 = vmatprep.mubr.bf16.mxu0 0
  %2803 = vmatmul.mubr.bf16.gmra.mrb[0].mxu0 %v2601
  %v2804 = vpop.f32.mrb[0].mxu0
  %v2805 = vadd.f32 0.0, %v2804
  %v2806 = vpop.f32.mrb[0].mxu0
  %v2807 = vpop.f32.mrb[0].mxu0
  %v2808 = vadd.f32 0.0, %v2807
  %v2809 = vpop.f32.mrb[0].mxu0
  %2810 = vmatprep.mubr.bf16.mxu0 0
  %2811 = vmatmul.mubr.bf16.gmra.mrb[0].mxu0 %v2604
  %v2812 = vpop.f32.mrb[0].mxu0
  %v2813 = vadd.f32 0.0, %v2812
  %v2814 = vpop.f32.mrb[0].mxu0
  %v2815 = vpop.f32.mrb[0].mxu0
  %v2816 = vadd.f32 0.0, %v2815
  %v2817 = vpop.f32.mrb[0].mxu0
  %2818 = vmatprep.mubr.bf16.mxu0 0
  %2819 = vmatmul.mubr.bf16.gmra.mrb[0].mxu0 %v2607
  %v2820 = vpop.f32.mrb[0].mxu0
  %v2821 = vadd.f32 0.0, %v2820
  %v2822 = vpop.f32.mrb[0].mxu0
  %v2823 = vpop.f32.mrb[0].mxu0
  %v2824 = vadd.f32 0.0, %v2823
  %v2825 = vpop.f32.mrb[0].mxu0
  %2826 = vmatprep.mubr.bf16.mxu0 0
  %2827 = vmatmul.mubr.bf16.gmra.mrb[0].mxu0 %v2610
  %v2828 = vpop.f32.mrb[0].mxu0
  %v2829 = vadd.f32 0.0, %v2828
  %v2830 = vpop.f32.mrb[0].mxu0
  %v2831 = vpop.f32.mrb[0].mxu0
  %v2832 = vadd.f32 0.0, %v2831
  %v2833 = vpop.f32.mrb[0].mxu0
  %2834 = vmatprep.mubr.bf16.mxu0 0
  %2835 = vmatmul.mubr.bf16.gmra.mrb[0].mxu0 %v2613
  %v2836 = vpop.f32.mrb[0].mxu0
  %v2837 = vadd.f32 0.0, %v2836
  %v2838 = vpop.f32.mrb[0].mxu0
  %v2839 = vpop.f32.mrb[0].mxu0
  %v2840 = vadd.f32 0.0, %v2839
  %v2841 = vpop.f32.mrb[0].mxu0
  %2842 = vmatprep.mubr.bf16.mxu0 0
  %2843 = vmatmul.mubr.bf16.gmra.mrb[0].mxu0 %v2616
  %v2844 = vpop.f32.mrb[0].mxu0
  %v2845 = vadd.f32 0.0, %v2844
  %v2846 = vpop.f32.mrb[0].mxu0
  %v2847 = vpop.f32.mrb[0].mxu0
  %v2848 = vadd.f32 0.0, %v2847
  %v2849 = vpop.f32.mrb[0].mxu0
  %2850 = vmatprep.mubr.bf16.mxu0 0
  %2851 = vmatmul.mubr.bf16.gmra.mrb[0].mxu0 %v2619
  %v2852 = vpop.f32.mrb[0].mxu0
  %v2853 = vadd.f32 0.0, %v2852
  %v2854 = vpop.f32.mrb[0].mxu0
  %v2855 = vpop.f32.mrb[0].mxu0
  %v2856 = vadd.f32 0.0, %v2855
  %v2857 = vpop.f32.mrb[0].mxu0
  %2858 = vmatprep.mubr.bf16.mxu0 0
  %2859 = vmatmul.mubr.bf16.gmra.mrb[0].mxu0 %v2622
  %v2860 = vpop.f32.mrb[0].mxu0
  %v2861 = vadd.f32 0.0, %v2860
  %v2862 = vpop.f32.mrb[0].mxu0
  %v2863 = vpop.f32.mrb[0].mxu0
  %v2864 = vadd.f32 0.0, %v2863
  %v2865 = vpop.f32.mrb[0].mxu0
  %2866 = vmatprep.mubr.bf16.mxu0 0
  %2867 = vmatmul.mubr.bf16.gmra.mrb[0].mxu0 %v2625
  %v2868 = vpop.f32.mrb[0].mxu0
  %v2869 = vadd.f32 0.0, %v2868
  %v2870 = vpop.f32.mrb[0].mxu0
  %v2871 = vpop.f32.mrb[0].mxu0
  %v2872 = vadd.f32 0.0, %v2871
  %v2873 = vpop.f32.mrb[0].mxu0
  %2874 = vmatprep.mubr.bf16.mxu0 0
  %2875 = vmatmul.mubr.bf16.gmra.mrb[0].mxu0 %v2628
  %v2876 = vpop.f32.mrb[0].mxu0
  %v2877 = vadd.f32 0.0, %v2876
  %v2878 = vpop.f32.mrb[0].mxu0
  %v2879 = vpop.f32.mrb[0].mxu0
  %v2880 = vadd.f32 0.0, %v2879
  %v2881 = vpop.f32.mrb[0].mxu0
  %2882 = vmatprep.mubr.bf16.mxu0 0
  %2883 = vmatmul.mubr.bf16.gmra.mrb[0].mxu0 %v2631
  %v2884 = vpop.f32.mrb[0].mxu0
  %v2885 = vadd.f32 0.0, %v2884
  %v2886 = vpop.f32.mrb[0].mxu0
  %v2887 = vpop.f32.mrb[0].mxu0
  %v2888 = vadd.f32 0.0, %v2887
  %v2889 = vpop.f32.mrb[0].mxu0
  %2890 = vmatprep.mubr.bf16.mxu0 0
  %2891 = vmatmul.mubr.bf16.gmra.mrb[0].mxu0 %v2634
  %v2892 = vpop.f32.mrb[0].mxu0
  %v2893 = vadd.f32 0.0, %v2892
  %v2894 = vpop.f32.mrb[0].mxu0
  %v2895 = vpop.f32.mrb[0].mxu0
  %v2896 = vadd.f32 0.0, %v2895
  %v2897 = vpop.f32.mrb[0].mxu0
  %2898 = vmatprep.mubr.bf16.mxu0 0
  %2899 = vmatmul.mubr.bf16.gmra.mrb[0].mxu0 %v2637
  %v2900 = vpop.f32.mrb[0].mxu0
  %v2901 = vadd.f32 0.0, %v2900
  %v2902 = vpop.f32.mrb[0].mxu0
  %v2903 = vpop.f32.mrb[0].mxu0
  %v2904 = vadd.f32 0.0, %v2903
  %v2905 = vpop.f32.mrb[0].mxu0
  %2906 = vmatprep.mubr.bf16.mxu0 0
  %2907 = vmatmul.mubr.bf16.gmra.mrb[0].mxu0 %v2640
  %v2908 = vpop.f32.mrb[0].mxu0
  %v2909 = vadd.f32 0.0, %v2908
  %v2910 = vpop.f32.mrb[0].mxu0
  %v2911 = vpop.f32.mrb[0].mxu0
  %v2912 = vadd.f32 0.0, %v2911
  %v2913 = vpop.f32.mrb[0].mxu0
  %2914 = vmatprep.mubr.bf16.mxu0 0
  %2915 = vmatmul.mubr.bf16.gmra.mrb[0].mxu0 %v2643
  %v2916 = vpop.f32.mrb[0].mxu0
  %v2917 = vadd.f32 0.0, %v2916
  %v2918 = vpop.f32.mrb[0].mxu0
  %v2919 = vpop.f32.mrb[0].mxu0
  %v2920 = vadd.f32 0.0, %v2919
  %v2921 = vpop.f32.mrb[0].mxu0
  %2922 = vmatprep.mubr.bf16.mxu0 0
  %2923 = vmatmul.mubr.bf16.gmra.mrb[0].mxu0 %v2646
  %v2924 = vpop.f32.mrb[0].mxu0
  %v2925 = vadd.f32 0.0, %v2924
  %v2926 = vpop.f32.mrb[0].mxu0
  %v2927 = vpop.f32.mrb[0].mxu0
  %v2928 = vadd.f32 0.0, %v2927
  %v2929 = vpop.f32.mrb[0].mxu0
  %2930 = vmatprep.mubr.bf16.mxu0 0
  %2931 = vmatmul.mubr.bf16.gmra.mrb[0].mxu0 %v2649
  %v2932 = vpop.f32.mrb[0].mxu0
  %v2933 = vadd.f32 0.0, %v2932
  %v2934 = vpop.f32.mrb[0].mxu0
  %v2935 = vpop.f32.mrb[0].mxu0
  %v2936 = vadd.f32 0.0, %v2935
  %v2937 = vpop.f32.mrb[0].mxu0
  %2938 = vmatprep.mubr.bf16.mxu0 0
  %2939 = vmatmul.mubr.bf16.gmra.mrb[0].mxu0 %v2652
  %v2940 = vpop.f32.mrb[0].mxu0
  %v2941 = vadd.f32 0.0, %v2940
  %v2942 = vpop.f32.mrb[0].mxu0
  %v2943 = vpop.f32.mrb[0].mxu0
  %v2944 = vadd.f32 0.0, %v2943
  %v2945 = vpop.f32.mrb[0].mxu0
  %2946 = vdwg.mxu0
  %v2947 = vld [vmem:[%s2] sm:$0x1]
  %v2948 = vlaneseq
  %v2949 = vshrl.u32 %v2948, 7
  %v2950 = vsub.s32 0, %v2949
  %v2951 = vrot.slane %v2947, %v2950
  %v2952 = vmul.f32 %v2693, %v2951
  %v2953 = vmul.f32 %v2696, %v2951
  %v2954 = vmul.f32 %v2701, %v2951
  %v2955 = vmul.f32 %v2704, %v2951
  %v2956 = vmul.f32 %v2709, %v2951
  %v2957 = vmul.f32 %v2712, %v2951
  %v2958 = vmul.f32 %v2717, %v2951
  %v2959 = vmul.f32 %v2720, %v2951
  %v2960 = vmul.f32 %v2725, %v2951
  %v2961 = vmul.f32 %v2728, %v2951
  %v2962 = vmul.f32 %v2733, %v2951
  %v2963 = vmul.f32 %v2736, %v2951
  %v2964 = vmul.f32 %v2741, %v2951
  %v2965 = vmul.f32 %v2744, %v2951
  %v2966 = vmul.f32 %v2749, %v2951
  %v2967 = vmul.f32 %v2752, %v2951
  %v2968 = vmul.f32 %v2757, %v2951
  %v2969 = vmul.f32 %v2760, %v2951
  %v2970 = vmul.f32 %v2765, %v2951
  %v2971 = vmul.f32 %v2768, %v2951
  %v2972 = vmul.f32 %v2773, %v2951
  %v2973 = vmul.f32 %v2776, %v2951
  %v2974 = vmul.f32 %v2781, %v2951
  %v2975 = vmul.f32 %v2784, %v2951
  %v2976 = vmul.f32 %v2789, %v2951
  %v2977 = vmul.f32 %v2792, %v2951
  %v2978 = vmul.f32 %v2797, %v2951
  %v2979 = vmul.f32 %v2800, %v2951
  %v2980 = vmul.f32 %v2805, %v2951
  %v2981 = vmul.f32 %v2808, %v2951
  %v2982 = vmul.f32 %v2813, %v2951
  %v2983 = vmul.f32 %v2816, %v2951
  %v2984 = vmul.f32 %v2821, %v2951
  %v2985 = vmul.f32 %v2824, %v2951
  %v2986 = vmul.f32 %v2829, %v2951
  %v2987 = vmul.f32 %v2832, %v2951
  %v2988 = vmul.f32 %v2837, %v2951
  %v2989 = vmul.f32 %v2840, %v2951
  %v2990 = vmul.f32 %v2845, %v2951
  %v2991 = vmul.f32 %v2848, %v2951
  %v2992 = vmul.f32 %v2853, %v2951
  %v2993 = vmul.f32 %v2856, %v2951
  %v2994 = vmul.f32 %v2861, %v2951
  %v2995 = vmul.f32 %v2864, %v2951
  %v2996 = vmul.f32 %v2869, %v2951
  %v2997 = vmul.f32 %v2872, %v2951
  %v2998 = vmul.f32 %v2877, %v2951
  %v2999 = vmul.f32 %v2880, %v2951
  %v3000 = vmul.f32 %v2885, %v2951
  %v3001 = vmul.f32 %v2888, %v2951
  %v3002 = vmul.f32 %v2893, %v2951
  %v3003 = vmul.f32 %v2896, %v2951
  %v3004 = vmul.f32 %v2901, %v2951
  %v3005 = vmul.f32 %v2904, %v2951
  %v3006 = vmul.f32 %v2909, %v2951
  %v3007 = vmul.f32 %v2912, %v2951
  %v3008 = vmul.f32 %v2917, %v2951
  %v3009 = vmul.f32 %v2920, %v2951
  %v3010 = vmul.f32 %v2925, %v2951
  %v3011 = vmul.f32 %v2928, %v2951
  %v3012 = vmul.f32 %v2933, %v2951
  %v3013 = vmul.f32 %v2936, %v2951
  %v3014 = vmul.f32 %v2941, %v2951
  %v3015 = vmul.f32 %v2944, %v2951
  %v3016 = vld [vmem:[%s2 + $0x1] sm:$0x1]
  %v3017 = vlaneseq
  %v3018 = vshrl.u32 %v3017, 7
  %v3019 = vsub.s32 0, %v3018
  %v3020 = vrot.slane %v3016, %v3019
  %v3021 = vadd.f32 %v2952, %v3020
  %v3022 = vadd.f32 %v2953, %v3020
  %v3023 = vadd.f32 %v2954, %v3020
  %v3024 = vadd.f32 %v2955, %v3020
  %v3025 = vadd.f32 %v2956, %v3020
  %v3026 = vadd.f32 %v2957, %v3020
  %v3027 = vadd.f32 %v2958, %v3020
  %v3028 = vadd.f32 %v2959, %v3020
  %v3029 = vadd.f32 %v2960, %v3020
  %v3030 = vadd.f32 %v2961, %v3020
  %v3031 = vadd.f32 %v2962, %v3020
  %v3032 = vadd.f32 %v2963, %v3020
  %v3033 = vadd.f32 %v2964, %v3020
  %v3034 = vadd.f32 %v2965, %v3020
  %v3035 = vadd.f32 %v2966, %v3020
  %v3036 = vadd.f32 %v2967, %v3020
  %v3037 = vadd.f32 %v2968, %v3020
  %v3038 = vadd.f32 %v2969, %v3020
  %v3039 = vadd.f32 %v2970, %v3020
  %v3040 = vadd.f32 %v2971, %v3020
  %v3041 = vadd.f32 %v2972, %v3020
  %v3042 = vadd.f32 %v2973, %v3020
  %v3043 = vadd.f32 %v2974, %v3020
  %v3044 = vadd.f32 %v2975, %v3020
  %v3045 = vadd.f32 %v2976, %v3020
  %v3046 = vadd.f32 %v2977, %v3020
  %v3047 = vadd.f32 %v2978, %v3020
  %v3048 = vadd.f32 %v2979, %v3020
  %v3049 = vadd.f32 %v2980, %v3020
  %v3050 = vadd.f32 %v2981, %v3020
  %v3051 = vadd.f32 %v2982, %v3020
  %v3052 = vadd.f32 %v2983, %v3020
  %v3053 = vadd.f32 %v2984, %v3020
  %v3054 = vadd.f32 %v2985, %v3020
  %v3055 = vadd.f32 %v2986, %v3020
  %v3056 = vadd.f32 %v2987, %v3020
  %v3057 = vadd.f32 %v2988, %v3020
  %v3058 = vadd.f32 %v2989, %v3020
  %v3059 = vadd.f32 %v2990, %v3020
  %v3060 = vadd.f32 %v2991, %v3020
  %v3061 = vadd.f32 %v2992, %v3020
  %v3062 = vadd.f32 %v2993, %v3020
  %v3063 = vadd.f32 %v2994, %v3020
  %v3064 = vadd.f32 %v2995, %v3020
  %v3065 = vadd.f32 %v2996, %v3020
  %v3066 = vadd.f32 %v2997, %v3020
  %v3067 = vadd.f32 %v2998, %v3020
  %v3068 = vadd.f32 %v2999, %v3020
  %v3069 = vadd.f32 %v3000, %v3020
  %v3070 = vadd.f32 %v3001, %v3020
  %v3071 = vadd.f32 %v3002, %v3020
  %v3072 = vadd.f32 %v3003, %v3020
  %v3073 = vadd.f32 %v3004, %v3020
  %v3074 = vadd.f32 %v3005, %v3020
  %v3075 = vadd.f32 %v3006, %v3020
  %v3076 = vadd.f32 %v3007, %v3020
  %v3077 = vadd.f32 %v3008, %v3020
  %v3078 = vadd.f32 %v3009, %v3020
  %v3079 = vadd.f32 %v3010, %v3020
  %v3080 = vadd.f32 %v3011, %v3020
  %v3081 = vadd.f32 %v3012, %v3020
  %v3082 = vadd.f32 %v3013, %v3020
  %v3083 = vadd.f32 %v3014, %v3020
  %v3084 = vadd.f32 %v3015, %v3020
  %v3085 = vmax.f32 %v3021, 0.0
  %v3086 = vmax.f32 %v3022, 0.0
  %v3087 = vmax.f32 %v3023, 0.0
  %v3088 = vmax.f32 %v3024, 0.0
  %v3089 = vmax.f32 %v3025, 0.0
  %v3090 = vmax.f32 %v3026, 0.0
  %v3091 = vmax.f32 %v3027, 0.0
  %v3092 = vmax.f32 %v3028, 0.0
  %v3093 = vmax.f32 %v3029, 0.0
  %v3094 = vmax.f32 %v3030, 0.0
  %v3095 = vmax.f32 %v3031, 0.0
  %v3096 = vmax.f32 %v3032, 0.0
  %v3097 = vmax.f32 %v3033, 0.0
  %v3098 = vmax.f32 %v3034, 0.0
  %v3099 = vmax.f32 %v3035, 0.0
  %v3100 = vmax.f32 %v3036, 0.0
  %v3101 = vmax.f32 %v3037, 0.0
  %v3102 = vmax.f32 %v3038, 0.0
  %v3103 = vmax.f32 %v3039, 0.0
  %v3104 = vmax.f32 %v3040, 0.0
  %v3105 = vmax.f32 %v3041, 0.0
  %v3106 = vmax.f32 %v3042, 0.0
  %v3107 = vmax.f32 %v3043, 0.0
  %v3108 = vmax.f32 %v3044, 0.0
  %v3109 = vmax.f32 %v3045, 0.0
  %v3110 = vmax.f32 %v3046, 0.0
  %v3111 = vmax.f32 %v3047, 0.0
  %v3112 = vmax.f32 %v3048, 0.0
  %v3113 = vmax.f32 %v3049, 0.0
  %v3114 = vmax.f32 %v3050, 0.0
  %v3115 = vmax.f32 %v3051, 0.0
  %v3116 = vmax.f32 %v3052, 0.0
  %v3117 = vmax.f32 %v3053, 0.0
  %v3118 = vmax.f32 %v3054, 0.0
  %v3119 = vmax.f32 %v3055, 0.0
  %v3120 = vmax.f32 %v3056, 0.0
  %v3121 = vmax.f32 %v3057, 0.0
  %v3122 = vmax.f32 %v3058, 0.0
  %v3123 = vmax.f32 %v3059, 0.0
  %v3124 = vmax.f32 %v3060, 0.0
  %v3125 = vmax.f32 %v3061, 0.0
  %v3126 = vmax.f32 %v3062, 0.0
  %v3127 = vmax.f32 %v3063, 0.0
  %v3128 = vmax.f32 %v3064, 0.0
  %v3129 = vmax.f32 %v3065, 0.0
  %v3130 = vmax.f32 %v3066, 0.0
  %v3131 = vmax.f32 %v3067, 0.0
  %v3132 = vmax.f32 %v3068, 0.0
  %v3133 = vmax.f32 %v3069, 0.0
  %v3134 = vmax.f32 %v3070, 0.0
  %v3135 = vmax.f32 %v3071, 0.0
  %v3136 = vmax.f32 %v3072, 0.0
  %v3137 = vmax.f32 %v3073, 0.0
  %v3138 = vmax.f32 %v3074, 0.0
  %v3139 = vmax.f32 %v3075, 0.0
  %v3140 = vmax.f32 %v3076, 0.0
  %v3141 = vmax.f32 %v3077, 0.0
  %v3142 = vmax.f32 %v3078, 0.0
  %v3143 = vmax.f32 %v3079, 0.0
  %v3144 = vmax.f32 %v3080, 0.0
  %v3145 = vmax.f32 %v3081, 0.0
  %v3146 = vmax.f32 %v3082, 0.0
  %v3147 = vmax.f32 %v3083, 0.0
  %v3148 = vmax.f32 %v3084, 0.0
  %vm3214 = vcmask 1040384
  %v3215 = vrot.slane 0.0, 7
  %v3216 = vsel %vm3214, %v3215, %v3215
  %v3217 = vrot.slane %v3085, 7
  %v3218 = vrot.slane %v3086, 7
  %v3219 = vsel %vm3214, %v3217, %v3218
  %v3220 = vrot.slane %v3087, 7
  %v3221 = vrot.slane %v3088, 7
  %v3222 = vsel %vm3214, %v3220, %v3221
  %v3223 = vrot.slane %v3089, 7
  %v3224 = vrot.slane %v3090, 7
  %v3225 = vsel %vm3214, %v3223, %v3224
  %v3226 = vrot.slane %v3091, 7
  %v3227 = vrot.slane %v3092, 7
  %v3228 = vsel %vm3214, %v3226, %v3227
  %v3229 = vrot.slane %v3093, 7
  %v3230 = vrot.slane %v3094, 7
  %v3231 = vsel %vm3214, %v3229, %v3230
  %v3232 = vrot.slane %v3095, 7
  %v3233 = vrot.slane %v3096, 7
  %v3234 = vsel %vm3214, %v3232, %v3233
  %v3235 = vrot.slane %v3097, 7
  %v3236 = vrot.slane %v3098, 7
  %v3237 = vsel %vm3214, %v3235, %v3236
  %v3238 = vrot.slane %v3099, 7
  %v3239 = vrot.slane %v3100, 7
  %v3240 = vsel %vm3214, %v3238, %v3239
  %v3241 = vrot.slane %v3101, 7
  %v3242 = vrot.slane %v3102, 7
  %v3243 = vsel %vm3214, %v3241, %v3242
  %v3244 = vrot.slane %v3103, 7
  %v3245 = vrot.slane %v3104, 7
  %v3246 = vsel %vm3214, %v3244, %v3245
  %v3247 = vrot.slane %v3105, 7
  %v3248 = vrot.slane %v3106, 7
  %v3249 = vsel %vm3214, %v3247, %v3248
  %v3250 = vrot.slane %v3107, 7
  %v3251 = vrot.slane %v3108, 7
  %v3252 = vsel %vm3214, %v3250, %v3251
  %v3253 = vrot.slane %v3109, 7
  %v3254 = vrot.slane %v3110, 7
  %v3255 = vsel %vm3214, %v3253, %v3254
  %v3256 = vrot.slane %v3111, 7
  %v3257 = vrot.slane %v3112, 7
  %v3258 = vsel %vm3214, %v3256, %v3257
  %v3259 = vrot.slane %v3113, 7
  %v3260 = vrot.slane %v3114, 7
  %v3261 = vsel %vm3214, %v3259, %v3260
  %v3262 = vrot.slane %v3115, 7
  %v3263 = vrot.slane %v3116, 7
  %v3264 = vsel %vm3214, %v3262, %v3263
  %v3265 = vrot.slane %v3117, 7
  %v3266 = vrot.slane %v3118, 7
  %v3267 = vsel %vm3214, %v3265, %v3266
  %v3268 = vrot.slane %v3119, 7
  %v3269 = vrot.slane %v3120, 7
  %v3270 = vsel %vm3214, %v3268, %v3269
  %v3271 = vrot.slane %v3121, 7
  %v3272 = vrot.slane %v3122, 7
  %v3273 = vsel %vm3214, %v3271, %v3272
  %v3274 = vrot.slane %v3123, 7
  %v3275 = vrot.slane %v3124, 7
  %v3276 = vsel %vm3214, %v3274, %v3275
  %v3277 = vrot.slane %v3125, 7
  %v3278 = vrot.slane %v3126, 7
  %v3279 = vsel %vm3214, %v3277, %v3278
  %v3280 = vrot.slane %v3127, 7
  %v3281 = vrot.slane %v3128, 7
  %v3282 = vsel %vm3214, %v3280, %v3281
  %v3283 = vrot.slane %v3129, 7
  %v3284 = vrot.slane %v3130, 7
  %v3285 = vsel %vm3214, %v3283, %v3284
  %v3286 = vrot.slane %v3131, 7
  %v3287 = vrot.slane %v3132, 7
  %v3288 = vsel %vm3214, %v3286, %v3287
  %v3289 = vrot.slane %v3133, 7
  %v3290 = vrot.slane %v3134, 7
  %v3291 = vsel %vm3214, %v3289, %v3290
  %v3292 = vrot.slane %v3135, 7
  %v3293 = vrot.slane %v3136, 7
  %v3294 = vsel %vm3214, %v3292, %v3293
  %v3295 = vrot.slane %v3137, 7
  %v3296 = vrot.slane %v3138, 7
  %v3297 = vsel %vm3214, %v3295, %v3296
  %v3298 = vrot.slane %v3139, 7
  %v3299 = vrot.slane %v3140, 7
  %v3300 = vsel %vm3214, %v3298, %v3299
  %v3301 = vrot.slane %v3141, 7
  %v3302 = vrot.slane %v3142, 7
  %v3303 = vsel %vm3214, %v3301, %v3302
  %v3304 = vrot.slane %v3143, 7
  %v3305 = vrot.slane %v3144, 7
  %v3306 = vsel %vm3214, %v3304, %v3305
  %v3307 = vrot.slane %v3145, 7
  %v3308 = vrot.slane %v3146, 7
  %v3309 = vsel %vm3214, %v3307, %v3308
  %v3310 = vrot.slane %v3147, 7
  %v3311 = vrot.slane %v3148, 7
  %v3312 = vsel %vm3214, %v3310, %v3311
  %v3409 = vsel %vm3214, 0.0, %v3215
  %v3410 = vsel %vm3214, 0.0, %v3217
  %v3411 = vsel %vm3214, 0.0, %v3220
  %v3412 = vsel %vm3214, 0.0, %v3223
  %v3413 = vsel %vm3214, 0.0, %v3226
  %v3414 = vsel %vm3214, 0.0, %v3229
  %v3415 = vsel %vm3214, 0.0, %v3232
  %v3416 = vsel %vm3214, 0.0, %v3235
  %v3417 = vsel %vm3214, 0.0, %v3238
  %v3418 = vsel %vm3214, 0.0, %v3241
  %v3419 = vsel %vm3214, 0.0, %v3244
  %v3420 = vsel %vm3214, 0.0, %v3247
  %v3421 = vsel %vm3214, 0.0, %v3250
  %v3422 = vsel %vm3214, 0.0, %v3253
  %v3423 = vsel %vm3214, 0.0, %v3256
  %v3424 = vsel %vm3214, 0.0, %v3259
  %v3425 = vsel %vm3214, 0.0, %v3262
  %v3426 = vsel %vm3214, 0.0, %v3265
  %v3427 = vsel %vm3214, 0.0, %v3268
  %v3428 = vsel %vm3214, 0.0, %v3271
  %v3429 = vsel %vm3214, 0.0, %v3274
  %v3430 = vsel %vm3214, 0.0, %v3277
  %v3431 = vsel %vm3214, 0.0, %v3280
  %v3432 = vsel %vm3214, 0.0, %v3283
  %v3433 = vsel %vm3214, 0.0, %v3286
  %v3434 = vsel %vm3214, 0.0, %v3289
  %v3435 = vsel %vm3214, 0.0, %v3292
  %v3436 = vsel %vm3214, 0.0, %v3295
  %v3437 = vsel %vm3214, 0.0, %v3298
  %v3438 = vsel %vm3214, 0.0, %v3301
  %v3439 = vsel %vm3214, 0.0, %v3304
  %v3440 = vsel %vm3214, 0.0, %v3307
  %v3441 = vsel %vm3214, 0.0, %v3310
  %v3442 = vsel %vm3214, %v3215, 0.0
  %v3443 = vsel %vm3214, %v3218, 0.0
  %v3444 = vsel %vm3214, %v3221, 0.0
  %v3445 = vsel %vm3214, %v3224, 0.0
  %v3446 = vsel %vm3214, %v3227, 0.0
  %v3447 = vsel %vm3214, %v3230, 0.0
  %v3448 = vsel %vm3214, %v3233, 0.0
  %v3449 = vsel %vm3214, %v3236, 0.0
  %v3450 = vsel %vm3214, %v3239, 0.0
  %v3451 = vsel %vm3214, %v3242, 0.0
  %v3452 = vsel %vm3214, %v3245, 0.0
  %v3453 = vsel %vm3214, %v3248, 0.0
  %v3454 = vsel %vm3214, %v3251, 0.0
  %v3455 = vsel %vm3214, %v3254, 0.0
  %v3456 = vsel %vm3214, %v3257, 0.0
  %v3457 = vsel %vm3214, %v3260, 0.0
  %v3458 = vsel %vm3214, %v3263, 0.0
  %v3459 = vsel %vm3214, %v3266, 0.0
  %v3460 = vsel %vm3214, %v3269, 0.0
  %v3461 = vsel %vm3214, %v3272, 0.0
  %v3462 = vsel %vm3214, %v3275, 0.0
  %v3463 = vsel %vm3214, %v3278, 0.0
  %v3464 = vsel %vm3214, %v3281, 0.0
  %v3465 = vsel %vm3214, %v3284, 0.0
  %v3466 = vsel %vm3214, %v3287, 0.0
  %v3467 = vsel %vm3214, %v3290, 0.0
  %v3468 = vsel %vm3214, %v3293, 0.0
  %v3469 = vsel %vm3214, %v3296, 0.0
  %v3470 = vsel %vm3214, %v3299, 0.0
  %v3471 = vsel %vm3214, %v3302, 0.0
  %v3472 = vsel %vm3214, %v3305, 0.0
  %v3473 = vsel %vm3214, %v3308, 0.0
  %v3474 = vsel %vm3214, %v3311, 0.0
  %vm3537 = vcmask 1046528
  %v3538 = vrot.slane %v3409, 1
  %v3539 = vrot.slane %v3216, 1
  %v3540 = vsel %vm3537, %v3538, %v3539
  %v3541 = vrot.slane %v3442, 1
  %v3542 = vsel %vm3537, %v3539, %v3541
  %v3543 = vrot.slane %v3410, 1
  %v3544 = vrot.slane %v3219, 1
  %v3545 = vsel %vm3537, %v3543, %v3544
  %v3546 = vrot.slane %v3443, 1
  %v3547 = vsel %vm3537, %v3544, %v3546
  %v3548 = vrot.slane %v3411, 1
  %v3549 = vrot.slane %v3222, 1
  %v3550 = vsel %vm3537, %v3548, %v3549
  %v3551 = vrot.slane %v3444, 1
  %v3552 = vsel %vm3537, %v3549, %v3551
  %v3553 = vrot.slane %v3412, 1
  %v3554 = vrot.slane %v3225, 1
  %v3555 = vsel %vm3537, %v3553, %v3554
  %v3556 = vrot.slane %v3445, 1
  %v3557 = vsel %vm3537, %v3554, %v3556
  %v3558 = vrot.slane %v3413, 1
  %v3559 = vrot.slane %v3228, 1
  %v3560 = vsel %vm3537, %v3558, %v3559
  %v3561 = vrot.slane %v3446, 1
  %v3562 = vsel %vm3537, %v3559, %v3561
  %v3563 = vrot.slane %v3414, 1
  %v3564 = vrot.slane %v3231, 1
  %v3565 = vsel %vm3537, %v3563, %v3564
  %v3566 = vrot.slane %v3447, 1
  %v3567 = vsel %vm3537, %v3564, %v3566
  %v3568 = vrot.slane %v3415, 1
  %v3569 = vrot.slane %v3234, 1
  %v3570 = vsel %vm3537, %v3568, %v3569
  %v3571 = vrot.slane %v3448, 1
  %v3572 = vsel %vm3537, %v3569, %v3571
  %v3573 = vrot.slane %v3416, 1
  %v3574 = vrot.slane %v3237, 1
  %v3575 = vsel %vm3537, %v3573, %v3574
  %v3576 = vrot.slane %v3449, 1
  %v3577 = vsel %vm3537, %v3574, %v3576
  %v3578 = vrot.slane %v3417, 1
  %v3579 = vrot.slane %v3240, 1
  %v3580 = vsel %vm3537, %v3578, %v3579
  %v3581 = vrot.slane %v3450, 1
  %v3582 = vsel %vm3537, %v3579, %v3581
  %v3583 = vrot.slane %v3418, 1
  %v3584 = vrot.slane %v3243, 1
  %v3585 = vsel %vm3537, %v3583, %v3584
  %v3586 = vrot.slane %v3451, 1
  %v3587 = vsel %vm3537, %v3584, %v3586
  %v3588 = vrot.slane %v3419, 1
  %v3589 = vrot.slane %v3246, 1
  %v3590 = vsel %vm3537, %v3588, %v3589
  %v3591 = vrot.slane %v3452, 1
  %v3592 = vsel %vm3537, %v3589, %v3591
  %v3593 = vrot.slane %v3420, 1
  %v3594 = vrot.slane %v3249, 1
  %v3595 = vsel %vm3537, %v3593, %v3594
  %v3596 = vrot.slane %v3453, 1
  %v3597 = vsel %vm3537, %v3594, %v3596
  %v3598 = vrot.slane %v3421, 1
  %v3599 = vrot.slane %v3252, 1
  %v3600 = vsel %vm3537, %v3598, %v3599
  %v3601 = vrot.slane %v3454, 1
  %v3602 = vsel %vm3537, %v3599, %v3601
  %v3603 = vrot.slane %v3422, 1
  %v3604 = vrot.slane %v3255, 1
  %v3605 = vsel %vm3537, %v3603, %v3604
  %v3606 = vrot.slane %v3455, 1
  %v3607 = vsel %vm3537, %v3604, %v3606
  %v3608 = vrot.slane %v3423, 1
  %v3609 = vrot.slane %v3258, 1
  %v3610 = vsel %vm3537, %v3608, %v3609
  %v3611 = vrot.slane %v3456, 1
  %v3612 = vsel %vm3537, %v3609, %v3611
  %v3613 = vrot.slane %v3424, 1
  %v3614 = vrot.slane %v3261, 1
  %v3615 = vsel %vm3537, %v3613, %v3614
  %v3616 = vrot.slane %v3457, 1
  %v3617 = vsel %vm3537, %v3614, %v3616
  %v3618 = vrot.slane %v3426, 1
  %v3619 = vrot.slane %v3267, 1
  %v3620 = vsel %vm3537, %v3618, %v3619
  %v3621 = vrot.slane %v3459, 1
  %v3622 = vsel %vm3537, %v3619, %v3621
  %v3623 = vrot.slane %v3427, 1
  %v3624 = vrot.slane %v3270, 1
  %v3625 = vsel %vm3537, %v3623, %v3624
  %v3626 = vrot.slane %v3460, 1
  %v3627 = vsel %vm3537, %v3624, %v3626
  %v3628 = vrot.slane %v3428, 1
  %v3629 = vrot.slane %v3273, 1
  %v3630 = vsel %vm3537, %v3628, %v3629
  %v3631 = vrot.slane %v3461, 1
  %v3632 = vsel %vm3537, %v3629, %v3631
  %v3633 = vrot.slane %v3429, 1
  %v3634 = vrot.slane %v3276, 1
  %v3635 = vsel %vm3537, %v3633, %v3634
  %v3636 = vrot.slane %v3462, 1
  %v3637 = vsel %vm3537, %v3634, %v3636
  %v3638 = vrot.slane %v3430, 1
  %v3639 = vrot.slane %v3279, 1
  %v3640 = vsel %vm3537, %v3638, %v3639
  %v3641 = vrot.slane %v3463, 1
  %v3642 = vsel %vm3537, %v3639, %v3641
  %v3643 = vrot.slane %v3431, 1
  %v3644 = vrot.slane %v3282, 1
  %v3645 = vsel %vm3537, %v3643, %v3644
  %v3646 = vrot.slane %v3464, 1
  %v3647 = vsel %vm3537, %v3644, %v3646
  %v3648 = vrot.slane %v3432, 1
  %v3649 = vrot.slane %v3285, 1
  %v3650 = vsel %vm3537, %v3648, %v3649
  %v3651 = vrot.slane %v3465, 1
  %v3652 = vsel %vm3537, %v3649, %v3651
  %v3653 = vrot.slane %v3433, 1
  %v3654 = vrot.slane %v3288, 1
  %v3655 = vsel %vm3537, %v3653, %v3654
  %v3656 = vrot.slane %v3466, 1
  %v3657 = vsel %vm3537, %v3654, %v3656
  %v3658 = vrot.slane %v3434, 1
  %v3659 = vrot.slane %v3291, 1
  %v3660 = vsel %vm3537, %v3658, %v3659
  %v3661 = vrot.slane %v3467, 1
  %v3662 = vsel %vm3537, %v3659, %v3661
  %v3663 = vrot.slane %v3435, 1
  %v3664 = vrot.slane %v3294, 1
  %v3665 = vsel %vm3537, %v3663, %v3664
  %v3666 = vrot.slane %v3468, 1
  %v3667 = vsel %vm3537, %v3664, %v3666
  %v3668 = vrot.slane %v3436, 1
  %v3669 = vrot.slane %v3297, 1
  %v3670 = vsel %vm3537, %v3668, %v3669
  %v3671 = vrot.slane %v3469, 1
  %v3672 = vsel %vm3537, %v3669, %v3671
  %v3673 = vrot.slane %v3437, 1
  %v3674 = vrot.slane %v3300, 1
  %v3675 = vsel %vm3537, %v3673, %v3674
  %v3676 = vrot.slane %v3470, 1
  %v3677 = vsel %vm3537, %v3674, %v3676
  %v3678 = vrot.slane %v3438, 1
  %v3679 = vrot.slane %v3303, 1
  %v3680 = vsel %vm3537, %v3678, %v3679
  %v3681 = vrot.slane %v3471, 1
  %v3682 = vsel %vm3537, %v3679, %v3681
  %v3683 = vrot.slane %v3439, 1
  %v3684 = vrot.slane %v3306, 1
  %v3685 = vsel %vm3537, %v3683, %v3684
  %v3686 = vrot.slane %v3472, 1
  %v3687 = vsel %vm3537, %v3684, %v3686
  %v3688 = vrot.slane %v3440, 1
  %v3689 = vrot.slane %v3309, 1
  %v3690 = vsel %vm3537, %v3688, %v3689
  %v3691 = vrot.slane %v3473, 1
  %v3692 = vsel %vm3537, %v3689, %v3691
  %3693 = vrot.lane.b32.xlu0 %v3540, 8
  %v3694 = vpop.permute.xlu0 %3693
  %3695 = vrot.lane.b32.xlu0 %v3542, 8
  %v3696 = vpop.permute.xlu0 %3695
  %3697 = vrot.lane.b32.xlu0 %v3545, 8
  %v3698 = vpop.permute.xlu0 %3697
  %3699 = vrot.lane.b32.xlu0 %v3547, 8
  %v3700 = vpop.permute.xlu0 %3699
  %3701 = vrot.lane.b32.xlu0 %v3550, 8
  %v3702 = vpop.permute.xlu0 %3701
  %3703 = vrot.lane.b32.xlu0 %v3552, 8
  %v3704 = vpop.permute.xlu0 %3703
  %3705 = vrot.lane.b32.xlu0 %v3555, 8
  %v3706 = vpop.permute.xlu0 %3705
  %3707 = vrot.lane.b32.xlu0 %v3557, 8
  %v3708 = vpop.permute.xlu0 %3707
  %3709 = vrot.lane.b32.xlu0 %v3560, 8
  %v3710 = vpop.permute.xlu0 %3709
  %3711 = vrot.lane.b32.xlu0 %v3562, 8
  %v3712 = vpop.permute.xlu0 %3711
  %3713 = vrot.lane.b32.xlu0 %v3565, 8
  %v3714 = vpop.permute.xlu0 %3713
  %3715 = vrot.lane.b32.xlu0 %v3567, 8
  %v3716 = vpop.permute.xlu0 %3715
  %3717 = vrot.lane.b32.xlu0 %v3570, 8
  %v3718 = vpop.permute.xlu0 %3717
  %3719 = vrot.lane.b32.xlu0 %v3572, 8
  %v3720 = vpop.permute.xlu0 %3719
  %3721 = vrot.lane.b32.xlu0 %v3575, 8
  %v3722 = vpop.permute.xlu0 %3721
  %3723 = vrot.lane.b32.xlu0 %v3577, 8
  %v3724 = vpop.permute.xlu0 %3723
  %3725 = vrot.lane.b32.xlu0 %v3580, 8
  %v3726 = vpop.permute.xlu0 %3725
  %3727 = vrot.lane.b32.xlu0 %v3582, 8
  %v3728 = vpop.permute.xlu0 %3727
  %3729 = vrot.lane.b32.xlu0 %v3585, 8
  %v3730 = vpop.permute.xlu0 %3729
  %3731 = vrot.lane.b32.xlu0 %v3587, 8
  %v3732 = vpop.permute.xlu0 %3731
  %3733 = vrot.lane.b32.xlu0 %v3590, 8
  %v3734 = vpop.permute.xlu0 %3733
  %3735 = vrot.lane.b32.xlu0 %v3592, 8
  %v3736 = vpop.permute.xlu0 %3735
  %3737 = vrot.lane.b32.xlu0 %v3595, 8
  %v3738 = vpop.permute.xlu0 %3737
  %3739 = vrot.lane.b32.xlu0 %v3597, 8
  %v3740 = vpop.permute.xlu0 %3739
  %3741 = vrot.lane.b32.xlu0 %v3600, 8
  %v3742 = vpop.permute.xlu0 %3741
  %3743 = vrot.lane.b32.xlu0 %v3602, 8
  %v3744 = vpop.permute.xlu0 %3743
  %3745 = vrot.lane.b32.xlu0 %v3605, 8
  %v3746 = vpop.permute.xlu0 %3745
  %3747 = vrot.lane.b32.xlu0 %v3607, 8
  %v3748 = vpop.permute.xlu0 %3747
  %3749 = vrot.lane.b32.xlu0 %v3610, 8
  %v3750 = vpop.permute.xlu0 %3749
  %3751 = vrot.lane.b32.xlu0 %v3612, 8
  %v3752 = vpop.permute.xlu0 %3751
  %3753 = vrot.lane.b32.xlu0 %v3615, 8
  %v3754 = vpop.permute.xlu0 %3753
  %3755 = vrot.lane.b32.xlu0 %v3617, 8
  %v3756 = vpop.permute.xlu0 %3755
  %3757 = vrot.lane.b32.xlu0 %v3620, 8
  %v3758 = vpop.permute.xlu0 %3757
  %3759 = vrot.lane.b32.xlu0 %v3622, 8
  %v3760 = vpop.permute.xlu0 %3759
  %3761 = vrot.lane.b32.xlu0 %v3625, 8
  %v3762 = vpop.permute.xlu0 %3761
  %3763 = vrot.lane.b32.xlu0 %v3627, 8
  %v3764 = vpop.permute.xlu0 %3763
  %3765 = vrot.lane.b32.xlu0 %v3630, 8
  %v3766 = vpop.permute.xlu0 %3765
  %3767 = vrot.lane.b32.xlu0 %v3632, 8
  %v3768 = vpop.permute.xlu0 %3767
  %3769 = vrot.lane.b32.xlu0 %v3635, 8
  %v3770 = vpop.permute.xlu0 %3769
  %3771 = vrot.lane.b32.xlu0 %v3637, 8
  %v3772 = vpop.permute.xlu0 %3771
  %3773 = vrot.lane.b32.xlu0 %v3640, 8
  %v3774 = vpop.permute.xlu0 %3773
  %3775 = vrot.lane.b32.xlu0 %v3642, 8
  %v3776 = vpop.permute.xlu0 %3775
  %3777 = vrot.lane.b32.xlu0 %v3645, 8
  %v3778 = vpop.permute.xlu0 %3777
  %3779 = vrot.lane.b32.xlu0 %v3647, 8
  %v3780 = vpop.permute.xlu0 %3779
  %3781 = vrot.lane.b32.xlu0 %v3650, 8
  %v3782 = vpop.permute.xlu0 %3781
  %3783 = vrot.lane.b32.xlu0 %v3652, 8
  %v3784 = vpop.permute.xlu0 %3783
  %3785 = vrot.lane.b32.xlu0 %v3655, 8
  %v3786 = vpop.permute.xlu0 %3785
  %3787 = vrot.lane.b32.xlu0 %v3657, 8
  %v3788 = vpop.permute.xlu0 %3787
  %3789 = vrot.lane.b32.xlu0 %v3660, 8
  %v3790 = vpop.permute.xlu0 %3789
  %3791 = vrot.lane.b32.xlu0 %v3662, 8
  %v3792 = vpop.permute.xlu0 %3791
  %3793 = vrot.lane.b32.xlu0 %v3665, 8
  %v3794 = vpop.permute.xlu0 %3793
  %3795 = vrot.lane.b32.xlu0 %v3667, 8
  %v3796 = vpop.permute.xlu0 %3795
  %3797 = vrot.lane.b32.xlu0 %v3670, 8
  %v3798 = vpop.permute.xlu0 %3797
  %3799 = vrot.lane.b32.xlu0 %v3672, 8
  %v3800 = vpop.permute.xlu0 %3799
  %3801 = vrot.lane.b32.xlu0 %v3675, 8
  %v3802 = vpop.permute.xlu0 %3801
  %3803 = vrot.lane.b32.xlu0 %v3677, 8
  %v3804 = vpop.permute.xlu0 %3803
  %3805 = vrot.lane.b32.xlu0 %v3680, 8
  %v3806 = vpop.permute.xlu0 %3805
  %3807 = vrot.lane.b32.xlu0 %v3682, 8
  %v3808 = vpop.permute.xlu0 %3807
  %3809 = vrot.lane.b32.xlu0 %v3685, 8
  %v3810 = vpop.permute.xlu0 %3809
  %3811 = vrot.lane.b32.xlu0 %v3687, 8
  %v3812 = vpop.permute.xlu0 %3811
  %3813 = vrot.lane.b32.xlu0 %v3690, 8
  %v3814 = vpop.permute.xlu0 %3813
  %3815 = vrot.lane.b32.xlu0 %v3692, 8
  %v3816 = vpop.permute.xlu0 %3815
  %vm3879 = vcmask 1045504
  %v3880 = vrot.slane %v3409, 2
  %v3881 = vrot.slane %v3216, 2
  %v3882 = vsel %vm3879, %v3880, %v3881
  %v3883 = vrot.slane %v3442, 2
  %v3884 = vsel %vm3879, %v3881, %v3883
  %v3885 = vrot.slane %v3410, 2
  %v3886 = vrot.slane %v3219, 2
  %v3887 = vsel %vm3879, %v3885, %v3886
  %v3888 = vrot.slane %v3443, 2
  %v3889 = vsel %vm3879, %v3886, %v3888
  %v3890 = vrot.slane %v3411, 2
  %v3891 = vrot.slane %v3222, 2
  %v3892 = vsel %vm3879, %v3890, %v3891
  %v3893 = vrot.slane %v3444, 2
  %v3894 = vsel %vm3879, %v3891, %v3893
  %v3895 = vrot.slane %v3412, 2
  %v3896 = vrot.slane %v3225, 2
  %v3897 = vsel %vm3879, %v3895, %v3896
  %v3898 = vrot.slane %v3445, 2
  %v3899 = vsel %vm3879, %v3896, %v3898
  %v3900 = vrot.slane %v3413, 2
  %v3901 = vrot.slane %v3228, 2
  %v3902 = vsel %vm3879, %v3900, %v3901
  %v3903 = vrot.slane %v3446, 2
  %v3904 = vsel %vm3879, %v3901, %v3903
  %v3905 = vrot.slane %v3414, 2
  %v3906 = vrot.slane %v3231, 2
  %v3907 = vsel %vm3879, %v3905, %v3906
  %v3908 = vrot.slane %v3447, 2
  %v3909 = vsel %vm3879, %v3906, %v3908
  %v3910 = vrot.slane %v3415, 2
  %v3911 = vrot.slane %v3234, 2
  %v3912 = vsel %vm3879, %v3910, %v3911
  %v3913 = vrot.slane %v3448, 2
  %v3914 = vsel %vm3879, %v3911, %v3913
  %v3915 = vrot.slane %v3416, 2
  %v3916 = vrot.slane %v3237, 2
  %v3917 = vsel %vm3879, %v3915, %v3916
  %v3918 = vrot.slane %v3449, 2
  %v3919 = vsel %vm3879, %v3916, %v3918
  %v3920 = vrot.slane %v3417, 2
  %v3921 = vrot.slane %v3240, 2
  %v3922 = vsel %vm3879, %v3920, %v3921
  %v3923 = vrot.slane %v3450, 2
  %v3924 = vsel %vm3879, %v3921, %v3923
  %v3925 = vrot.slane %v3418, 2
  %v3926 = vrot.slane %v3243, 2
  %v3927 = vsel %vm3879, %v3925, %v3926
  %v3928 = vrot.slane %v3451, 2
  %v3929 = vsel %vm3879, %v3926, %v3928
  %v3930 = vrot.slane %v3419, 2
  %v3931 = vrot.slane %v3246, 2
  %v3932 = vsel %vm3879, %v3930, %v3931
  %v3933 = vrot.slane %v3452, 2
  %v3934 = vsel %vm3879, %v3931, %v3933
  %v3935 = vrot.slane %v3420, 2
  %v3936 = vrot.slane %v3249, 2
  %v3937 = vsel %vm3879, %v3935, %v3936
  %v3938 = vrot.slane %v3453, 2
  %v3939 = vsel %vm3879, %v3936, %v3938
  %v3940 = vrot.slane %v3421, 2
  %v3941 = vrot.slane %v3252, 2
  %v3942 = vsel %vm3879, %v3940, %v3941
  %v3943 = vrot.slane %v3454, 2
  %v3944 = vsel %vm3879, %v3941, %v3943
  %v3945 = vrot.slane %v3422, 2
  %v3946 = vrot.slane %v3255, 2
  %v3947 = vsel %vm3879, %v3945, %v3946
  %v3948 = vrot.slane %v3455, 2
  %v3949 = vsel %vm3879, %v3946, %v3948
  %v3950 = vrot.slane %v3423, 2
  %v3951 = vrot.slane %v3258, 2
  %v3952 = vsel %vm3879, %v3950, %v3951
  %v3953 = vrot.slane %v3456, 2
  %v3954 = vsel %vm3879, %v3951, %v3953
  %v3955 = vrot.slane %v3424, 2
  %v3956 = vrot.slane %v3261, 2
  %v3957 = vsel %vm3879, %v3955, %v3956
  %v3958 = vrot.slane %v3457, 2
  %v3959 = vsel %vm3879, %v3956, %v3958
  %v3960 = vrot.slane %v3426, 2
  %v3961 = vrot.slane %v3267, 2
  %v3962 = vsel %vm3879, %v3960, %v3961
  %v3963 = vrot.slane %v3459, 2
  %v3964 = vsel %vm3879, %v3961, %v3963
  %v3965 = vrot.slane %v3427, 2
  %v3966 = vrot.slane %v3270, 2
  %v3967 = vsel %vm3879, %v3965, %v3966
  %v3968 = vrot.slane %v3460, 2
  %v3969 = vsel %vm3879, %v3966, %v3968
  %v3970 = vrot.slane %v3428, 2
  %v3971 = vrot.slane %v3273, 2
  %v3972 = vsel %vm3879, %v3970, %v3971
  %v3973 = vrot.slane %v3461, 2
  %v3974 = vsel %vm3879, %v3971, %v3973
  %v3975 = vrot.slane %v3429, 2
  %v3976 = vrot.slane %v3276, 2
  %v3977 = vsel %vm3879, %v3975, %v3976
  %v3978 = vrot.slane %v3462, 2
  %v3979 = vsel %vm3879, %v3976, %v3978
  %v3980 = vrot.slane %v3430, 2
  %v3981 = vrot.slane %v3279, 2
  %v3982 = vsel %vm3879, %v3980, %v3981
  %v3983 = vrot.slane %v3463, 2
  %v3984 = vsel %vm3879, %v3981, %v3983
  %v3985 = vrot.slane %v3431, 2
  %v3986 = vrot.slane %v3282, 2
  %v3987 = vsel %vm3879, %v3985, %v3986
  %v3988 = vrot.slane %v3464, 2
  %v3989 = vsel %vm3879, %v3986, %v3988
  %v3990 = vrot.slane %v3432, 2
  %v3991 = vrot.slane %v3285, 2
  %v3992 = vsel %vm3879, %v3990, %v3991
  %v3993 = vrot.slane %v3465, 2
  %v3994 = vsel %vm3879, %v3991, %v3993
  %v3995 = vrot.slane %v3433, 2
  %v3996 = vrot.slane %v3288, 2
  %v3997 = vsel %vm3879, %v3995, %v3996
  %v3998 = vrot.slane %v3466, 2
  %v3999 = vsel %vm3879, %v3996, %v3998
  %v4000 = vrot.slane %v3434, 2
  %v4001 = vrot.slane %v3291, 2
  %v4002 = vsel %vm3879, %v4000, %v4001
  %v4003 = vrot.slane %v3467, 2
  %v4004 = vsel %vm3879, %v4001, %v4003
  %v4005 = vrot.slane %v3435, 2
  %v4006 = vrot.slane %v3294, 2
  %v4007 = vsel %vm3879, %v4005, %v4006
  %v4008 = vrot.slane %v3468, 2
  %v4009 = vsel %vm3879, %v4006, %v4008
  %v4010 = vrot.slane %v3436, 2
  %v4011 = vrot.slane %v3297, 2
  %v4012 = vsel %vm3879, %v4010, %v4011
  %v4013 = vrot.slane %v3469, 2
  %v4014 = vsel %vm3879, %v4011, %v4013
  %v4015 = vrot.slane %v3437, 2
  %v4016 = vrot.slane %v3300, 2
  %v4017 = vsel %vm3879, %v4015, %v4016
  %v4018 = vrot.slane %v3470, 2
  %v4019 = vsel %vm3879, %v4016, %v4018
  %v4020 = vrot.slane %v3438, 2
  %v4021 = vrot.slane %v3303, 2
  %v4022 = vsel %vm3879, %v4020, %v4021
  %v4023 = vrot.slane %v3471, 2
  %v4024 = vsel %vm3879, %v4021, %v4023
  %v4025 = vrot.slane %v3439, 2
  %v4026 = vrot.slane %v3306, 2
  %v4027 = vsel %vm3879, %v4025, %v4026
  %v4028 = vrot.slane %v3472, 2
  %v4029 = vsel %vm3879, %v4026, %v4028
  %v4030 = vrot.slane %v3440, 2
  %v4031 = vrot.slane %v3309, 2
  %v4032 = vsel %vm3879, %v4030, %v4031
  %v4033 = vrot.slane %v3473, 2
  %v4034 = vsel %vm3879, %v4031, %v4033
  %4035 = vrot.lane.b32.xlu0 %v3882, 16
  %v4036 = vpop.permute.xlu0 %4035
  %4037 = vrot.lane.b32.xlu0 %v3884, 16
  %v4038 = vpop.permute.xlu0 %4037
  %4039 = vrot.lane.b32.xlu0 %v3887, 16
  %v4040 = vpop.permute.xlu0 %4039
  %4041 = vrot.lane.b32.xlu0 %v3889, 16
  %v4042 = vpop.permute.xlu0 %4041
  %4043 = vrot.lane.b32.xlu0 %v3892, 16
  %v4044 = vpop.permute.xlu0 %4043
  %4045 = vrot.lane.b32.xlu0 %v3894, 16
  %v4046 = vpop.permute.xlu0 %4045
  %4047 = vrot.lane.b32.xlu0 %v3897, 16
  %v4048 = vpop.permute.xlu0 %4047
  %4049 = vrot.lane.b32.xlu0 %v3899, 16
  %v4050 = vpop.permute.xlu0 %4049
  %4051 = vrot.lane.b32.xlu0 %v3902, 16
  %v4052 = vpop.permute.xlu0 %4051
  %4053 = vrot.lane.b32.xlu0 %v3904, 16
  %v4054 = vpop.permute.xlu0 %4053
  %4055 = vrot.lane.b32.xlu0 %v3907, 16
  %v4056 = vpop.permute.xlu0 %4055
  %4057 = vrot.lane.b32.xlu0 %v3909, 16
  %v4058 = vpop.permute.xlu0 %4057
  %4059 = vrot.lane.b32.xlu0 %v3912, 16
  %v4060 = vpop.permute.xlu0 %4059
  %4061 = vrot.lane.b32.xlu0 %v3914, 16
  %v4062 = vpop.permute.xlu0 %4061
  %4063 = vrot.lane.b32.xlu0 %v3917, 16
  %v4064 = vpop.permute.xlu0 %4063
  %4065 = vrot.lane.b32.xlu0 %v3919, 16
  %v4066 = vpop.permute.xlu0 %4065
  %4067 = vrot.lane.b32.xlu0 %v3922, 16
  %v4068 = vpop.permute.xlu0 %4067
  %4069 = vrot.lane.b32.xlu0 %v3924, 16
  %v4070 = vpop.permute.xlu0 %4069
  %4071 = vrot.lane.b32.xlu0 %v3927, 16
  %v4072 = vpop.permute.xlu0 %4071
  %4073 = vrot.lane.b32.xlu0 %v3929, 16
  %v4074 = vpop.permute.xlu0 %4073
  %4075 = vrot.lane.b32.xlu0 %v3932, 16
  %v4076 = vpop.permute.xlu0 %4075
  %4077 = vrot.lane.b32.xlu0 %v3934, 16
  %v4078 = vpop.permute.xlu0 %4077
  %4079 = vrot.lane.b32.xlu0 %v3937, 16
  %v4080 = vpop.permute.xlu0 %4079
  %4081 = vrot.lane.b32.xlu0 %v3939, 16
  %v4082 = vpop.permute.xlu0 %4081
  %4083 = vrot.lane.b32.xlu0 %v3942, 16
  %v4084 = vpop.permute.xlu0 %4083
  %4085 = vrot.lane.b32.xlu0 %v3944, 16
  %v4086 = vpop.permute.xlu0 %4085
  %4087 = vrot.lane.b32.xlu0 %v3947, 16
  %v4088 = vpop.permute.xlu0 %4087
  %4089 = vrot.lane.b32.xlu0 %v3949, 16
  %v4090 = vpop.permute.xlu0 %4089
  %4091 = vrot.lane.b32.xlu0 %v3952, 16
  %v4092 = vpop.permute.xlu0 %4091
  %4093 = vrot.lane.b32.xlu0 %v3954, 16
  %v4094 = vpop.permute.xlu0 %4093
  %4095 = vrot.lane.b32.xlu0 %v3957, 16
  %v4096 = vpop.permute.xlu0 %4095
  %4097 = vrot.lane.b32.xlu0 %v3959, 16
  %v4098 = vpop.permute.xlu0 %4097
  %4099 = vrot.lane.b32.xlu0 %v3962, 16
  %v4100 = vpop.permute.xlu0 %4099
  %4101 = vrot.lane.b32.xlu0 %v3964, 16
  %v4102 = vpop.permute.xlu0 %4101
  %4103 = vrot.lane.b32.xlu0 %v3967, 16
  %v4104 = vpop.permute.xlu0 %4103
  %4105 = vrot.lane.b32.xlu0 %v3969, 16
  %v4106 = vpop.permute.xlu0 %4105
  %4107 = vrot.lane.b32.xlu0 %v3972, 16
  %v4108 = vpop.permute.xlu0 %4107
  %4109 = vrot.lane.b32.xlu0 %v3974, 16
  %v4110 = vpop.permute.xlu0 %4109
  %4111 = vrot.lane.b32.xlu0 %v3977, 16
  %v4112 = vpop.permute.xlu0 %4111
  %4113 = vrot.lane.b32.xlu0 %v3979, 16
  %v4114 = vpop.permute.xlu0 %4113
  %4115 = vrot.lane.b32.xlu0 %v3982, 16
  %v4116 = vpop.permute.xlu0 %4115
  %4117 = vrot.lane.b32.xlu0 %v3984, 16
  %v4118 = vpop.permute.xlu0 %4117
  %4119 = vrot.lane.b32.xlu0 %v3987, 16
  %v4120 = vpop.permute.xlu0 %4119
  %4121 = vrot.lane.b32.xlu0 %v3989, 16
  %v4122 = vpop.permute.xlu0 %4121
  %4123 = vrot.lane.b32.xlu0 %v3992, 16
  %v4124 = vpop.permute.xlu0 %4123
  %4125 = vrot.lane.b32.xlu0 %v3994, 16
  %v4126 = vpop.permute.xlu0 %4125
  %4127 = vrot.lane.b32.xlu0 %v3997, 16
  %v4128 = vpop.permute.xlu0 %4127
  %4129 = vrot.lane.b32.xlu0 %v3999, 16
  %v4130 = vpop.permute.xlu0 %4129
  %4131 = vrot.lane.b32.xlu0 %v4002, 16
  %v4132 = vpop.permute.xlu0 %4131
  %4133 = vrot.lane.b32.xlu0 %v4004, 16
  %v4134 = vpop.permute.xlu0 %4133
  %4135 = vrot.lane.b32.xlu0 %v4007, 16
  %v4136 = vpop.permute.xlu0 %4135
  %4137 = vrot.lane.b32.xlu0 %v4009, 16
  %v4138 = vpop.permute.xlu0 %4137
  %4139 = vrot.lane.b32.xlu0 %v4012, 16
  %v4140 = vpop.permute.xlu0 %4139
  %4141 = vrot.lane.b32.xlu0 %v4014, 16
  %v4142 = vpop.permute.xlu0 %4141
  %4143 = vrot.lane.b32.xlu0 %v4017, 16
  %v4144 = vpop.permute.xlu0 %4143
  %4145 = vrot.lane.b32.xlu0 %v4019, 16
  %v4146 = vpop.permute.xlu0 %4145
  %4147 = vrot.lane.b32.xlu0 %v4022, 16
  %v4148 = vpop.permute.xlu0 %4147
  %4149 = vrot.lane.b32.xlu0 %v4024, 16
  %v4150 = vpop.permute.xlu0 %4149
  %4151 = vrot.lane.b32.xlu0 %v4027, 16
  %v4152 = vpop.permute.xlu0 %4151
  %4153 = vrot.lane.b32.xlu0 %v4029, 16
  %v4154 = vpop.permute.xlu0 %4153
  %4155 = vrot.lane.b32.xlu0 %v4032, 16
  %v4156 = vpop.permute.xlu0 %4155
  %4157 = vrot.lane.b32.xlu0 %v4034, 16
  %v4158 = vpop.permute.xlu0 %4157
  %4223 = vrot.lane.b32.xlu0 %v3410, 24
  %v4224 = vpop.permute.xlu0 %4223
  %4225 = vrot.lane.b32.xlu0 %v3219, 24
  %v4226 = vpop.permute.xlu0 %4225
  %4227 = vrot.lane.b32.xlu0 %v3411, 24
  %v4228 = vpop.permute.xlu0 %4227
  %4229 = vrot.lane.b32.xlu0 %v3222, 24
  %v4230 = vpop.permute.xlu0 %4229
  %4231 = vrot.lane.b32.xlu0 %v3412, 24
  %v4232 = vpop.permute.xlu0 %4231
  %4233 = vrot.lane.b32.xlu0 %v3225, 24
  %v4234 = vpop.permute.xlu0 %4233
  %4235 = vrot.lane.b32.xlu0 %v3413, 24
  %v4236 = vpop.permute.xlu0 %4235
  %4237 = vrot.lane.b32.xlu0 %v3228, 24
  %v4238 = vpop.permute.xlu0 %4237
  %4239 = vrot.lane.b32.xlu0 %v3414, 24
  %v4240 = vpop.permute.xlu0 %4239
  %4241 = vrot.lane.b32.xlu0 %v3231, 24
  %v4242 = vpop.permute.xlu0 %4241
  %4243 = vrot.lane.b32.xlu0 %v3415, 24
  %v4244 = vpop.permute.xlu0 %4243
  %4245 = vrot.lane.b32.xlu0 %v3234, 24
  %v4246 = vpop.permute.xlu0 %4245
  %4247 = vrot.lane.b32.xlu0 %v3416, 24
  %v4248 = vpop.permute.xlu0 %4247
  %4249 = vrot.lane.b32.xlu0 %v3237, 24
  %v4250 = vpop.permute.xlu0 %4249
  %4251 = vrot.lane.b32.xlu0 %v3417, 24
  %v4252 = vpop.permute.xlu0 %4251
  %4253 = vrot.lane.b32.xlu0 %v3240, 24
  %v4254 = vpop.permute.xlu0 %4253
  %4255 = vrot.lane.b32.xlu0 %v3418, 24
  %v4256 = vpop.permute.xlu0 %4255
  %4257 = vrot.lane.b32.xlu0 %v3243, 24
  %v4258 = vpop.permute.xlu0 %4257
  %4259 = vrot.lane.b32.xlu0 %v3419, 24
  %v4260 = vpop.permute.xlu0 %4259
  %4261 = vrot.lane.b32.xlu0 %v3246, 24
  %v4262 = vpop.permute.xlu0 %4261
  %4263 = vrot.lane.b32.xlu0 %v3420, 24
  %v4264 = vpop.permute.xlu0 %4263
  %4265 = vrot.lane.b32.xlu0 %v3249, 24
  %v4266 = vpop.permute.xlu0 %4265
  %4267 = vrot.lane.b32.xlu0 %v3421, 24
  %v4268 = vpop.permute.xlu0 %4267
  %4269 = vrot.lane.b32.xlu0 %v3252, 24
  %v4270 = vpop.permute.xlu0 %4269
  %4271 = vrot.lane.b32.xlu0 %v3422, 24
  %v4272 = vpop.permute.xlu0 %4271
  %4273 = vrot.lane.b32.xlu0 %v3255, 24
  %v4274 = vpop.permute.xlu0 %4273
  %4275 = vrot.lane.b32.xlu0 %v3423, 24
  %v4276 = vpop.permute.xlu0 %4275
  %4277 = vrot.lane.b32.xlu0 %v3258, 24
  %v4278 = vpop.permute.xlu0 %4277
  %4279 = vrot.lane.b32.xlu0 %v3424, 24
  %v4280 = vpop.permute.xlu0 %4279
  %4281 = vrot.lane.b32.xlu0 %v3261, 24
  %v4282 = vpop.permute.xlu0 %4281
  %4283 = vrot.lane.b32.xlu0 %v3425, 24
  %v4284 = vpop.permute.xlu0 %4283
  %4285 = vrot.lane.b32.xlu0 %v3264, 24
  %v4286 = vpop.permute.xlu0 %4285
  %4287 = vrot.lane.b32.xlu0 %v3426, 24
  %v4288 = vpop.permute.xlu0 %4287
  %4289 = vrot.lane.b32.xlu0 %v3267, 24
  %v4290 = vpop.permute.xlu0 %4289
  %4291 = vrot.lane.b32.xlu0 %v3427, 24
  %v4292 = vpop.permute.xlu0 %4291
  %4293 = vrot.lane.b32.xlu0 %v3270, 24
  %v4294 = vpop.permute.xlu0 %4293
  %4295 = vrot.lane.b32.xlu0 %v3428, 24
  %v4296 = vpop.permute.xlu0 %4295
  %4297 = vrot.lane.b32.xlu0 %v3273, 24
  %v4298 = vpop.permute.xlu0 %4297
  %4299 = vrot.lane.b32.xlu0 %v3429, 24
  %v4300 = vpop.permute.xlu0 %4299
  %4301 = vrot.lane.b32.xlu0 %v3276, 24
  %v4302 = vpop.permute.xlu0 %4301
  %4303 = vrot.lane.b32.xlu0 %v3430, 24
  %v4304 = vpop.permute.xlu0 %4303
  %4305 = vrot.lane.b32.xlu0 %v3279, 24
  %v4306 = vpop.permute.xlu0 %4305
  %4307 = vrot.lane.b32.xlu0 %v3431, 24
  %v4308 = vpop.permute.xlu0 %4307
  %4309 = vrot.lane.b32.xlu0 %v3282, 24
  %v4310 = vpop.permute.xlu0 %4309
  %4311 = vrot.lane.b32.xlu0 %v3432, 24
  %v4312 = vpop.permute.xlu0 %4311
  %4313 = vrot.lane.b32.xlu0 %v3285, 24
  %v4314 = vpop.permute.xlu0 %4313
  %4315 = vrot.lane.b32.xlu0 %v3433, 24
  %v4316 = vpop.permute.xlu0 %4315
  %4317 = vrot.lane.b32.xlu0 %v3288, 24
  %v4318 = vpop.permute.xlu0 %4317
  %4319 = vrot.lane.b32.xlu0 %v3434, 24
  %v4320 = vpop.permute.xlu0 %4319
  %4321 = vrot.lane.b32.xlu0 %v3291, 24
  %v4322 = vpop.permute.xlu0 %4321
  %4323 = vrot.lane.b32.xlu0 %v3435, 24
  %v4324 = vpop.permute.xlu0 %4323
  %4325 = vrot.lane.b32.xlu0 %v3294, 24
  %v4326 = vpop.permute.xlu0 %4325
  %4327 = vrot.lane.b32.xlu0 %v3436, 24
  %v4328 = vpop.permute.xlu0 %4327
  %4329 = vrot.lane.b32.xlu0 %v3297, 24
  %v4330 = vpop.permute.xlu0 %4329
  %4331 = vrot.lane.b32.xlu0 %v3437, 24
  %v4332 = vpop.permute.xlu0 %4331
  %4333 = vrot.lane.b32.xlu0 %v3300, 24
  %v4334 = vpop.permute.xlu0 %4333
  %4335 = vrot.lane.b32.xlu0 %v3438, 24
  %v4336 = vpop.permute.xlu0 %4335
  %4337 = vrot.lane.b32.xlu0 %v3303, 24
  %v4338 = vpop.permute.xlu0 %4337
  %4339 = vrot.lane.b32.xlu0 %v3439, 24
  %v4340 = vpop.permute.xlu0 %4339
  %4341 = vrot.lane.b32.xlu0 %v3306, 24
  %v4342 = vpop.permute.xlu0 %4341
  %4343 = vrot.lane.b32.xlu0 %v3440, 24
  %v4344 = vpop.permute.xlu0 %4343
  %4345 = vrot.lane.b32.xlu0 %v3309, 24
  %v4346 = vpop.permute.xlu0 %4345
  %4347 = vrot.lane.b32.xlu0 %v3441, 24
  %v4348 = vpop.permute.xlu0 %4347
  %4349 = vrot.lane.b32.xlu0 %v3312, 24
  %v4350 = vpop.permute.xlu0 %4349
  %v4417 = vrot.slane %v3425, 1
  %v4418 = vrot.slane %v3264, 1
  %v4419 = vsel %vm3537, %v4417, %v4418
  %v4420 = vrot.slane %v3458, 1
  %v4421 = vsel %vm3537, %v4418, %v4420
  %v4422 = vrot.slane %v3441, 1
  %v4423 = vrot.slane %v3312, 1
  %v4424 = vsel %vm3537, %v4422, %v4423
  %v4425 = vrot.slane %v3474, 1
  %v4426 = vsel %vm3537, %v4423, %v4425
  %4427 = vrot.lane.b32.xlu0 %v3545, 32
  %v4428 = vpop.permute.xlu0 %4427
  %4429 = vrot.lane.b32.xlu0 %v3547, 32
  %v4430 = vpop.permute.xlu0 %4429
  %4431 = vrot.lane.b32.xlu0 %v3550, 32
  %v4432 = vpop.permute.xlu0 %4431
  %4433 = vrot.lane.b32.xlu0 %v3552, 32
  %v4434 = vpop.permute.xlu0 %4433
  %4435 = vrot.lane.b32.xlu0 %v3555, 32
  %v4436 = vpop.permute.xlu0 %4435
  %4437 = vrot.lane.b32.xlu0 %v3557, 32
  %v4438 = vpop.permute.xlu0 %4437
  %4439 = vrot.lane.b32.xlu0 %v3560, 32
  %v4440 = vpop.permute.xlu0 %4439
  %4441 = vrot.lane.b32.xlu0 %v3562, 32
  %v4442 = vpop.permute.xlu0 %4441
  %4443 = vrot.lane.b32.xlu0 %v3565, 32
  %v4444 = vpop.permute.xlu0 %4443
  %4445 = vrot.lane.b32.xlu0 %v3567, 32
  %v4446 = vpop.permute.xlu0 %4445
  %4447 = vrot.lane.b32.xlu0 %v3570, 32
  %v4448 = vpop.permute.xlu0 %4447
  %4449 = vrot.lane.b32.xlu0 %v3572, 32
  %v4450 = vpop.permute.xlu0 %4449
  %4451 = vrot.lane.b32.xlu0 %v3575, 32
  %v4452 = vpop.permute.xlu0 %4451
  %4453 = vrot.lane.b32.xlu0 %v3577, 32
  %v4454 = vpop.permute.xlu0 %4453
  %4455 = vrot.lane.b32.xlu0 %v3580, 32
  %v4456 = vpop.permute.xlu0 %4455
  %4457 = vrot.lane.b32.xlu0 %v3582, 32
  %v4458 = vpop.permute.xlu0 %4457
  %4459 = vrot.lane.b32.xlu0 %v3585, 32
  %v4460 = vpop.permute.xlu0 %4459
  %4461 = vrot.lane.b32.xlu0 %v3587, 32
  %v4462 = vpop.permute.xlu0 %4461
  %4463 = vrot.lane.b32.xlu0 %v3590, 32
  %v4464 = vpop.permute.xlu0 %4463
  %4465 = vrot.lane.b32.xlu0 %v3592, 32
  %v4466 = vpop.permute.xlu0 %4465
  %4467 = vrot.lane.b32.xlu0 %v3595, 32
  %v4468 = vpop.permute.xlu0 %4467
  %4469 = vrot.lane.b32.xlu0 %v3597, 32
  %v4470 = vpop.permute.xlu0 %4469
  %4471 = vrot.lane.b32.xlu0 %v3600, 32
  %v4472 = vpop.permute.xlu0 %4471
  %4473 = vrot.lane.b32.xlu0 %v3602, 32
  %v4474 = vpop.permute.xlu0 %4473
  %4475 = vrot.lane.b32.xlu0 %v3605, 32
  %v4476 = vpop.permute.xlu0 %4475
  %4477 = vrot.lane.b32.xlu0 %v3607, 32
  %v4478 = vpop.permute.xlu0 %4477
  %4479 = vrot.lane.b32.xlu0 %v3610, 32
  %v4480 = vpop.permute.xlu0 %4479
  %4481 = vrot.lane.b32.xlu0 %v3612, 32
  %v4482 = vpop.permute.xlu0 %4481
  %4483 = vrot.lane.b32.xlu0 %v3615, 32
  %v4484 = vpop.permute.xlu0 %4483
  %4485 = vrot.lane.b32.xlu0 %v3617, 32
  %v4486 = vpop.permute.xlu0 %4485
  %4487 = vrot.lane.b32.xlu0 %v4419, 32
  %v4488 = vpop.permute.xlu0 %4487
  %4489 = vrot.lane.b32.xlu0 %v4421, 32
  %v4490 = vpop.permute.xlu0 %4489
  %4491 = vrot.lane.b32.xlu0 %v3620, 32
  %v4492 = vpop.permute.xlu0 %4491
  %4493 = vrot.lane.b32.xlu0 %v3622, 32
  %v4494 = vpop.permute.xlu0 %4493
  %4495 = vrot.lane.b32.xlu0 %v3625, 32
  %v4496 = vpop.permute.xlu0 %4495
  %4497 = vrot.lane.b32.xlu0 %v3627, 32
  %v4498 = vpop.permute.xlu0 %4497
  %4499 = vrot.lane.b32.xlu0 %v3630, 32
  %v4500 = vpop.permute.xlu0 %4499
  %4501 = vrot.lane.b32.xlu0 %v3632, 32
  %v4502 = vpop.permute.xlu0 %4501
  %4503 = vrot.lane.b32.xlu0 %v3635, 32
  %v4504 = vpop.permute.xlu0 %4503
  %4505 = vrot.lane.b32.xlu0 %v3637, 32
  %v4506 = vpop.permute.xlu0 %4505
  %4507 = vrot.lane.b32.xlu0 %v3640, 32
  %v4508 = vpop.permute.xlu0 %4507
  %4509 = vrot.lane.b32.xlu0 %v3642, 32
  %v4510 = vpop.permute.xlu0 %4509
  %4511 = vrot.lane.b32.xlu0 %v3645, 32
  %v4512 = vpop.permute.xlu0 %4511
  %4513 = vrot.lane.b32.xlu0 %v3647, 32
  %v4514 = vpop.permute.xlu0 %4513
  %4515 = vrot.lane.b32.xlu0 %v3650, 32
  %v4516 = vpop.permute.xlu0 %4515
  %4517 = vrot.lane.b32.xlu0 %v3652, 32
  %v4518 = vpop.permute.xlu0 %4517
  %4519 = vrot.lane.b32.xlu0 %v3655, 32
  %v4520 = vpop.permute.xlu0 %4519
  %4521 = vrot.lane.b32.xlu0 %v3657, 32
  %v4522 = vpop.permute.xlu0 %4521
  %4523 = vrot.lane.b32.xlu0 %v3660, 32
  %v4524 = vpop.permute.xlu0 %4523
  %4525 = vrot.lane.b32.xlu0 %v3662, 32
  %v4526 = vpop.permute.xlu0 %4525
  %4527 = vrot.lane.b32.xlu0 %v3665, 32
  %v4528 = vpop.permute.xlu0 %4527
  %4529 = vrot.lane.b32.xlu0 %v3667, 32
  %v4530 = vpop.permute.xlu0 %4529
  %4531 = vrot.lane.b32.xlu0 %v3670, 32
  %v4532 = vpop.permute.xlu0 %4531
  %4533 = vrot.lane.b32.xlu0 %v3672, 32
  %v4534 = vpop.permute.xlu0 %4533
  %4535 = vrot.lane.b32.xlu0 %v3675, 32
  %v4536 = vpop.permute.xlu0 %4535
  %4537 = vrot.lane.b32.xlu0 %v3677, 32
  %v4538 = vpop.permute.xlu0 %4537
  %4539 = vrot.lane.b32.xlu0 %v3680, 32
  %v4540 = vpop.permute.xlu0 %4539
  %4541 = vrot.lane.b32.xlu0 %v3682, 32
  %v4542 = vpop.permute.xlu0 %4541
  %4543 = vrot.lane.b32.xlu0 %v3685, 32
  %v4544 = vpop.permute.xlu0 %4543
  %4545 = vrot.lane.b32.xlu0 %v3687, 32
  %v4546 = vpop.permute.xlu0 %4545
  %4547 = vrot.lane.b32.xlu0 %v3690, 32
  %v4548 = vpop.permute.xlu0 %4547
  %4549 = vrot.lane.b32.xlu0 %v3692, 32
  %v4550 = vpop.permute.xlu0 %4549
  %4551 = vrot.lane.b32.xlu0 %v4424, 32
  %v4552 = vpop.permute.xlu0 %4551
  %4553 = vrot.lane.b32.xlu0 %v4426, 32
  %v4554 = vpop.permute.xlu0 %4553
  %v4619 = vrot.slane %v3425, 2
  %v4620 = vrot.slane %v3264, 2
  %v4621 = vsel %vm3879, %v4619, %v4620
  %v4622 = vrot.slane %v3458, 2
  %v4623 = vsel %vm3879, %v4620, %v4622
  %v4624 = vrot.slane %v3441, 2
  %v4625 = vrot.slane %v3312, 2
  %v4626 = vsel %vm3879, %v4624, %v4625
  %v4627 = vrot.slane %v3474, 2
  %v4628 = vsel %vm3879, %v4625, %v4627
  %4629 = vrot.lane.b32.xlu0 %v3887, 40
  %v4630 = vpop.permute.xlu0 %4629
  %4631 = vrot.lane.b32.xlu0 %v3889, 40
  %v4632 = vpop.permute.xlu0 %4631
  %4633 = vrot.lane.b32.xlu0 %v3892, 40
  %v4634 = vpop.permute.xlu0 %4633
  %4635 = vrot.lane.b32.xlu0 %v3894, 40
  %v4636 = vpop.permute.xlu0 %4635
  %4637 = vrot.lane.b32.xlu0 %v3897, 40
  %v4638 = vpop.permute.xlu0 %4637
  %4639 = vrot.lane.b32.xlu0 %v3899, 40
  %v4640 = vpop.permute.xlu0 %4639
  %4641 = vrot.lane.b32.xlu0 %v3902, 40
  %v4642 = vpop.permute.xlu0 %4641
  %4643 = vrot.lane.b32.xlu0 %v3904, 40
  %v4644 = vpop.permute.xlu0 %4643
  %4645 = vrot.lane.b32.xlu0 %v3907, 40
  %v4646 = vpop.permute.xlu0 %4645
  %4647 = vrot.lane.b32.xlu0 %v3909, 40
  %v4648 = vpop.permute.xlu0 %4647
  %4649 = vrot.lane.b32.xlu0 %v3912, 40
  %v4650 = vpop.permute.xlu0 %4649
  %4651 = vrot.lane.b32.xlu0 %v3914, 40
  %v4652 = vpop.permute.xlu0 %4651
  %4653 = vrot.lane.b32.xlu0 %v3917, 40
  %v4654 = vpop.permute.xlu0 %4653
  %4655 = vrot.lane.b32.xlu0 %v3919, 40
  %v4656 = vpop.permute.xlu0 %4655
  %4657 = vrot.lane.b32.xlu0 %v3922, 40
  %v4658 = vpop.permute.xlu0 %4657
  %4659 = vrot.lane.b32.xlu0 %v3924, 40
  %v4660 = vpop.permute.xlu0 %4659
  %4661 = vrot.lane.b32.xlu0 %v3927, 40
  %v4662 = vpop.permute.xlu0 %4661
  %4663 = vrot.lane.b32.xlu0 %v3929, 40
  %v4664 = vpop.permute.xlu0 %4663
  %4665 = vrot.lane.b32.xlu0 %v3932, 40
  %v4666 = vpop.permute.xlu0 %4665
  %4667 = vrot.lane.b32.xlu0 %v3934, 40
  %v4668 = vpop.permute.xlu0 %4667
  %4669 = vrot.lane.b32.xlu0 %v3937, 40
  %v4670 = vpop.permute.xlu0 %4669
  %4671 = vrot.lane.b32.xlu0 %v3939, 40
  %v4672 = vpop.permute.xlu0 %4671
  %4673 = vrot.lane.b32.xlu0 %v3942, 40
  %v4674 = vpop.permute.xlu0 %4673
  %4675 = vrot.lane.b32.xlu0 %v3944, 40
  %v4676 = vpop.permute.xlu0 %4675
  %4677 = vrot.lane.b32.xlu0 %v3947, 40
  %v4678 = vpop.permute.xlu0 %4677
  %4679 = vrot.lane.b32.xlu0 %v3949, 40
  %v4680 = vpop.permute.xlu0 %4679
  %4681 = vrot.lane.b32.xlu0 %v3952, 40
  %v4682 = vpop.permute.xlu0 %4681
  %4683 = vrot.lane.b32.xlu0 %v3954, 40
  %v4684 = vpop.permute.xlu0 %4683
  %4685 = vrot.lane.b32.xlu0 %v3957, 40
  %v4686 = vpop.permute.xlu0 %4685
  %4687 = vrot.lane.b32.xlu0 %v3959, 40
  %v4688 = vpop.permute.xlu0 %4687
  %4689 = vrot.lane.b32.xlu0 %v4621, 40
  %v4690 = vpop.permute.xlu0 %4689
  %4691 = vrot.lane.b32.xlu0 %v4623, 40
  %v4692 = vpop.permute.xlu0 %4691
  %4693 = vrot.lane.b32.xlu0 %v3962, 40
  %v4694 = vpop.permute.xlu0 %4693
  %4695 = vrot.lane.b32.xlu0 %v3964, 40
  %v4696 = vpop.permute.xlu0 %4695
  %4697 = vrot.lane.b32.xlu0 %v3967, 40
  %v4698 = vpop.permute.xlu0 %4697
  %4699 = vrot.lane.b32.xlu0 %v3969, 40
  %v4700 = vpop.permute.xlu0 %4699
  %4701 = vrot.lane.b32.xlu0 %v3972, 40
  %v4702 = vpop.permute.xlu0 %4701
  %4703 = vrot.lane.b32.xlu0 %v3974, 40
  %v4704 = vpop.permute.xlu0 %4703
  %4705 = vrot.lane.b32.xlu0 %v3977, 40
  %v4706 = vpop.permute.xlu0 %4705
  %4707 = vrot.lane.b32.xlu0 %v3979, 40
  %v4708 = vpop.permute.xlu0 %4707
  %4709 = vrot.lane.b32.xlu0 %v3982, 40
  %v4710 = vpop.permute.xlu0 %4709
  %4711 = vrot.lane.b32.xlu0 %v3984, 40
  %v4712 = vpop.permute.xlu0 %4711
  %4713 = vrot.lane.b32.xlu0 %v3987, 40
  %v4714 = vpop.permute.xlu0 %4713
  %4715 = vrot.lane.b32.xlu0 %v3989, 40
  %v4716 = vpop.permute.xlu0 %4715
  %4717 = vrot.lane.b32.xlu0 %v3992, 40
  %v4718 = vpop.permute.xlu0 %4717
  %4719 = vrot.lane.b32.xlu0 %v3994, 40
  %v4720 = vpop.permute.xlu0 %4719
  %4721 = vrot.lane.b32.xlu0 %v3997, 40
  %v4722 = vpop.permute.xlu0 %4721
  %4723 = vrot.lane.b32.xlu0 %v3999, 40
  %v4724 = vpop.permute.xlu0 %4723
  %4725 = vrot.lane.b32.xlu0 %v4002, 40
  %v4726 = vpop.permute.xlu0 %4725
  %4727 = vrot.lane.b32.xlu0 %v4004, 40
  %v4728 = vpop.permute.xlu0 %4727
  %4729 = vrot.lane.b32.xlu0 %v4007, 40
  %v4730 = vpop.permute.xlu0 %4729
  %4731 = vrot.lane.b32.xlu0 %v4009, 40
  %v4732 = vpop.permute.xlu0 %4731
  %4733 = vrot.lane.b32.xlu0 %v4012, 40
  %v4734 = vpop.permute.xlu0 %4733
  %4735 = vrot.lane.b32.xlu0 %v4014, 40
  %v4736 = vpop.permute.xlu0 %4735
  %4737 = vrot.lane.b32.xlu0 %v4017, 40
  %v4738 = vpop.permute.xlu0 %4737
  %4739 = vrot.lane.b32.xlu0 %v4019, 40
  %v4740 = vpop.permute.xlu0 %4739
  %4741 = vrot.lane.b32.xlu0 %v4022, 40
  %v4742 = vpop.permute.xlu0 %4741
  %4743 = vrot.lane.b32.xlu0 %v4024, 40
  %v4744 = vpop.permute.xlu0 %4743
  %4745 = vrot.lane.b32.xlu0 %v4027, 40
  %v4746 = vpop.permute.xlu0 %4745
  %4747 = vrot.lane.b32.xlu0 %v4029, 40
  %v4748 = vpop.permute.xlu0 %4747
  %4749 = vrot.lane.b32.xlu0 %v4032, 40
  %v4750 = vpop.permute.xlu0 %4749
  %4751 = vrot.lane.b32.xlu0 %v4034, 40
  %v4752 = vpop.permute.xlu0 %4751
  %4753 = vrot.lane.b32.xlu0 %v4626, 40
  %v4754 = vpop.permute.xlu0 %4753
  %4755 = vrot.lane.b32.xlu0 %v4628, 40
  %v4756 = vpop.permute.xlu0 %4755
  %4821 = vrot.lane.b32.xlu0 %v3411, 48
  %v4822 = vpop.permute.xlu0 %4821
  %4823 = vrot.lane.b32.xlu0 %v3222, 48
  %v4824 = vpop.permute.xlu0 %4823
  %4825 = vrot.lane.b32.xlu0 %v3412, 48
  %v4826 = vpop.permute.xlu0 %4825
  %4827 = vrot.lane.b32.xlu0 %v3225, 48
  %v4828 = vpop.permute.xlu0 %4827
  %4829 = vrot.lane.b32.xlu0 %v3413, 48
  %v4830 = vpop.permute.xlu0 %4829
  %4831 = vrot.lane.b32.xlu0 %v3228, 48
  %v4832 = vpop.permute.xlu0 %4831
  %4833 = vrot.lane.b32.xlu0 %v3414, 48
  %v4834 = vpop.permute.xlu0 %4833
  %4835 = vrot.lane.b32.xlu0 %v3231, 48
  %v4836 = vpop.permute.xlu0 %4835
  %4837 = vrot.lane.b32.xlu0 %v3415, 48
  %v4838 = vpop.permute.xlu0 %4837
  %4839 = vrot.lane.b32.xlu0 %v3234, 48
  %v4840 = vpop.permute.xlu0 %4839
  %4841 = vrot.lane.b32.xlu0 %v3416, 48
  %v4842 = vpop.permute.xlu0 %4841
  %4843 = vrot.lane.b32.xlu0 %v3237, 48
  %v4844 = vpop.permute.xlu0 %4843
  %4845 = vrot.lane.b32.xlu0 %v3417, 48
  %v4846 = vpop.permute.xlu0 %4845
  %4847 = vrot.lane.b32.xlu0 %v3240, 48
  %v4848 = vpop.permute.xlu0 %4847
  %4849 = vrot.lane.b32.xlu0 %v3418, 48
  %v4850 = vpop.permute.xlu0 %4849
  %4851 = vrot.lane.b32.xlu0 %v3243, 48
  %v4852 = vpop.permute.xlu0 %4851
  %4853 = vrot.lane.b32.xlu0 %v3419, 48
  %v4854 = vpop.permute.xlu0 %4853
  %4855 = vrot.lane.b32.xlu0 %v3246, 48
  %v4856 = vpop.permute.xlu0 %4855
  %4857 = vrot.lane.b32.xlu0 %v3420, 48
  %v4858 = vpop.permute.xlu0 %4857
  %4859 = vrot.lane.b32.xlu0 %v3249, 48
  %v4860 = vpop.permute.xlu0 %4859
  %4861 = vrot.lane.b32.xlu0 %v3421, 48
  %v4862 = vpop.permute.xlu0 %4861
  %4863 = vrot.lane.b32.xlu0 %v3252, 48
  %v4864 = vpop.permute.xlu0 %4863
  %4865 = vrot.lane.b32.xlu0 %v3422, 48
  %v4866 = vpop.permute.xlu0 %4865
  %4867 = vrot.lane.b32.xlu0 %v3255, 48
  %v4868 = vpop.permute.xlu0 %4867
  %4869 = vrot.lane.b32.xlu0 %v3423, 48
  %v4870 = vpop.permute.xlu0 %4869
  %4871 = vrot.lane.b32.xlu0 %v3258, 48
  %v4872 = vpop.permute.xlu0 %4871
  %4873 = vrot.lane.b32.xlu0 %v3424, 48
  %v4874 = vpop.permute.xlu0 %4873
  %4875 = vrot.lane.b32.xlu0 %v3261, 48
  %v4876 = vpop.permute.xlu0 %4875
  %4877 = vrot.lane.b32.xlu0 %v3425, 48
  %v4878 = vpop.permute.xlu0 %4877
  %4879 = vrot.lane.b32.xlu0 %v3264, 48
  %v4880 = vpop.permute.xlu0 %4879
  %4881 = vrot.lane.b32.xlu0 %v3409, 48
  %v4882 = vpop.permute.xlu0 %4881
  %4883 = vrot.lane.b32.xlu0 %v3216, 48
  %v4884 = vpop.permute.xlu0 %4883
  %4885 = vrot.lane.b32.xlu0 %v3427, 48
  %v4886 = vpop.permute.xlu0 %4885
  %4887 = vrot.lane.b32.xlu0 %v3270, 48
  %v4888 = vpop.permute.xlu0 %4887
  %4889 = vrot.lane.b32.xlu0 %v3428, 48
  %v4890 = vpop.permute.xlu0 %4889
  %4891 = vrot.lane.b32.xlu0 %v3273, 48
  %v4892 = vpop.permute.xlu0 %4891
  %4893 = vrot.lane.b32.xlu0 %v3429, 48
  %v4894 = vpop.permute.xlu0 %4893
  %4895 = vrot.lane.b32.xlu0 %v3276, 48
  %v4896 = vpop.permute.xlu0 %4895
  %4897 = vrot.lane.b32.xlu0 %v3430, 48
  %v4898 = vpop.permute.xlu0 %4897
  %4899 = vrot.lane.b32.xlu0 %v3279, 48
  %v4900 = vpop.permute.xlu0 %4899
  %4901 = vrot.lane.b32.xlu0 %v3431, 48
  %v4902 = vpop.permute.xlu0 %4901
  %4903 = vrot.lane.b32.xlu0 %v3282, 48
  %v4904 = vpop.permute.xlu0 %4903
  %4905 = vrot.lane.b32.xlu0 %v3432, 48
  %v4906 = vpop.permute.xlu0 %4905
  %4907 = vrot.lane.b32.xlu0 %v3285, 48
  %v4908 = vpop.permute.xlu0 %4907
  %4909 = vrot.lane.b32.xlu0 %v3433, 48
  %v4910 = vpop.permute.xlu0 %4909
  %4911 = vrot.lane.b32.xlu0 %v3288, 48
  %v4912 = vpop.permute.xlu0 %4911
  %4913 = vrot.lane.b32.xlu0 %v3434, 48
  %v4914 = vpop.permute.xlu0 %4913
  %4915 = vrot.lane.b32.xlu0 %v3291, 48
  %v4916 = vpop.permute.xlu0 %4915
  %4917 = vrot.lane.b32.xlu0 %v3435, 48
  %v4918 = vpop.permute.xlu0 %4917
  %4919 = vrot.lane.b32.xlu0 %v3294, 48
  %v4920 = vpop.permute.xlu0 %4919
  %4921 = vrot.lane.b32.xlu0 %v3436, 48
  %v4922 = vpop.permute.xlu0 %4921
  %4923 = vrot.lane.b32.xlu0 %v3297, 48
  %v4924 = vpop.permute.xlu0 %4923
  %4925 = vrot.lane.b32.xlu0 %v3437, 48
  %v4926 = vpop.permute.xlu0 %4925
  %4927 = vrot.lane.b32.xlu0 %v3300, 48
  %v4928 = vpop.permute.xlu0 %4927
  %4929 = vrot.lane.b32.xlu0 %v3438, 48
  %v4930 = vpop.permute.xlu0 %4929
  %4931 = vrot.lane.b32.xlu0 %v3303, 48
  %v4932 = vpop.permute.xlu0 %4931
  %4933 = vrot.lane.b32.xlu0 %v3439, 48
  %v4934 = vpop.permute.xlu0 %4933
  %4935 = vrot.lane.b32.xlu0 %v3306, 48
  %v4936 = vpop.permute.xlu0 %4935
  %4937 = vrot.lane.b32.xlu0 %v3440, 48
  %v4938 = vpop.permute.xlu0 %4937
  %4939 = vrot.lane.b32.xlu0 %v3309, 48
  %v4940 = vpop.permute.xlu0 %4939
  %4941 = vrot.lane.b32.xlu0 %v3441, 48
  %v4942 = vpop.permute.xlu0 %4941
  %4943 = vrot.lane.b32.xlu0 %v3312, 48
  %v4944 = vpop.permute.xlu0 %4943
  %5007 = vrot.lane.b32.xlu0 %v3550, 56
  %v5008 = vpop.permute.xlu0 %5007
  %5009 = vrot.lane.b32.xlu0 %v3552, 56
  %v5010 = vpop.permute.xlu0 %5009
  %5011 = vrot.lane.b32.xlu0 %v3555, 56
  %v5012 = vpop.permute.xlu0 %5011
  %5013 = vrot.lane.b32.xlu0 %v3557, 56
  %v5014 = vpop.permute.xlu0 %5013
  %5015 = vrot.lane.b32.xlu0 %v3560, 56
  %v5016 = vpop.permute.xlu0 %5015
  %5017 = vrot.lane.b32.xlu0 %v3562, 56
  %v5018 = vpop.permute.xlu0 %5017
  %5019 = vrot.lane.b32.xlu0 %v3565, 56
  %v5020 = vpop.permute.xlu0 %5019
  %5021 = vrot.lane.b32.xlu0 %v3567, 56
  %v5022 = vpop.permute.xlu0 %5021
  %5023 = vrot.lane.b32.xlu0 %v3570, 56
  %v5024 = vpop.permute.xlu0 %5023
  %5025 = vrot.lane.b32.xlu0 %v3572, 56
  %v5026 = vpop.permute.xlu0 %5025
  %5027 = vrot.lane.b32.xlu0 %v3575, 56
  %v5028 = vpop.permute.xlu0 %5027
  %5029 = vrot.lane.b32.xlu0 %v3577, 56
  %v5030 = vpop.permute.xlu0 %5029
  %5031 = vrot.lane.b32.xlu0 %v3580, 56
  %v5032 = vpop.permute.xlu0 %5031
  %5033 = vrot.lane.b32.xlu0 %v3582, 56
  %v5034 = vpop.permute.xlu0 %5033
  %5035 = vrot.lane.b32.xlu0 %v3585, 56
  %v5036 = vpop.permute.xlu0 %5035
  %5037 = vrot.lane.b32.xlu0 %v3587, 56
  %v5038 = vpop.permute.xlu0 %5037
  %5039 = vrot.lane.b32.xlu0 %v3590, 56
  %v5040 = vpop.permute.xlu0 %5039
  %5041 = vrot.lane.b32.xlu0 %v3592, 56
  %v5042 = vpop.permute.xlu0 %5041
  %5043 = vrot.lane.b32.xlu0 %v3595, 56
  %v5044 = vpop.permute.xlu0 %5043
  %5045 = vrot.lane.b32.xlu0 %v3597, 56
  %v5046 = vpop.permute.xlu0 %5045
  %5047 = vrot.lane.b32.xlu0 %v3600, 56
  %v5048 = vpop.permute.xlu0 %5047
  %5049 = vrot.lane.b32.xlu0 %v3602, 56
  %v5050 = vpop.permute.xlu0 %5049
  %5051 = vrot.lane.b32.xlu0 %v3605, 56
  %v5052 = vpop.permute.xlu0 %5051
  %5053 = vrot.lane.b32.xlu0 %v3607, 56
  %v5054 = vpop.permute.xlu0 %5053
  %5055 = vrot.lane.b32.xlu0 %v3610, 56
  %v5056 = vpop.permute.xlu0 %5055
  %5057 = vrot.lane.b32.xlu0 %v3612, 56
  %v5058 = vpop.permute.xlu0 %5057
  %5059 = vrot.lane.b32.xlu0 %v3615, 56
  %v5060 = vpop.permute.xlu0 %5059
  %5061 = vrot.lane.b32.xlu0 %v3617, 56
  %v5062 = vpop.permute.xlu0 %5061
  %5063 = vrot.lane.b32.xlu0 %v4419, 56
  %v5064 = vpop.permute.xlu0 %5063
  %5065 = vrot.lane.b32.xlu0 %v4421, 56
  %v5066 = vpop.permute.xlu0 %5065
  %5067 = vrot.lane.b32.xlu0 %v3540, 56
  %v5068 = vpop.permute.xlu0 %5067
  %5069 = vrot.lane.b32.xlu0 %v3542, 56
  %v5070 = vpop.permute.xlu0 %5069
  %5071 = vrot.lane.b32.xlu0 %v3625, 56
  %v5072 = vpop.permute.xlu0 %5071
  %5073 = vrot.lane.b32.xlu0 %v3627, 56
  %v5074 = vpop.permute.xlu0 %5073
  %5075 = vrot.lane.b32.xlu0 %v3630, 56
  %v5076 = vpop.permute.xlu0 %5075
  %5077 = vrot.lane.b32.xlu0 %v3632, 56
  %v5078 = vpop.permute.xlu0 %5077
  %5079 = vrot.lane.b32.xlu0 %v3635, 56
  %v5080 = vpop.permute.xlu0 %5079
  %5081 = vrot.lane.b32.xlu0 %v3637, 56
  %v5082 = vpop.permute.xlu0 %5081
  %5083 = vrot.lane.b32.xlu0 %v3640, 56
  %v5084 = vpop.permute.xlu0 %5083
  %5085 = vrot.lane.b32.xlu0 %v3642, 56
  %v5086 = vpop.permute.xlu0 %5085
  %5087 = vrot.lane.b32.xlu0 %v3645, 56
  %v5088 = vpop.permute.xlu0 %5087
  %5089 = vrot.lane.b32.xlu0 %v3647, 56
  %v5090 = vpop.permute.xlu0 %5089
  %5091 = vrot.lane.b32.xlu0 %v3650, 56
  %v5092 = vpop.permute.xlu0 %5091
  %5093 = vrot.lane.b32.xlu0 %v3652, 56
  %v5094 = vpop.permute.xlu0 %5093
  %5095 = vrot.lane.b32.xlu0 %v3655, 56
  %v5096 = vpop.permute.xlu0 %5095
  %5097 = vrot.lane.b32.xlu0 %v3657, 56
  %v5098 = vpop.permute.xlu0 %5097
  %5099 = vrot.lane.b32.xlu0 %v3660, 56
  %v5100 = vpop.permute.xlu0 %5099
  %5101 = vrot.lane.b32.xlu0 %v3662, 56
  %v5102 = vpop.permute.xlu0 %5101
  %5103 = vrot.lane.b32.xlu0 %v3665, 56
  %v5104 = vpop.permute.xlu0 %5103
  %5105 = vrot.lane.b32.xlu0 %v3667, 56
  %v5106 = vpop.permute.xlu0 %5105
  %5107 = vrot.lane.b32.xlu0 %v3670, 56
  %v5108 = vpop.permute.xlu0 %5107
  %5109 = vrot.lane.b32.xlu0 %v3672, 56
  %v5110 = vpop.permute.xlu0 %5109
  %5111 = vrot.lane.b32.xlu0 %v3675, 56
  %v5112 = vpop.permute.xlu0 %5111
  %5113 = vrot.lane.b32.xlu0 %v3677, 56
  %v5114 = vpop.permute.xlu0 %5113
  %5115 = vrot.lane.b32.xlu0 %v3680, 56
  %v5116 = vpop.permute.xlu0 %5115
  %5117 = vrot.lane.b32.xlu0 %v3682, 56
  %v5118 = vpop.permute.xlu0 %5117
  %5119 = vrot.lane.b32.xlu0 %v3685, 56
  %v5120 = vpop.permute.xlu0 %5119
  %5121 = vrot.lane.b32.xlu0 %v3687, 56
  %v5122 = vpop.permute.xlu0 %5121
  %5123 = vrot.lane.b32.xlu0 %v3690, 56
  %v5124 = vpop.permute.xlu0 %5123
  %5125 = vrot.lane.b32.xlu0 %v3692, 56
  %v5126 = vpop.permute.xlu0 %5125
  %5127 = vrot.lane.b32.xlu0 %v4424, 56
  %v5128 = vpop.permute.xlu0 %5127
  %5129 = vrot.lane.b32.xlu0 %v4426, 56
  %v5130 = vpop.permute.xlu0 %5129
  %5193 = vrot.lane.b32.xlu0 %v3892, 64
  %v5194 = vpop.permute.xlu0 %5193
  %5195 = vrot.lane.b32.xlu0 %v3894, 64
  %v5196 = vpop.permute.xlu0 %5195
  %5197 = vrot.lane.b32.xlu0 %v3897, 64
  %v5198 = vpop.permute.xlu0 %5197
  %5199 = vrot.lane.b32.xlu0 %v3899, 64
  %v5200 = vpop.permute.xlu0 %5199
  %5201 = vrot.lane.b32.xlu0 %v3902, 64
  %v5202 = vpop.permute.xlu0 %5201
  %5203 = vrot.lane.b32.xlu0 %v3904, 64
  %v5204 = vpop.permute.xlu0 %5203
  %5205 = vrot.lane.b32.xlu0 %v3907, 64
  %v5206 = vpop.permute.xlu0 %5205
  %5207 = vrot.lane.b32.xlu0 %v3909, 64
  %v5208 = vpop.permute.xlu0 %5207
  %5209 = vrot.lane.b32.xlu0 %v3912, 64
  %v5210 = vpop.permute.xlu0 %5209
  %5211 = vrot.lane.b32.xlu0 %v3914, 64
  %v5212 = vpop.permute.xlu0 %5211
  %5213 = vrot.lane.b32.xlu0 %v3917, 64
  %v5214 = vpop.permute.xlu0 %5213
  %5215 = vrot.lane.b32.xlu0 %v3919, 64
  %v5216 = vpop.permute.xlu0 %5215
  %5217 = vrot.lane.b32.xlu0 %v3922, 64
  %v5218 = vpop.permute.xlu0 %5217
  %5219 = vrot.lane.b32.xlu0 %v3924, 64
  %v5220 = vpop.permute.xlu0 %5219
  %5221 = vrot.lane.b32.xlu0 %v3927, 64
  %v5222 = vpop.permute.xlu0 %5221
  %5223 = vrot.lane.b32.xlu0 %v3929, 64
  %v5224 = vpop.permute.xlu0 %5223
  %5225 = vrot.lane.b32.xlu0 %v3932, 64
  %v5226 = vpop.permute.xlu0 %5225
  %5227 = vrot.lane.b32.xlu0 %v3934, 64
  %v5228 = vpop.permute.xlu0 %5227
  %5229 = vrot.lane.b32.xlu0 %v3937, 64
  %v5230 = vpop.permute.xlu0 %5229
  %5231 = vrot.lane.b32.xlu0 %v3939, 64
  %v5232 = vpop.permute.xlu0 %5231
  %5233 = vrot.lane.b32.xlu0 %v3942, 64
  %v5234 = vpop.permute.xlu0 %5233
  %5235 = vrot.lane.b32.xlu0 %v3944, 64
  %v5236 = vpop.permute.xlu0 %5235
  %5237 = vrot.lane.b32.xlu0 %v3947, 64
  %v5238 = vpop.permute.xlu0 %5237
  %5239 = vrot.lane.b32.xlu0 %v3949, 64
  %v5240 = vpop.permute.xlu0 %5239
  %5241 = vrot.lane.b32.xlu0 %v3952, 64
  %v5242 = vpop.permute.xlu0 %5241
  %5243 = vrot.lane.b32.xlu0 %v3954, 64
  %v5244 = vpop.permute.xlu0 %5243
  %5245 = vrot.lane.b32.xlu0 %v3957, 64
  %v5246 = vpop.permute.xlu0 %5245
  %5247 = vrot.lane.b32.xlu0 %v3959, 64
  %v5248 = vpop.permute.xlu0 %5247
  %5249 = vrot.lane.b32.xlu0 %v4621, 64
  %v5250 = vpop.permute.xlu0 %5249
  %5251 = vrot.lane.b32.xlu0 %v4623, 64
  %v5252 = vpop.permute.xlu0 %5251
  %5253 = vrot.lane.b32.xlu0 %v3882, 64
  %v5254 = vpop.permute.xlu0 %5253
  %5255 = vrot.lane.b32.xlu0 %v3884, 64
  %v5256 = vpop.permute.xlu0 %5255
  %5257 = vrot.lane.b32.xlu0 %v3967, 64
  %v5258 = vpop.permute.xlu0 %5257
  %5259 = vrot.lane.b32.xlu0 %v3969, 64
  %v5260 = vpop.permute.xlu0 %5259
  %5261 = vrot.lane.b32.xlu0 %v3972, 64
  %v5262 = vpop.permute.xlu0 %5261
  %5263 = vrot.lane.b32.xlu0 %v3974, 64
  %v5264 = vpop.permute.xlu0 %5263
  %5265 = vrot.lane.b32.xlu0 %v3977, 64
  %v5266 = vpop.permute.xlu0 %5265
  %5267 = vrot.lane.b32.xlu0 %v3979, 64
  %v5268 = vpop.permute.xlu0 %5267
  %5269 = vrot.lane.b32.xlu0 %v3982, 64
  %v5270 = vpop.permute.xlu0 %5269
  %5271 = vrot.lane.b32.xlu0 %v3984, 64
  %v5272 = vpop.permute.xlu0 %5271
  %5273 = vrot.lane.b32.xlu0 %v3987, 64
  %v5274 = vpop.permute.xlu0 %5273
  %5275 = vrot.lane.b32.xlu0 %v3989, 64
  %v5276 = vpop.permute.xlu0 %5275
  %5277 = vrot.lane.b32.xlu0 %v3992, 64
  %v5278 = vpop.permute.xlu0 %5277
  %5279 = vrot.lane.b32.xlu0 %v3994, 64
  %v5280 = vpop.permute.xlu0 %5279
  %5281 = vrot.lane.b32.xlu0 %v3997, 64
  %v5282 = vpop.permute.xlu0 %5281
  %5283 = vrot.lane.b32.xlu0 %v3999, 64
  %v5284 = vpop.permute.xlu0 %5283
  %5285 = vrot.lane.b32.xlu0 %v4002, 64
  %v5286 = vpop.permute.xlu0 %5285
  %5287 = vrot.lane.b32.xlu0 %v4004, 64
  %v5288 = vpop.permute.xlu0 %5287
  %5289 = vrot.lane.b32.xlu0 %v4007, 64
  %v5290 = vpop.permute.xlu0 %5289
  %5291 = vrot.lane.b32.xlu0 %v4009, 64
  %v5292 = vpop.permute.xlu0 %5291
  %5293 = vrot.lane.b32.xlu0 %v4012, 64
  %v5294 = vpop.permute.xlu0 %5293
  %5295 = vrot.lane.b32.xlu0 %v4014, 64
  %v5296 = vpop.permute.xlu0 %5295
  %5297 = vrot.lane.b32.xlu0 %v4017, 64
  %v5298 = vpop.permute.xlu0 %5297
  %5299 = vrot.lane.b32.xlu0 %v4019, 64
  %v5300 = vpop.permute.xlu0 %5299
  %5301 = vrot.lane.b32.xlu0 %v4022, 64
  %v5302 = vpop.permute.xlu0 %5301
  %5303 = vrot.lane.b32.xlu0 %v4024, 64
  %v5304 = vpop.permute.xlu0 %5303
  %5305 = vrot.lane.b32.xlu0 %v4027, 64
  %v5306 = vpop.permute.xlu0 %5305
  %5307 = vrot.lane.b32.xlu0 %v4029, 64
  %v5308 = vpop.permute.xlu0 %5307
  %5309 = vrot.lane.b32.xlu0 %v4032, 64
  %v5310 = vpop.permute.xlu0 %5309
  %5311 = vrot.lane.b32.xlu0 %v4034, 64
  %v5312 = vpop.permute.xlu0 %5311
  %5313 = vrot.lane.b32.xlu0 %v4626, 64
  %v5314 = vpop.permute.xlu0 %5313
  %5315 = vrot.lane.b32.xlu0 %v4628, 64
  %v5316 = vpop.permute.xlu0 %5315
  %v5379 = vsel %vm2050, %v3409, %v3694
  %v5380 = vsel %vm2050, %v3216, %v3696
  %v5381 = vsel %vm2050, %v3410, %v3698
  %v5382 = vsel %vm2050, %v3219, %v3700
  %v5383 = vsel %vm2050, %v3411, %v3702
  %v5384 = vsel %vm2050, %v3222, %v3704
  %v5385 = vsel %vm2050, %v3412, %v3706
  %v5386 = vsel %vm2050, %v3225, %v3708
  %v5387 = vsel %vm2050, %v3413, %v3710
  %v5388 = vsel %vm2050, %v3228, %v3712
  %v5389 = vsel %vm2050, %v3414, %v3714
  %v5390 = vsel %vm2050, %v3231, %v3716
  %v5391 = vsel %vm2050, %v3415, %v3718
  %v5392 = vsel %vm2050, %v3234, %v3720
  %v5393 = vsel %vm2050, %v3416, %v3722
  %v5394 = vsel %vm2050, %v3237, %v3724
  %v5395 = vsel %vm2050, %v3417, %v3726
  %v5396 = vsel %vm2050, %v3240, %v3728
  %v5397 = vsel %vm2050, %v3418, %v3730
  %v5398 = vsel %vm2050, %v3243, %v3732
  %v5399 = vsel %vm2050, %v3419, %v3734
  %v5400 = vsel %vm2050, %v3246, %v3736
  %v5401 = vsel %vm2050, %v3420, %v3738
  %v5402 = vsel %vm2050, %v3249, %v3740
  %v5403 = vsel %vm2050, %v3421, %v3742
  %v5404 = vsel %vm2050, %v3252, %v3744
  %v5405 = vsel %vm2050, %v3422, %v3746
  %v5406 = vsel %vm2050, %v3255, %v3748
  %v5407 = vsel %vm2050, %v3423, %v3750
  %v5408 = vsel %vm2050, %v3258, %v3752
  %v5409 = vsel %vm2050, %v3424, %v3754
  %v5410 = vsel %vm2050, %v3261, %v3756
  %v5411 = vsel %vm2050, %v3426, %v3758
  %v5412 = vsel %vm2050, %v3267, %v3760
  %v5413 = vsel %vm2050, %v3427, %v3762
  %v5414 = vsel %vm2050, %v3270, %v3764
  %v5415 = vsel %vm2050, %v3428, %v3766
  %v5416 = vsel %vm2050, %v3273, %v3768
  %v5417 = vsel %vm2050, %v3429, %v3770
  %v5418 = vsel %vm2050, %v3276, %v3772
  %v5419 = vsel %vm2050, %v3430, %v3774
  %v5420 = vsel %vm2050, %v3279, %v3776
  %v5421 = vsel %vm2050, %v3431, %v3778
  %v5422 = vsel %vm2050, %v3282, %v3780
  %v5423 = vsel %vm2050, %v3432, %v3782
  %v5424 = vsel %vm2050, %v3285, %v3784
  %v5425 = vsel %vm2050, %v3433, %v3786
  %v5426 = vsel %vm2050, %v3288, %v3788
  %v5427 = vsel %vm2050, %v3434, %v3790
  %v5428 = vsel %vm2050, %v3291, %v3792
  %v5429 = vsel %vm2050, %v3435, %v3794
  %v5430 = vsel %vm2050, %v3294, %v3796
  %v5431 = vsel %vm2050, %v3436, %v3798
  %v5432 = vsel %vm2050, %v3297, %v3800
  %v5433 = vsel %vm2050, %v3437, %v3802
  %v5434 = vsel %vm2050, %v3300, %v3804
  %v5435 = vsel %vm2050, %v3438, %v3806
  %v5436 = vsel %vm2050, %v3303, %v3808
  %v5437 = vsel %vm2050, %v3439, %v3810
  %v5438 = vsel %vm2050, %v3306, %v3812
  %v5439 = vsel %vm2050, %v3440, %v3814
  %v5440 = vsel %vm2050, %v3309, %v3816
  %v5441 = vsel %vm2180, %v5379, %v4036
  %v5442 = vsel %vm2180, %v5380, %v4038
  %v5443 = vsel %vm2180, %v5381, %v4040
  %v5444 = vsel %vm2180, %v5382, %v4042
  %v5445 = vsel %vm2180, %v5383, %v4044
  %v5446 = vsel %vm2180, %v5384, %v4046
  %v5447 = vsel %vm2180, %v5385, %v4048
  %v5448 = vsel %vm2180, %v5386, %v4050
  %v5449 = vsel %vm2180, %v5387, %v4052
  %v5450 = vsel %vm2180, %v5388, %v4054
  %v5451 = vsel %vm2180, %v5389, %v4056
  %v5452 = vsel %vm2180, %v5390, %v4058
  %v5453 = vsel %vm2180, %v5391, %v4060
  %v5454 = vsel %vm2180, %v5392, %v4062
  %v5455 = vsel %vm2180, %v5393, %v4064
  %v5456 = vsel %vm2180, %v5394, %v4066
  %v5457 = vsel %vm2180, %v5395, %v4068
  %v5458 = vsel %vm2180, %v5396, %v4070
  %v5459 = vsel %vm2180, %v5397, %v4072
  %v5460 = vsel %vm2180, %v5398, %v4074
  %v5461 = vsel %vm2180, %v5399, %v4076
  %v5462 = vsel %vm2180, %v5400, %v4078
  %v5463 = vsel %vm2180, %v5401, %v4080
  %v5464 = vsel %vm2180, %v5402, %v4082
  %v5465 = vsel %vm2180, %v5403, %v4084
  %v5466 = vsel %vm2180, %v5404, %v4086
  %v5467 = vsel %vm2180, %v5405, %v4088
  %v5468 = vsel %vm2180, %v5406, %v4090
  %v5469 = vsel %vm2180, %v5407, %v4092
  %v5470 = vsel %vm2180, %v5408, %v4094
  %v5471 = vsel %vm2180, %v5409, %v4096
  %v5472 = vsel %vm2180, %v5410, %v4098
  %v5473 = vsel %vm2180, %v5411, %v4100
  %v5474 = vsel %vm2180, %v5412, %v4102
  %v5475 = vsel %vm2180, %v5413, %v4104
  %v5476 = vsel %vm2180, %v5414, %v4106
  %v5477 = vsel %vm2180, %v5415, %v4108
  %v5478 = vsel %vm2180, %v5416, %v4110
  %v5479 = vsel %vm2180, %v5417, %v4112
  %v5480 = vsel %vm2180, %v5418, %v4114
  %v5481 = vsel %vm2180, %v5419, %v4116
  %v5482 = vsel %vm2180, %v5420, %v4118
  %v5483 = vsel %vm2180, %v5421, %v4120
  %v5484 = vsel %vm2180, %v5422, %v4122
  %v5485 = vsel %vm2180, %v5423, %v4124
  %v5486 = vsel %vm2180, %v5424, %v4126
  %v5487 = vsel %vm2180, %v5425, %v4128
  %v5488 = vsel %vm2180, %v5426, %v4130
  %v5489 = vsel %vm2180, %v5427, %v4132
  %v5490 = vsel %vm2180, %v5428, %v4134
  %v5491 = vsel %vm2180, %v5429, %v4136
  %v5492 = vsel %vm2180, %v5430, %v4138
  %v5493 = vsel %vm2180, %v5431, %v4140
  %v5494 = vsel %vm2180, %v5432, %v4142
  %v5495 = vsel %vm2180, %v5433, %v4144
  %v5496 = vsel %vm2180, %v5434, %v4146
  %v5497 = vsel %vm2180, %v5435, %v4148
  %v5498 = vsel %vm2180, %v5436, %v4150
  %v5499 = vsel %vm2180, %v5437, %v4152
  %v5500 = vsel %vm2180, %v5438, %v4154
  %v5501 = vsel %vm2180, %v5439, %v4156
  %v5502 = vsel %vm2180, %v5440, %v4158
  %v5503 = vsel %vm2310, %v5441, %v4224
  %v5504 = vsel %vm2310, %v5442, %v4226
  %v5505 = vsel %vm2310, %v5443, %v4228
  %v5506 = vsel %vm2310, %v5444, %v4230
  %v5507 = vsel %vm2310, %v5445, %v4232
  %v5508 = vsel %vm2310, %v5446, %v4234
  %v5509 = vsel %vm2310, %v5447, %v4236
  %v5510 = vsel %vm2310, %v5448, %v4238
  %v5511 = vsel %vm2310, %v5449, %v4240
  %v5512 = vsel %vm2310, %v5450, %v4242
  %v5513 = vsel %vm2310, %v5451, %v4244
  %v5514 = vsel %vm2310, %v5452, %v4246
  %v5515 = vsel %vm2310, %v5453, %v4248
  %v5516 = vsel %vm2310, %v5454, %v4250
  %v5517 = vsel %vm2310, %v5455, %v4252
  %v5518 = vsel %vm2310, %v5456, %v4254
  %v5519 = vsel %vm2310, %v5457, %v4256
  %v5520 = vsel %vm2310, %v5458, %v4258
  %v5521 = vsel %vm2310, %v5459, %v4260
  %v5522 = vsel %vm2310, %v5460, %v4262
  %v5523 = vsel %vm2310, %v5461, %v4264
  %v5524 = vsel %vm2310, %v5462, %v4266
  %v5525 = vsel %vm2310, %v5463, %v4268
  %v5526 = vsel %vm2310, %v5464, %v4270
  %v5527 = vsel %vm2310, %v5465, %v4272
  %v5528 = vsel %vm2310, %v5466, %v4274
  %v5529 = vsel %vm2310, %v5467, %v4276
  %v5530 = vsel %vm2310, %v5468, %v4278
  %v5531 = vsel %vm2310, %v5469, %v4280
  %v5532 = vsel %vm2310, %v5470, %v4282
  %v5533 = vsel %vm2310, %v5471, %v4284
  %v5534 = vsel %vm2310, %v5472, %v4286
  %v5535 = vsel %vm2310, %v5441, %v4288
  %v5536 = vsel %vm2310, %v5442, %v4290
  %v5537 = vsel %vm2310, %v5473, %v4292
  %v5538 = vsel %vm2310, %v5474, %v4294
  %v5539 = vsel %vm2310, %v5475, %v4296
  %v5540 = vsel %vm2310, %v5476, %v4298
  %v5541 = vsel %vm2310, %v5477, %v4300
  %v5542 = vsel %vm2310, %v5478, %v4302
  %v5543 = vsel %vm2310, %v5479, %v4304
  %v5544 = vsel %vm2310, %v5480, %v4306
  %v5545 = vsel %vm2310, %v5481, %v4308
  %v5546 = vsel %vm2310, %v5482, %v4310
  %v5547 = vsel %vm2310, %v5483, %v4312
  %v5548 = vsel %vm2310, %v5484, %v4314
  %v5549 = vsel %vm2310, %v5485, %v4316
  %v5550 = vsel %vm2310, %v5486, %v4318
  %v5551 = vsel %vm2310, %v5487, %v4320
  %v5552 = vsel %vm2310, %v5488, %v4322
  %v5553 = vsel %vm2310, %v5489, %v4324
  %v5554 = vsel %vm2310, %v5490, %v4326
  %v5555 = vsel %vm2310, %v5491, %v4328
  %v5556 = vsel %vm2310, %v5492, %v4330
  %v5557 = vsel %vm2310, %v5493, %v4332
  %v5558 = vsel %vm2310, %v5494, %v4334
  %v5559 = vsel %vm2310, %v5495, %v4336
  %v5560 = vsel %vm2310, %v5496, %v4338
  %v5561 = vsel %vm2310, %v5497, %v4340
  %v5562 = vsel %vm2310, %v5498, %v4342
  %v5563 = vsel %vm2310, %v5499, %v4344
  %v5564 = vsel %vm2310, %v5500, %v4346
  %v5565 = vsel %vm2310, %v5501, %v4348
  %v5566 = vsel %vm2310, %v5502, %v4350
  %v5567 = vsel %vm2440, %v5503, %v4428
  %v5568 = vsel %vm2440, %v5504, %v4430
  %v5569 = vsel %vm2440, %v5505, %v4432
  %v5570 = vsel %vm2440, %v5506, %v4434
  %v5571 = vsel %vm2440, %v5507, %v4436
  %v5572 = vsel %vm2440, %v5508, %v4438
  %v5573 = vsel %vm2440, %v5509, %v4440
  %v5574 = vsel %vm2440, %v5510, %v4442
  %v5575 = vsel %vm2440, %v5511, %v4444
  %v5576 = vsel %vm2440, %v5512, %v4446
  %v5577 = vsel %vm2440, %v5513, %v4448
  %v5578 = vsel %vm2440, %v5514, %v4450
  %v5579 = vsel %vm2440, %v5515, %v4452
  %v5580 = vsel %vm2440, %v5516, %v4454
  %v5581 = vsel %vm2440, %v5517, %v4456
  %v5582 = vsel %vm2440, %v5518, %v4458
  %v5583 = vsel %vm2440, %v5519, %v4460
  %v5584 = vsel %vm2440, %v5520, %v4462
  %v5585 = vsel %vm2440, %v5521, %v4464
  %v5586 = vsel %vm2440, %v5522, %v4466
  %v5587 = vsel %vm2440, %v5523, %v4468
  %v5588 = vsel %vm2440, %v5524, %v4470
  %v5589 = vsel %vm2440, %v5525, %v4472
  %v5590 = vsel %vm2440, %v5526, %v4474
  %v5591 = vsel %vm2440, %v5527, %v4476
  %v5592 = vsel %vm2440, %v5528, %v4478
  %v5593 = vsel %vm2440, %v5529, %v4480
  %v5594 = vsel %vm2440, %v5530, %v4482
  %v5595 = vsel %vm2440, %v5531, %v4484
  %v5596 = vsel %vm2440, %v5532, %v4486
  %v5597 = vsel %vm2440, %v5533, %v4488
  %v5598 = vsel %vm2440, %v5534, %v4490
  %v5599 = vsel %vm2440, %v5535, %v4492
  %v5600 = vsel %vm2440, %v5536, %v4494
  %v5601 = vsel %vm2440, %v5537, %v4496
  %v5602 = vsel %vm2440, %v5538, %v4498
  %v5603 = vsel %vm2440, %v5539, %v4500
  %v5604 = vsel %vm2440, %v5540, %v4502
  %v5605 = vsel %vm2440, %v5541, %v4504
  %v5606 = vsel %vm2440, %v5542, %v4506
  %v5607 = vsel %vm2440, %v5543, %v4508
  %v5608 = vsel %vm2440, %v5544, %v4510
  %v5609 = vsel %vm2440, %v5545, %v4512
  %v5610 = vsel %vm2440, %v5546, %v4514
  %v5611 = vsel %vm2440, %v5547, %v4516
  %v5612 = vsel %vm2440, %v5548, %v4518
  %v5613 = vsel %vm2440, %v5549, %v4520
  %v5614 = vsel %vm2440, %v5550, %v4522
  %v5615 = vsel %vm2440, %v5551, %v4524
  %v5616 = vsel %vm2440, %v5552, %v4526
  %v5617 = vsel %vm2440, %v5553, %v4528
  %v5618 = vsel %vm2440, %v5554, %v4530
  %v5619 = vsel %vm2440, %v5555, %v4532
  %v5620 = vsel %vm2440, %v5556, %v4534
  %v5621 = vsel %vm2440, %v5557, %v4536
  %v5622 = vsel %vm2440, %v5558, %v4538
  %v5623 = vsel %vm2440, %v5559, %v4540
  %v5624 = vsel %vm2440, %v5560, %v4542
  %v5625 = vsel %vm2440, %v5561, %v4544
  %v5626 = vsel %vm2440, %v5562, %v4546
  %v5627 = vsel %vm2440, %v5563, %v4548
  %v5628 = vsel %vm2440, %v5564, %v4550
  %v5629 = vsel %vm2440, %v5565, %v4552
  %v5630 = vsel %vm2440, %v5566, %v4554
  %vm5631 = vcmask 326656
  %v5632 = vsel %vm5631, %v5567, %v4630
  %v5633 = vsel %vm5631, %v5568, %v4632
  %v5634 = vsel %vm5631, %v5569, %v4634
  %v5635 = vsel %vm5631, %v5570, %v4636
  %v5636 = vsel %vm5631, %v5571, %v4638
  %v5637 = vsel %vm5631, %v5572, %v4640
  %v5638 = vsel %vm5631, %v5573, %v4642
  %v5639 = vsel %vm5631, %v5574, %v4644
  %v5640 = vsel %vm5631, %v5575, %v4646
  %v5641 = vsel %vm5631, %v5576, %v4648
  %v5642 = vsel %vm5631, %v5577, %v4650
  %v5643 = vsel %vm5631, %v5578, %v4652
  %v5644 = vsel %vm5631, %v5579, %v4654
  %v5645 = vsel %vm5631, %v5580, %v4656
  %v5646 = vsel %vm5631, %v5581, %v4658
  %v5647 = vsel %vm5631, %v5582, %v4660
  %v5648 = vsel %vm5631, %v5583, %v4662
  %v5649 = vsel %vm5631, %v5584, %v4664
  %v5650 = vsel %vm5631, %v5585, %v4666
  %v5651 = vsel %vm5631, %v5586, %v4668
  %v5652 = vsel %vm5631, %v5587, %v4670
  %v5653 = vsel %vm5631, %v5588, %v4672
  %v5654 = vsel %vm5631, %v5589, %v4674
  %v5655 = vsel %vm5631, %v5590, %v4676
  %v5656 = vsel %vm5631, %v5591, %v4678
  %v5657 = vsel %vm5631, %v5592, %v4680
  %v5658 = vsel %vm5631, %v5593, %v4682
  %v5659 = vsel %vm5631, %v5594, %v4684
  %v5660 = vsel %vm5631, %v5595, %v4686
  %v5661 = vsel %vm5631, %v5596, %v4688
  %v5662 = vsel %vm5631, %v5597, %v4690
  %v5663 = vsel %vm5631, %v5598, %v4692
  %v5664 = vsel %vm5631, %v5599, %v4694
  %v5665 = vsel %vm5631, %v5600, %v4696
  %v5666 = vsel %vm5631, %v5601, %v4698
  %v5667 = vsel %vm5631, %v5602, %v4700
  %v5668 = vsel %vm5631, %v5603, %v4702
  %v5669 = vsel %vm5631, %v5604, %v4704
  %v5670 = vsel %vm5631, %v5605, %v4706
  %v5671 = vsel %vm5631, %v5606, %v4708
  %v5672 = vsel %vm5631, %v5607, %v4710
  %v5673 = vsel %vm5631, %v5608, %v4712
  %v5674 = vsel %vm5631, %v5609, %v4714
  %v5675 = vsel %vm5631, %v5610, %v4716
  %v5676 = vsel %vm5631, %v5611, %v4718
  %v5677 = vsel %vm5631, %v5612, %v4720
  %v5678 = vsel %vm5631, %v5613, %v4722
  %v5679 = vsel %vm5631, %v5614, %v4724
  %v5680 = vsel %vm5631, %v5615, %v4726
  %v5681 = vsel %vm5631, %v5616, %v4728
  %v5682 = vsel %vm5631, %v5617, %v4730
  %v5683 = vsel %vm5631, %v5618, %v4732
  %v5684 = vsel %vm5631, %v5619, %v4734
  %v5685 = vsel %vm5631, %v5620, %v4736
  %v5686 = vsel %vm5631, %v5621, %v4738
  %v5687 = vsel %vm5631, %v5622, %v4740
  %v5688 = vsel %vm5631, %v5623, %v4742
  %v5689 = vsel %vm5631, %v5624, %v4744
  %v5690 = vsel %vm5631, %v5625, %v4746
  %v5691 = vsel %vm5631, %v5626, %v4748
  %v5692 = vsel %vm5631, %v5627, %v4750
  %v5693 = vsel %vm5631, %v5628, %v4752
  %v5694 = vsel %vm5631, %v5629, %v4754
  %v5695 = vsel %vm5631, %v5630, %v4756
  %vm5696 = vcmask 392192
  %v5697 = vsel %vm5696, %v5632, %v4822
  %v5698 = vsel %vm5696, %v5633, %v4824
  %v5699 = vsel %vm5696, %v5634, %v4826
  %v5700 = vsel %vm5696, %v5635, %v4828
  %v5701 = vsel %vm5696, %v5636, %v4830
  %v5702 = vsel %vm5696, %v5637, %v4832
  %v5703 = vsel %vm5696, %v5638, %v4834
  %v5704 = vsel %vm5696, %v5639, %v4836
  %v5705 = vsel %vm5696, %v5640, %v4838
  %v5706 = vsel %vm5696, %v5641, %v4840
  %v5707 = vsel %vm5696, %v5642, %v4842
  %v5708 = vsel %vm5696, %v5643, %v4844
  %v5709 = vsel %vm5696, %v5644, %v4846
  %v5710 = vsel %vm5696, %v5645, %v4848
  %v5711 = vsel %vm5696, %v5646, %v4850
  %v5712 = vsel %vm5696, %v5647, %v4852
  %v5713 = vsel %vm5696, %v5648, %v4854
  %v5714 = vsel %vm5696, %v5649, %v4856
  %v5715 = vsel %vm5696, %v5650, %v4858
  %v5716 = vsel %vm5696, %v5651, %v4860
  %v5717 = vsel %vm5696, %v5652, %v4862
  %v5718 = vsel %vm5696, %v5653, %v4864
  %v5719 = vsel %vm5696, %v5654, %v4866
  %v5720 = vsel %vm5696, %v5655, %v4868
  %v5721 = vsel %vm5696, %v5656, %v4870
  %v5722 = vsel %vm5696, %v5657, %v4872
  %v5723 = vsel %vm5696, %v5658, %v4874
  %v5724 = vsel %vm5696, %v5659, %v4876
  %v5725 = vsel %vm5696, %v5660, %v4878
  %v5726 = vsel %vm5696, %v5661, %v4880
  %v5727 = vsel %vm5696, %v5662, %v4882
  %v5728 = vsel %vm5696, %v5663, %v4884
  %v5729 = vsel %vm5696, %v5664, %v4886
  %v5730 = vsel %vm5696, %v5665, %v4888
  %v5731 = vsel %vm5696, %v5666, %v4890
  %v5732 = vsel %vm5696, %v5667, %v4892
  %v5733 = vsel %vm5696, %v5668, %v4894
  %v5734 = vsel %vm5696, %v5669, %v4896
  %v5735 = vsel %vm5696, %v5670, %v4898
  %v5736 = vsel %vm5696, %v5671, %v4900
  %v5737 = vsel %vm5696, %v5672, %v4902
  %v5738 = vsel %vm5696, %v5673, %v4904
  %v5739 = vsel %vm5696, %v5674, %v4906
  %v5740 = vsel %vm5696, %v5675, %v4908
  %v5741 = vsel %vm5696, %v5676, %v4910
  %v5742 = vsel %vm5696, %v5677, %v4912
  %v5743 = vsel %vm5696, %v5678, %v4914
  %v5744 = vsel %vm5696, %v5679, %v4916
  %v5745 = vsel %vm5696, %v5680, %v4918
  %v5746 = vsel %vm5696, %v5681, %v4920
  %v5747 = vsel %vm5696, %v5682, %v4922
  %v5748 = vsel %vm5696, %v5683, %v4924
  %v5749 = vsel %vm5696, %v5684, %v4926
  %v5750 = vsel %vm5696, %v5685, %v4928
  %v5751 = vsel %vm5696, %v5686, %v4930
  %v5752 = vsel %vm5696, %v5687, %v4932
  %v5753 = vsel %vm5696, %v5688, %v4934
  %v5754 = vsel %vm5696, %v5689, %v4936
  %v5755 = vsel %vm5696, %v5690, %v4938
  %v5756 = vsel %vm5696, %v5691, %v4940
  %v5757 = vsel %vm5696, %v5692, %v4942
  %v5758 = vsel %vm5696, %v5693, %v4944
  %v5759 = vsel %vm5696, %v5694, %v4882
  %v5760 = vsel %vm5696, %v5695, %v4884
  %vm5761 = vcmask 457728
  %v5762 = vsel %vm5761, %v5697, %v5008
  %v5763 = vsel %vm5761, %v5698, %v5010
  %v5764 = vsel %vm5761, %v5699, %v5012
  %v5765 = vsel %vm5761, %v5700, %v5014
  %v5766 = vsel %vm5761, %v5701, %v5016
  %v5767 = vsel %vm5761, %v5702, %v5018
  %v5768 = vsel %vm5761, %v5703, %v5020
  %v5769 = vsel %vm5761, %v5704, %v5022
  %v5770 = vsel %vm5761, %v5705, %v5024
  %v5771 = vsel %vm5761, %v5706, %v5026
  %v5772 = vsel %vm5761, %v5707, %v5028
  %v5773 = vsel %vm5761, %v5708, %v5030
  %v5774 = vsel %vm5761, %v5709, %v5032
  %v5775 = vsel %vm5761, %v5710, %v5034
  %v5776 = vsel %vm5761, %v5711, %v5036
  %v5777 = vsel %vm5761, %v5712, %v5038
  %v5778 = vsel %vm5761, %v5713, %v5040
  %v5779 = vsel %vm5761, %v5714, %v5042
  %v5780 = vsel %vm5761, %v5715, %v5044
  %v5781 = vsel %vm5761, %v5716, %v5046
  %v5782 = vsel %vm5761, %v5717, %v5048
  %v5783 = vsel %vm5761, %v5718, %v5050
  %v5784 = vsel %vm5761, %v5719, %v5052
  %v5785 = vsel %vm5761, %v5720, %v5054
  %v5786 = vsel %vm5761, %v5721, %v5056
  %v5787 = vsel %vm5761, %v5722, %v5058
  %v5788 = vsel %vm5761, %v5723, %v5060
  %v5789 = vsel %vm5761, %v5724, %v5062
  %v5790 = vsel %vm5761, %v5725, %v5064
  %v5791 = vsel %vm5761, %v5726, %v5066
  %v5792 = vsel %vm5761, %v5727, %v5068
  %v5793 = vsel %vm5761, %v5728, %v5070
  %v5794 = vsel %vm5761, %v5729, %v5072
  %v5795 = vsel %vm5761, %v5730, %v5074
  %v5796 = vsel %vm5761, %v5731, %v5076
  %v5797 = vsel %vm5761, %v5732, %v5078
  %v5798 = vsel %vm5761, %v5733, %v5080
  %v5799 = vsel %vm5761, %v5734, %v5082
  %v5800 = vsel %vm5761, %v5735, %v5084
  %v5801 = vsel %vm5761, %v5736, %v5086
  %v5802 = vsel %vm5761, %v5737, %v5088
  %v5803 = vsel %vm5761, %v5738, %v5090
  %v5804 = vsel %vm5761, %v5739, %v5092
  %v5805 = vsel %vm5761, %v5740, %v5094
  %v5806 = vsel %vm5761, %v5741, %v5096
  %v5807 = vsel %vm5761, %v5742, %v5098
  %v5808 = vsel %vm5761, %v5743, %v5100
  %v5809 = vsel %vm5761, %v5744, %v5102
  %v5810 = vsel %vm5761, %v5745, %v5104
  %v5811 = vsel %vm5761, %v5746, %v5106
  %v5812 = vsel %vm5761, %v5747, %v5108
  %v5813 = vsel %vm5761, %v5748, %v5110
  %v5814 = vsel %vm5761, %v5749, %v5112
  %v5815 = vsel %vm5761, %v5750, %v5114
  %v5816 = vsel %vm5761, %v5751, %v5116
  %v5817 = vsel %vm5761, %v5752, %v5118
  %v5818 = vsel %vm5761, %v5753, %v5120
  %v5819 = vsel %vm5761, %v5754, %v5122
  %v5820 = vsel %vm5761, %v5755, %v5124
  %v5821 = vsel %vm5761, %v5756, %v5126
  %v5822 = vsel %vm5761, %v5757, %v5128
  %v5823 = vsel %vm5761, %v5758, %v5130
  %v5824 = vsel %vm5761, %v5759, %v5068
  %v5825 = vsel %vm5761, %v5760, %v5070
  %vm5826 = vcmask 523264
  %v5827 = vsel %vm5826, %v5762, %v5194
  %v5828 = vsel %vm5826, %v5763, %v5196
  %v5829 = vsel %vm5826, %v5764, %v5198
  %v5830 = vsel %vm5826, %v5765, %v5200
  %v5831 = vsel %vm5826, %v5766, %v5202
  %v5832 = vsel %vm5826, %v5767, %v5204
  %v5833 = vsel %vm5826, %v5768, %v5206
  %v5834 = vsel %vm5826, %v5769, %v5208
  %v5835 = vsel %vm5826, %v5770, %v5210
  %v5836 = vsel %vm5826, %v5771, %v5212
  %v5837 = vsel %vm5826, %v5772, %v5214
  %v5838 = vsel %vm5826, %v5773, %v5216
  %v5839 = vsel %vm5826, %v5774, %v5218
  %v5840 = vsel %vm5826, %v5775, %v5220
  %v5841 = vsel %vm5826, %v5776, %v5222
  %v5842 = vsel %vm5826, %v5777, %v5224
  %v5843 = vsel %vm5826, %v5778, %v5226
  %v5844 = vsel %vm5826, %v5779, %v5228
  %v5845 = vsel %vm5826, %v5780, %v5230
  %v5846 = vsel %vm5826, %v5781, %v5232
  %v5847 = vsel %vm5826, %v5782, %v5234
  %v5848 = vsel %vm5826, %v5783, %v5236
  %v5849 = vsel %vm5826, %v5784, %v5238
  %v5850 = vsel %vm5826, %v5785, %v5240
  %v5851 = vsel %vm5826, %v5786, %v5242
  %v5852 = vsel %vm5826, %v5787, %v5244
  %v5853 = vsel %vm5826, %v5788, %v5246
  %v5854 = vsel %vm5826, %v5789, %v5248
  %v5855 = vsel %vm5826, %v5790, %v5250
  %v5856 = vsel %vm5826, %v5791, %v5252
  %v5857 = vsel %vm5826, %v5792, %v5254
  %v5858 = vsel %vm5826, %v5793, %v5256
  %v5859 = vsel %vm5826, %v5794, %v5258
  %v5860 = vsel %vm5826, %v5795, %v5260
  %v5861 = vsel %vm5826, %v5796, %v5262
  %v5862 = vsel %vm5826, %v5797, %v5264
  %v5863 = vsel %vm5826, %v5798, %v5266
  %v5864 = vsel %vm5826, %v5799, %v5268
  %v5865 = vsel %vm5826, %v5800, %v5270
  %v5866 = vsel %vm5826, %v5801, %v5272
  %v5867 = vsel %vm5826, %v5802, %v5274
  %v5868 = vsel %vm5826, %v5803, %v5276
  %v5869 = vsel %vm5826, %v5804, %v5278
  %v5870 = vsel %vm5826, %v5805, %v5280
  %v5871 = vsel %vm5826, %v5806, %v5282
  %v5872 = vsel %vm5826, %v5807, %v5284
  %v5873 = vsel %vm5826, %v5808, %v5286
  %v5874 = vsel %vm5826, %v5809, %v5288
  %v5875 = vsel %vm5826, %v5810, %v5290
  %v5876 = vsel %vm5826, %v5811, %v5292
  %v5877 = vsel %vm5826, %v5812, %v5294
  %v5878 = vsel %vm5826, %v5813, %v5296
  %v5879 = vsel %vm5826, %v5814, %v5298
  %v5880 = vsel %vm5826, %v5815, %v5300
  %v5881 = vsel %vm5826, %v5816, %v5302
  %v5882 = vsel %vm5826, %v5817, %v5304
  %v5883 = vsel %vm5826, %v5818, %v5306
  %v5884 = vsel %vm5826, %v5819, %v5308
  %v5885 = vsel %vm5826, %v5820, %v5310
  %v5886 = vsel %vm5826, %v5821, %v5312
  %v5887 = vsel %vm5826, %v5822, %v5314
  %v5888 = vsel %vm5826, %v5823, %v5316
  %v5889 = vsel %vm5826, %v5824, %v5254
  %v5890 = vsel %vm5826, %v5825, %v5256
  %v5891 = vpack.c.bf16 %v5828, %v5827
  %v5892 = vpack.c.bf16 %v5830, %v5829
  %v5893 = vpack.c.bf16 %v5832, %v5831
  %v5894 = vpack.c.bf16 %v5834, %v5833
  %v5895 = vpack.c.bf16 %v5836, %v5835
  %v5896 = vpack.c.bf16 %v5838, %v5837
  %v5897 = vpack.c.bf16 %v5840, %v5839
  %v5898 = vpack.c.bf16 %v5842, %v5841
  %v5899 = vpack.c.bf16 %v5844, %v5843
  %v5900 = vpack.c.bf16 %v5846, %v5845
  %v5901 = vpack.c.bf16 %v5848, %v5847
  %v5902 = vpack.c.bf16 %v5850, %v5849
  %v5903 = vpack.c.bf16 %v5852, %v5851
  %v5904 = vpack.c.bf16 %v5854, %v5853
  %v5905 = vpack.c.bf16 %v5856, %v5855
  %v5906 = vpack.c.bf16 %v5858, %v5857
  %v5907 = vpack.c.bf16 %v5860, %v5859
  %v5908 = vpack.c.bf16 %v5862, %v5861
  %v5909 = vpack.c.bf16 %v5864, %v5863
  %v5910 = vpack.c.bf16 %v5866, %v5865
  %v5911 = vpack.c.bf16 %v5868, %v5867
  %v5912 = vpack.c.bf16 %v5870, %v5869
  %v5913 = vpack.c.bf16 %v5872, %v5871
  %v5914 = vpack.c.bf16 %v5874, %v5873
  %v5915 = vpack.c.bf16 %v5876, %v5875
  %v5916 = vpack.c.bf16 %v5878, %v5877
  %v5917 = vpack.c.bf16 %v5880, %v5879
  %v5918 = vpack.c.bf16 %v5882, %v5881
  %v5919 = vpack.c.bf16 %v5884, %v5883
  %v5920 = vpack.c.bf16 %v5886, %v5885
  %v5921 = vpack.c.bf16 %v5888, %v5887
  %v5922 = vpack.c.bf16 %v5890, %v5889
  %v5923 = vld [vmem:[%s3] sm:$0xf]
  %v5924 = vld [vmem:[%s3 + $0x4] sm:$0xf]
  %v5925 = vld [vmem:[%s3 + $0x8] sm:$0xf]
  %v5926 = vld [vmem:[%s3 + $0xc] sm:$0xf]
  %v5927 = vld [vmem:[%s3 + $0x10] sm:$0xf]
  %v5928 = vld [vmem:[%s3 + $0x14] sm:$0xf]
  %v5929 = vld [vmem:[%s3 + $0x18] sm:$0xf]
  %v5930 = vld [vmem:[%s3 + $0x1c] sm:$0xf]
  %v5931 = vld [vmem:[%s3 + $0x20] sm:$0xf]
  %v5941 = vunpack.c.l.b16 %v5923
  %v5942 = vunpack.c.l.b16 %v5924
  %v5943 = vunpack.c.l.b16 %v5925
  %v5944 = vunpack.c.l.b16 %v5926
  %v5945 = vunpack.c.l.b16 %v5927
  %v5946 = vunpack.c.l.b16 %v5928
  %v5947 = vunpack.c.l.b16 %v5929
  %v5948 = vunpack.c.l.b16 %v5930
  %v5949 = vunpack.c.l.b16 %v5931
  %v5950 = vpack.c.b16 %v5942, %v5941
  %v5951 = vpack.c.b16 %v5944, %v5943
  %v5952 = vpack.c.b16 %v5946, %v5945
  %v5953 = vpack.c.b16 %v5948, %v5947
  %v5954 = vpack.c.b16 %v5949, %v5949
  %vm5959 = vcmask 588800
  %v5961 = vsel %vm5959, %v5891, 0
  %v5964 = vsel %vm5959, %v5892, 0
  %v5967 = vsel %vm5959, %v5893, 0
  %v5970 = vsel %vm5959, %v5894, 0
  %v5973 = vsel %vm5959, %v5895, 0
  %v5976 = vsel %vm5959, %v5896, 0
  %v5979 = vsel %vm5959, %v5897, 0
  %v5982 = vsel %vm5959, %v5898, 0
  %v5985 = vsel %vm5959, %v5899, 0
  %v5988 = vsel %vm5959, %v5900, 0
  %v5991 = vsel %vm5959, %v5901, 0
  %v5994 = vsel %vm5959, %v5902, 0
  %v5997 = vsel %vm5959, %v5903, 0
  %v6000 = vsel %vm5959, %v5904, 0
  %v6003 = vsel %vm5959, %v5905, 0
  %v6006 = vsel %vm5959, %v5906, 0
  %v6009 = vsel %vm5959, %v5907, 0
  %v6012 = vsel %vm5959, %v5908, 0
  %v6015 = vsel %vm5959, %v5909, 0
  %v6018 = vsel %vm5959, %v5910, 0
  %v6021 = vsel %vm5959, %v5911, 0
  %v6024 = vsel %vm5959, %v5912, 0
  %v6027 = vsel %vm5959, %v5913, 0
  %v6030 = vsel %vm5959, %v5914, 0
  %v6033 = vsel %vm5959, %v5915, 0
  %v6036 = vsel %vm5959, %v5916, 0
  %v6039 = vsel %vm5959, %v5917, 0
  %v6042 = vsel %vm5959, %v5918, 0
  %v6045 = vsel %vm5959, %v5919, 0
  %v6048 = vsel %vm5959, %v5920, 0
  %v6051 = vsel %vm5959, %v5921, 0
  %v6054 = vsel %vm5959, %v5922, 0
  %vm6056 = vcmask 1043456
  %v6058 = vsel %vm6056, %v5954, 0
  %6060 = vmatprep.subr.bf16.mxu0 0
  %6061 = vmatpush1.bf16.msra.mxu0 %v5950
  %6062 = vmatprep.subr.bf16.mxu0 0
  %6063 = vmatpush1.bf16.msra.mxu0 %v5951
  %6064 = vmatprep.subr.bf16.mxu0 0
  %6065 = vmatpush1.bf16.msra.mxu0 %v5952
  %6066 = vmatprep.subr.bf16.mxu0 0
  %6067 = vmatpush1.bf16.msra.mxu0 %v5953
  %6068 = vmatprep.subr.bf16.mxu0 0
  %6069 = vmatpush1.bf16.msra.mxu0 %v6058
  %6070 = vmatprep.subr.bf16.mxu0 0
  %6071 = vmatpush1.bf16.msra.mxu0 0
  %6072 = vmatprep.subr.bf16.mxu0 0
  %6073 = vmatpush1.bf16.msra.mxu0 0
  %6074 = vmatprep.subr.bf16.mxu0 0
  %6075 = vmatpush1.bf16.msra.mxu0 0
  %6076 = vmatprep.subr.bf16.mxu0 0
  %6077 = vmatpush1.bf16.msra.mxu0 0
  %6078 = vmatprep.subr.bf16.mxu0 0
  %6079 = vmatpush1.bf16.msra.mxu0 0
  %6080 = vmatprep.subr.bf16.mxu0 0
  %6081 = vmatpush1.bf16.msra.mxu0 0
  %6082 = vmatprep.subr.bf16.mxu0 0
  %6083 = vmatpush1.bf16.msra.mxu0 0
  %6084 = vmatprep.subr.bf16.mxu0 0
  %6085 = vmatpush1.bf16.msra.mxu0 0
  %6086 = vmatprep.subr.bf16.mxu0 0
  %6087 = vmatpush1.bf16.msra.mxu0 0
  %6088 = vmatprep.subr.bf16.mxu0 0
  %6089 = vmatpush1.bf16.msra.mxu0 0
  %6090 = vmatprep.subr.bf16.mxu0 0
  %6091 = vmatpush1.bf16.msra.mxu0 0
  %6092 = vmatprep.mubr.bf16.mxu0 0
  %6093 = vmatmul.mubr.bf16.gmra.mrb[0].mxu0 %v5961
  %v6094 = vpop.f32.mrb[0].mxu0
  %v6095 = vadd.f32 0.0, %v6094
  %v6096 = vpop.f32.mrb[0].mxu0
  %v6097 = vpop.f32.mrb[0].mxu0
  %v6098 = vadd.f32 0.0, %v6097
  %v6099 = vpop.f32.mrb[0].mxu0
  %6100 = vmatprep.mubr.bf16.mxu0 0
  %6101 = vmatmul.mubr.bf16.gmra.mrb[0].mxu0 %v5964
  %v6102 = vpop.f32.mrb[0].mxu0
  %v6103 = vadd.f32 0.0, %v6102
  %v6104 = vpop.f32.mrb[0].mxu0
  %v6105 = vpop.f32.mrb[0].mxu0
  %v6106 = vadd.f32 0.0, %v6105
  %v6107 = vpop.f32.mrb[0].mxu0
  %6108 = vmatprep.mubr.bf16.mxu0 0
  %6109 = vmatmul.mubr.bf16.gmra.mrb[0].mxu0 %v5967
  %v6110 = vpop.f32.mrb[0].mxu0
  %v6111 = vadd.f32 0.0, %v6110
  %v6112 = vpop.f32.mrb[0].mxu0
  %v6113 = vpop.f32.mrb[0].mxu0
  %v6114 = vadd.f32 0.0, %v6113
  %v6115 = vpop.f32.mrb[0].mxu0
  %6116 = vmatprep.mubr.bf16.mxu0 0
  %6117 = vmatmul.mubr.bf16.gmra.mrb[0].mxu0 %v5970
  %v6118 = vpop.f32.mrb[0].mxu0
  %v6119 = vadd.f32 0.0, %v6118
  %v6120 = vpop.f32.mrb[0].mxu0
  %v6121 = vpop.f32.mrb[0].mxu0
  %v6122 = vadd.f32 0.0, %v6121
  %v6123 = vpop.f32.mrb[0].mxu0
  %6124 = vmatprep.mubr.bf16.mxu0 0
  %6125 = vmatmul.mubr.bf16.gmra.mrb[0].mxu0 %v5973
  %v6126 = vpop.f32.mrb[0].mxu0
  %v6127 = vadd.f32 0.0, %v6126
  %v6128 = vpop.f32.mrb[0].mxu0
  %v6129 = vpop.f32.mrb[0].mxu0
  %v6130 = vadd.f32 0.0, %v6129
  %v6131 = vpop.f32.mrb[0].mxu0
  %6132 = vmatprep.mubr.bf16.mxu0 0
  %6133 = vmatmul.mubr.bf16.gmra.mrb[0].mxu0 %v5976
  %v6134 = vpop.f32.mrb[0].mxu0
  %v6135 = vadd.f32 0.0, %v6134
  %v6136 = vpop.f32.mrb[0].mxu0
  %v6137 = vpop.f32.mrb[0].mxu0
  %v6138 = vadd.f32 0.0, %v6137
  %v6139 = vpop.f32.mrb[0].mxu0
  %6140 = vmatprep.mubr.bf16.mxu0 0
  %6141 = vmatmul.mubr.bf16.gmra.mrb[0].mxu0 %v5979
  %v6142 = vpop.f32.mrb[0].mxu0
  %v6143 = vadd.f32 0.0, %v6142
  %v6144 = vpop.f32.mrb[0].mxu0
  %v6145 = vpop.f32.mrb[0].mxu0
  %v6146 = vadd.f32 0.0, %v6145
  %v6147 = vpop.f32.mrb[0].mxu0
  %6148 = vmatprep.mubr.bf16.mxu0 0
  %6149 = vmatmul.mubr.bf16.gmra.mrb[0].mxu0 %v5982
  %v6150 = vpop.f32.mrb[0].mxu0
  %v6151 = vadd.f32 0.0, %v6150
  %v6152 = vpop.f32.mrb[0].mxu0
  %v6153 = vpop.f32.mrb[0].mxu0
  %v6154 = vadd.f32 0.0, %v6153
  %v6155 = vpop.f32.mrb[0].mxu0
  %6156 = vmatprep.mubr.bf16.mxu0 0
  %6157 = vmatmul.mubr.bf16.gmra.mrb[0].mxu0 %v5985
  %v6158 = vpop.f32.mrb[0].mxu0
  %v6159 = vadd.f32 0.0, %v6158
  %v6160 = vpop.f32.mrb[0].mxu0
  %v6161 = vpop.f32.mrb[0].mxu0
  %v6162 = vadd.f32 0.0, %v6161
  %v6163 = vpop.f32.mrb[0].mxu0
  %6164 = vmatprep.mubr.bf16.mxu0 0
  %6165 = vmatmul.mubr.bf16.gmra.mrb[0].mxu0 %v5988
  %v6166 = vpop.f32.mrb[0].mxu0
  %v6167 = vadd.f32 0.0, %v6166
  %v6168 = vpop.f32.mrb[0].mxu0
  %v6169 = vpop.f32.mrb[0].mxu0
  %v6170 = vadd.f32 0.0, %v6169
  %v6171 = vpop.f32.mrb[0].mxu0
  %6172 = vmatprep.mubr.bf16.mxu0 0
  %6173 = vmatmul.mubr.bf16.gmra.mrb[0].mxu0 %v5991
  %v6174 = vpop.f32.mrb[0].mxu0
  %v6175 = vadd.f32 0.0, %v6174
  %v6176 = vpop.f32.mrb[0].mxu0
  %v6177 = vpop.f32.mrb[0].mxu0
  %v6178 = vadd.f32 0.0, %v6177
  %v6179 = vpop.f32.mrb[0].mxu0
  %6180 = vmatprep.mubr.bf16.mxu0 0
  %6181 = vmatmul.mubr.bf16.gmra.mrb[0].mxu0 %v5994
  %v6182 = vpop.f32.mrb[0].mxu0
  %v6183 = vadd.f32 0.0, %v6182
  %v6184 = vpop.f32.mrb[0].mxu0
  %v6185 = vpop.f32.mrb[0].mxu0
  %v6186 = vadd.f32 0.0, %v6185
  %v6187 = vpop.f32.mrb[0].mxu0
  %6188 = vmatprep.mubr.bf16.mxu0 0
  %6189 = vmatmul.mubr.bf16.gmra.mrb[0].mxu0 %v5997
  %v6190 = vpop.f32.mrb[0].mxu0
  %v6191 = vadd.f32 0.0, %v6190
  %v6192 = vpop.f32.mrb[0].mxu0
  %v6193 = vpop.f32.mrb[0].mxu0
  %v6194 = vadd.f32 0.0, %v6193
  %v6195 = vpop.f32.mrb[0].mxu0
  %6196 = vmatprep.mubr.bf16.mxu0 0
  %6197 = vmatmul.mubr.bf16.gmra.mrb[0].mxu0 %v6000
  %v6198 = vpop.f32.mrb[0].mxu0
  %v6199 = vadd.f32 0.0, %v6198
  %v6200 = vpop.f32.mrb[0].mxu0
  %v6201 = vpop.f32.mrb[0].mxu0
  %v6202 = vadd.f32 0.0, %v6201
  %v6203 = vpop.f32.mrb[0].mxu0
  %6204 = vmatprep.mubr.bf16.mxu0 0
  %6205 = vmatmul.mubr.bf16.gmra.mrb[0].mxu0 %v6003
  %v6206 = vpop.f32.mrb[0].mxu0
  %v6207 = vadd.f32 0.0, %v6206
  %v6208 = vpop.f32.mrb[0].mxu0
  %v6209 = vpop.f32.mrb[0].mxu0
  %v6210 = vadd.f32 0.0, %v6209
  %v6211 = vpop.f32.mrb[0].mxu0
  %6212 = vmatprep.mubr.bf16.mxu0 0
  %6213 = vmatmul.mubr.bf16.gmra.mrb[0].mxu0 %v6006
  %v6214 = vpop.f32.mrb[0].mxu0
  %v6215 = vadd.f32 0.0, %v6214
  %v6216 = vpop.f32.mrb[0].mxu0
  %v6217 = vpop.f32.mrb[0].mxu0
  %v6218 = vadd.f32 0.0, %v6217
  %v6219 = vpop.f32.mrb[0].mxu0
  %6220 = vmatprep.mubr.bf16.mxu0 0
  %6221 = vmatmul.mubr.bf16.gmra.mrb[0].mxu0 %v6009
  %v6222 = vpop.f32.mrb[0].mxu0
  %v6223 = vadd.f32 0.0, %v6222
  %v6224 = vpop.f32.mrb[0].mxu0
  %v6225 = vpop.f32.mrb[0].mxu0
  %v6226 = vadd.f32 0.0, %v6225
  %v6227 = vpop.f32.mrb[0].mxu0
  %6228 = vmatprep.mubr.bf16.mxu0 0
  %6229 = vmatmul.mubr.bf16.gmra.mrb[0].mxu0 %v6012
  %v6230 = vpop.f32.mrb[0].mxu0
  %v6231 = vadd.f32 0.0, %v6230
  %v6232 = vpop.f32.mrb[0].mxu0
  %v6233 = vpop.f32.mrb[0].mxu0
  %v6234 = vadd.f32 0.0, %v6233
  %v6235 = vpop.f32.mrb[0].mxu0
  %6236 = vmatprep.mubr.bf16.mxu0 0
  %6237 = vmatmul.mubr.bf16.gmra.mrb[0].mxu0 %v6015
  %v6238 = vpop.f32.mrb[0].mxu0
  %v6239 = vadd.f32 0.0, %v6238
  %v6240 = vpop.f32.mrb[0].mxu0
  %v6241 = vpop.f32.mrb[0].mxu0
  %v6242 = vadd.f32 0.0, %v6241
  %v6243 = vpop.f32.mrb[0].mxu0
  %6244 = vmatprep.mubr.bf16.mxu0 0
  %6245 = vmatmul.mubr.bf16.gmra.mrb[0].mxu0 %v6018
  %v6246 = vpop.f32.mrb[0].mxu0
  %v6247 = vadd.f32 0.0, %v6246
  %v6248 = vpop.f32.mrb[0].mxu0
  %v6249 = vpop.f32.mrb[0].mxu0
  %v6250 = vadd.f32 0.0, %v6249
  %v6251 = vpop.f32.mrb[0].mxu0
  %6252 = vmatprep.mubr.bf16.mxu0 0
  %6253 = vmatmul.mubr.bf16.gmra.mrb[0].mxu0 %v6021
  %v6254 = vpop.f32.mrb[0].mxu0
  %v6255 = vadd.f32 0.0, %v6254
  %v6256 = vpop.f32.mrb[0].mxu0
  %v6257 = vpop.f32.mrb[0].mxu0
  %v6258 = vadd.f32 0.0, %v6257
  %v6259 = vpop.f32.mrb[0].mxu0
  %6260 = vmatprep.mubr.bf16.mxu0 0
  %6261 = vmatmul.mubr.bf16.gmra.mrb[0].mxu0 %v6024
  %v6262 = vpop.f32.mrb[0].mxu0
  %v6263 = vadd.f32 0.0, %v6262
  %v6264 = vpop.f32.mrb[0].mxu0
  %v6265 = vpop.f32.mrb[0].mxu0
  %v6266 = vadd.f32 0.0, %v6265
  %v6267 = vpop.f32.mrb[0].mxu0
  %6268 = vmatprep.mubr.bf16.mxu0 0
  %6269 = vmatmul.mubr.bf16.gmra.mrb[0].mxu0 %v6027
  %v6270 = vpop.f32.mrb[0].mxu0
  %v6271 = vadd.f32 0.0, %v6270
  %v6272 = vpop.f32.mrb[0].mxu0
  %v6273 = vpop.f32.mrb[0].mxu0
  %v6274 = vadd.f32 0.0, %v6273
  %v6275 = vpop.f32.mrb[0].mxu0
  %6276 = vmatprep.mubr.bf16.mxu0 0
  %6277 = vmatmul.mubr.bf16.gmra.mrb[0].mxu0 %v6030
  %v6278 = vpop.f32.mrb[0].mxu0
  %v6279 = vadd.f32 0.0, %v6278
  %v6280 = vpop.f32.mrb[0].mxu0
  %v6281 = vpop.f32.mrb[0].mxu0
  %v6282 = vadd.f32 0.0, %v6281
  %v6283 = vpop.f32.mrb[0].mxu0
  %6284 = vmatprep.mubr.bf16.mxu0 0
  %6285 = vmatmul.mubr.bf16.gmra.mrb[0].mxu0 %v6033
  %v6286 = vpop.f32.mrb[0].mxu0
  %v6287 = vadd.f32 0.0, %v6286
  %v6288 = vpop.f32.mrb[0].mxu0
  %v6289 = vpop.f32.mrb[0].mxu0
  %v6290 = vadd.f32 0.0, %v6289
  %v6291 = vpop.f32.mrb[0].mxu0
  %6292 = vmatprep.mubr.bf16.mxu0 0
  %6293 = vmatmul.mubr.bf16.gmra.mrb[0].mxu0 %v6036
  %v6294 = vpop.f32.mrb[0].mxu0
  %v6295 = vadd.f32 0.0, %v6294
  %v6296 = vpop.f32.mrb[0].mxu0
  %v6297 = vpop.f32.mrb[0].mxu0
  %v6298 = vadd.f32 0.0, %v6297
  %v6299 = vpop.f32.mrb[0].mxu0
  %6300 = vmatprep.mubr.bf16.mxu0 0
  %6301 = vmatmul.mubr.bf16.gmra.mrb[0].mxu0 %v6039
  %v6302 = vpop.f32.mrb[0].mxu0
  %v6303 = vadd.f32 0.0, %v6302
  %v6304 = vpop.f32.mrb[0].mxu0
  %v6305 = vpop.f32.mrb[0].mxu0
  %v6306 = vadd.f32 0.0, %v6305
  %v6307 = vpop.f32.mrb[0].mxu0
  %6308 = vmatprep.mubr.bf16.mxu0 0
  %6309 = vmatmul.mubr.bf16.gmra.mrb[0].mxu0 %v6042
  %v6310 = vpop.f32.mrb[0].mxu0
  %v6311 = vadd.f32 0.0, %v6310
  %v6312 = vpop.f32.mrb[0].mxu0
  %v6313 = vpop.f32.mrb[0].mxu0
  %v6314 = vadd.f32 0.0, %v6313
  %v6315 = vpop.f32.mrb[0].mxu0
  %6316 = vmatprep.mubr.bf16.mxu0 0
  %6317 = vmatmul.mubr.bf16.gmra.mrb[0].mxu0 %v6045
  %v6318 = vpop.f32.mrb[0].mxu0
  %v6319 = vadd.f32 0.0, %v6318
  %v6320 = vpop.f32.mrb[0].mxu0
  %v6321 = vpop.f32.mrb[0].mxu0
  %v6322 = vadd.f32 0.0, %v6321
  %v6323 = vpop.f32.mrb[0].mxu0
  %6324 = vmatprep.mubr.bf16.mxu0 0
  %6325 = vmatmul.mubr.bf16.gmra.mrb[0].mxu0 %v6048
  %v6326 = vpop.f32.mrb[0].mxu0
  %v6327 = vadd.f32 0.0, %v6326
  %v6328 = vpop.f32.mrb[0].mxu0
  %v6329 = vpop.f32.mrb[0].mxu0
  %v6330 = vadd.f32 0.0, %v6329
  %v6331 = vpop.f32.mrb[0].mxu0
  %6332 = vmatprep.mubr.bf16.mxu0 0
  %6333 = vmatmul.mubr.bf16.gmra.mrb[0].mxu0 %v6051
  %v6334 = vpop.f32.mrb[0].mxu0
  %v6335 = vadd.f32 0.0, %v6334
  %v6336 = vpop.f32.mrb[0].mxu0
  %v6337 = vpop.f32.mrb[0].mxu0
  %v6338 = vadd.f32 0.0, %v6337
  %v6339 = vpop.f32.mrb[0].mxu0
  %6340 = vmatprep.mubr.bf16.mxu0 0
  %6341 = vmatmul.mubr.bf16.gmra.mrb[0].mxu0 %v6054
  %v6342 = vpop.f32.mrb[0].mxu0
  %v6343 = vadd.f32 0.0, %v6342
  %v6344 = vpop.f32.mrb[0].mxu0
  %v6345 = vpop.f32.mrb[0].mxu0
  %v6346 = vadd.f32 0.0, %v6345
  %v6347 = vpop.f32.mrb[0].mxu0
  %6348 = vdwg.mxu0
  %v6349 = vld [vmem:[%s4] sm:$0x1]
  %v6350 = vlaneseq
  %v6351 = vshrl.u32 %v6350, 7
  %v6352 = vsub.s32 0, %v6351
  %v6353 = vrot.slane %v6349, %v6352
  %v6354 = vmul.f32 %v6095, %v6353
  %v6355 = vmul.f32 %v6098, %v6353
  %v6356 = vmul.f32 %v6103, %v6353
  %v6357 = vmul.f32 %v6106, %v6353
  %v6358 = vmul.f32 %v6111, %v6353
  %v6359 = vmul.f32 %v6114, %v6353
  %v6360 = vmul.f32 %v6119, %v6353
  %v6361 = vmul.f32 %v6122, %v6353
  %v6362 = vmul.f32 %v6127, %v6353
  %v6363 = vmul.f32 %v6130, %v6353
  %v6364 = vmul.f32 %v6135, %v6353
  %v6365 = vmul.f32 %v6138, %v6353
  %v6366 = vmul.f32 %v6143, %v6353
  %v6367 = vmul.f32 %v6146, %v6353
  %v6368 = vmul.f32 %v6151, %v6353
  %v6369 = vmul.f32 %v6154, %v6353
  %v6370 = vmul.f32 %v6159, %v6353
  %v6371 = vmul.f32 %v6162, %v6353
  %v6372 = vmul.f32 %v6167, %v6353
  %v6373 = vmul.f32 %v6170, %v6353
  %v6374 = vmul.f32 %v6175, %v6353
  %v6375 = vmul.f32 %v6178, %v6353
  %v6376 = vmul.f32 %v6183, %v6353
  %v6377 = vmul.f32 %v6186, %v6353
  %v6378 = vmul.f32 %v6191, %v6353
  %v6379 = vmul.f32 %v6194, %v6353
  %v6380 = vmul.f32 %v6199, %v6353
  %v6381 = vmul.f32 %v6202, %v6353
  %v6382 = vmul.f32 %v6207, %v6353
  %v6383 = vmul.f32 %v6210, %v6353
  %v6384 = vmul.f32 %v6215, %v6353
  %v6385 = vmul.f32 %v6218, %v6353
  %v6386 = vmul.f32 %v6223, %v6353
  %v6387 = vmul.f32 %v6226, %v6353
  %v6388 = vmul.f32 %v6231, %v6353
  %v6389 = vmul.f32 %v6234, %v6353
  %v6390 = vmul.f32 %v6239, %v6353
  %v6391 = vmul.f32 %v6242, %v6353
  %v6392 = vmul.f32 %v6247, %v6353
  %v6393 = vmul.f32 %v6250, %v6353
  %v6394 = vmul.f32 %v6255, %v6353
  %v6395 = vmul.f32 %v6258, %v6353
  %v6396 = vmul.f32 %v6263, %v6353
  %v6397 = vmul.f32 %v6266, %v6353
  %v6398 = vmul.f32 %v6271, %v6353
  %v6399 = vmul.f32 %v6274, %v6353
  %v6400 = vmul.f32 %v6279, %v6353
  %v6401 = vmul.f32 %v6282, %v6353
  %v6402 = vmul.f32 %v6287, %v6353
  %v6403 = vmul.f32 %v6290, %v6353
  %v6404 = vmul.f32 %v6295, %v6353
  %v6405 = vmul.f32 %v6298, %v6353
  %v6406 = vmul.f32 %v6303, %v6353
  %v6407 = vmul.f32 %v6306, %v6353
  %v6408 = vmul.f32 %v6311, %v6353
  %v6409 = vmul.f32 %v6314, %v6353
  %v6410 = vmul.f32 %v6319, %v6353
  %v6411 = vmul.f32 %v6322, %v6353
  %v6412 = vmul.f32 %v6327, %v6353
  %v6413 = vmul.f32 %v6330, %v6353
  %v6414 = vmul.f32 %v6335, %v6353
  %v6415 = vmul.f32 %v6338, %v6353
  %v6416 = vmul.f32 %v6343, %v6353
  %v6417 = vmul.f32 %v6346, %v6353
  %v6418 = vld [vmem:[%s4 + $0x1] sm:$0x1]
  %v6419 = vlaneseq
  %v6420 = vshrl.u32 %v6419, 7
  %v6421 = vsub.s32 0, %v6420
  %v6422 = vrot.slane %v6418, %v6421
  %v6423 = vadd.f32 %v6354, %v6422
  %v6424 = vadd.f32 %v6355, %v6422
  %v6425 = vadd.f32 %v6356, %v6422
  %v6426 = vadd.f32 %v6357, %v6422
  %v6427 = vadd.f32 %v6358, %v6422
  %v6428 = vadd.f32 %v6359, %v6422
  %v6429 = vadd.f32 %v6360, %v6422
  %v6430 = vadd.f32 %v6361, %v6422
  %v6431 = vadd.f32 %v6362, %v6422
  %v6432 = vadd.f32 %v6363, %v6422
  %v6433 = vadd.f32 %v6364, %v6422
  %v6434 = vadd.f32 %v6365, %v6422
  %v6435 = vadd.f32 %v6366, %v6422
  %v6436 = vadd.f32 %v6367, %v6422
  %v6437 = vadd.f32 %v6368, %v6422
  %v6438 = vadd.f32 %v6369, %v6422
  %v6439 = vadd.f32 %v6370, %v6422
  %v6440 = vadd.f32 %v6371, %v6422
  %v6441 = vadd.f32 %v6372, %v6422
  %v6442 = vadd.f32 %v6373, %v6422
  %v6443 = vadd.f32 %v6374, %v6422
  %v6444 = vadd.f32 %v6375, %v6422
  %v6445 = vadd.f32 %v6376, %v6422
  %v6446 = vadd.f32 %v6377, %v6422
  %v6447 = vadd.f32 %v6378, %v6422
  %v6448 = vadd.f32 %v6379, %v6422
  %v6449 = vadd.f32 %v6380, %v6422
  %v6450 = vadd.f32 %v6381, %v6422
  %v6451 = vadd.f32 %v6382, %v6422
  %v6452 = vadd.f32 %v6383, %v6422
  %v6453 = vadd.f32 %v6384, %v6422
  %v6454 = vadd.f32 %v6385, %v6422
  %v6455 = vadd.f32 %v6386, %v6422
  %v6456 = vadd.f32 %v6387, %v6422
  %v6457 = vadd.f32 %v6388, %v6422
  %v6458 = vadd.f32 %v6389, %v6422
  %v6459 = vadd.f32 %v6390, %v6422
  %v6460 = vadd.f32 %v6391, %v6422
  %v6461 = vadd.f32 %v6392, %v6422
  %v6462 = vadd.f32 %v6393, %v6422
  %v6463 = vadd.f32 %v6394, %v6422
  %v6464 = vadd.f32 %v6395, %v6422
  %v6465 = vadd.f32 %v6396, %v6422
  %v6466 = vadd.f32 %v6397, %v6422
  %v6467 = vadd.f32 %v6398, %v6422
  %v6468 = vadd.f32 %v6399, %v6422
  %v6469 = vadd.f32 %v6400, %v6422
  %v6470 = vadd.f32 %v6401, %v6422
  %v6471 = vadd.f32 %v6402, %v6422
  %v6472 = vadd.f32 %v6403, %v6422
  %v6473 = vadd.f32 %v6404, %v6422
  %v6474 = vadd.f32 %v6405, %v6422
  %v6475 = vadd.f32 %v6406, %v6422
  %v6476 = vadd.f32 %v6407, %v6422
  %v6477 = vadd.f32 %v6408, %v6422
  %v6478 = vadd.f32 %v6409, %v6422
  %v6479 = vadd.f32 %v6410, %v6422
  %v6480 = vadd.f32 %v6411, %v6422
  %v6481 = vadd.f32 %v6412, %v6422
  %v6482 = vadd.f32 %v6413, %v6422
  %v6483 = vadd.f32 %v6414, %v6422
  %v6484 = vadd.f32 %v6415, %v6422
  %v6485 = vadd.f32 %v6416, %v6422
  %v6486 = vadd.f32 %v6417, %v6422
  %v6487 = vmax.f32 %v6423, 0.0
  %v6488 = vmax.f32 %v6424, 0.0
  %v6489 = vmax.f32 %v6425, 0.0
  %v6490 = vmax.f32 %v6426, 0.0
  %v6491 = vmax.f32 %v6427, 0.0
  %v6492 = vmax.f32 %v6428, 0.0
  %v6493 = vmax.f32 %v6429, 0.0
  %v6494 = vmax.f32 %v6430, 0.0
  %v6495 = vmax.f32 %v6431, 0.0
  %v6496 = vmax.f32 %v6432, 0.0
  %v6497 = vmax.f32 %v6433, 0.0
  %v6498 = vmax.f32 %v6434, 0.0
  %v6499 = vmax.f32 %v6435, 0.0
  %v6500 = vmax.f32 %v6436, 0.0
  %v6501 = vmax.f32 %v6437, 0.0
  %v6502 = vmax.f32 %v6438, 0.0
  %v6503 = vmax.f32 %v6439, 0.0
  %v6504 = vmax.f32 %v6440, 0.0
  %v6505 = vmax.f32 %v6441, 0.0
  %v6506 = vmax.f32 %v6442, 0.0
  %v6507 = vmax.f32 %v6443, 0.0
  %v6508 = vmax.f32 %v6444, 0.0
  %v6509 = vmax.f32 %v6445, 0.0
  %v6510 = vmax.f32 %v6446, 0.0
  %v6511 = vmax.f32 %v6447, 0.0
  %v6512 = vmax.f32 %v6448, 0.0
  %v6513 = vmax.f32 %v6449, 0.0
  %v6514 = vmax.f32 %v6450, 0.0
  %v6515 = vmax.f32 %v6451, 0.0
  %v6516 = vmax.f32 %v6452, 0.0
  %v6517 = vmax.f32 %v6453, 0.0
  %v6518 = vmax.f32 %v6454, 0.0
  %v6519 = vmax.f32 %v6455, 0.0
  %v6520 = vmax.f32 %v6456, 0.0
  %v6521 = vmax.f32 %v6457, 0.0
  %v6522 = vmax.f32 %v6458, 0.0
  %v6523 = vmax.f32 %v6459, 0.0
  %v6524 = vmax.f32 %v6460, 0.0
  %v6525 = vmax.f32 %v6461, 0.0
  %v6526 = vmax.f32 %v6462, 0.0
  %v6527 = vmax.f32 %v6463, 0.0
  %v6528 = vmax.f32 %v6464, 0.0
  %v6529 = vmax.f32 %v6465, 0.0
  %v6530 = vmax.f32 %v6466, 0.0
  %v6531 = vmax.f32 %v6467, 0.0
  %v6532 = vmax.f32 %v6468, 0.0
  %v6533 = vmax.f32 %v6469, 0.0
  %v6534 = vmax.f32 %v6470, 0.0
  %v6535 = vmax.f32 %v6471, 0.0
  %v6536 = vmax.f32 %v6472, 0.0
  %v6537 = vmax.f32 %v6473, 0.0
  %v6538 = vmax.f32 %v6474, 0.0
  %v6539 = vmax.f32 %v6475, 0.0
  %v6540 = vmax.f32 %v6476, 0.0
  %v6541 = vmax.f32 %v6477, 0.0
  %v6542 = vmax.f32 %v6478, 0.0
  %v6543 = vmax.f32 %v6479, 0.0
  %v6544 = vmax.f32 %v6480, 0.0
  %v6545 = vmax.f32 %v6481, 0.0
  %v6546 = vmax.f32 %v6482, 0.0
  %v6547 = vmax.f32 %v6483, 0.0
  %v6548 = vmax.f32 %v6484, 0.0
  %v6549 = vmax.f32 %v6485, 0.0
  %v6550 = vmax.f32 %v6486, 0.0
  %6551 = vst.msk [vmem:[%s5] sm:$0xff] %vm1985, %v6487
  %6552 = vst.msk [vmem:[%s5 + $0x8] sm:$0xff] %vm1985, %v6488
  %6553 = vst.msk [vmem:[%s5 + $0x10] sm:$0xff] %vm1985, %v6489
  %6554 = vst.msk [vmem:[%s5 + $0x18] sm:$0xff] %vm1985, %v6490
  %6555 = vst.msk [vmem:[%s5 + $0x20] sm:$0xff] %vm1985, %v6491
  %6556 = vst.msk [vmem:[%s5 + $0x28] sm:$0xff] %vm1985, %v6492
  %6557 = vst.msk [vmem:[%s5 + $0x30] sm:$0xff] %vm1985, %v6493
  %6558 = vst.msk [vmem:[%s5 + $0x38] sm:$0xff] %vm1985, %v6494
  %6559 = vst.msk [vmem:[%s5 + $0x40] sm:$0xff] %vm1985, %v6495
  %6560 = vst.msk [vmem:[%s5 + $0x48] sm:$0xff] %vm1985, %v6496
  %6561 = vst.msk [vmem:[%s5 + $0x50] sm:$0xff] %vm1985, %v6497
  %6562 = vst.msk [vmem:[%s5 + $0x58] sm:$0xff] %vm1985, %v6498
  %6563 = vst.msk [vmem:[%s5 + $0x60] sm:$0xff] %vm1985, %v6499
  %6564 = vst.msk [vmem:[%s5 + $0x68] sm:$0xff] %vm1985, %v6500
  %6565 = vst.msk [vmem:[%s5 + $0x70] sm:$0xff] %vm1985, %v6501
  %6566 = vst.msk [vmem:[%s5 + $0x78] sm:$0xff] %vm1985, %v6502
  %6567 = vst.msk [vmem:[%s5 + $0x80] sm:$0xff] %vm1985, %v6503
  %6568 = vst.msk [vmem:[%s5 + $0x88] sm:$0xff] %vm1985, %v6504
  %6569 = vst.msk [vmem:[%s5 + $0x90] sm:$0xff] %vm1985, %v6505
  %6570 = vst.msk [vmem:[%s5 + $0x98] sm:$0xff] %vm1985, %v6506
  %6571 = vst.msk [vmem:[%s5 + $0xa0] sm:$0xff] %vm1985, %v6507
  %6572 = vst.msk [vmem:[%s5 + $0xa8] sm:$0xff] %vm1985, %v6508
  %6573 = vst.msk [vmem:[%s5 + $0xb0] sm:$0xff] %vm1985, %v6509
  %6574 = vst.msk [vmem:[%s5 + $0xb8] sm:$0xff] %vm1985, %v6510
  %6575 = vst.msk [vmem:[%s5 + $0xc0] sm:$0xff] %vm1985, %v6511
  %6576 = vst.msk [vmem:[%s5 + $0xc8] sm:$0xff] %vm1985, %v6512
  %6577 = vst.msk [vmem:[%s5 + $0xd0] sm:$0xff] %vm1985, %v6513
  %6578 = vst.msk [vmem:[%s5 + $0xd8] sm:$0xff] %vm1985, %v6514
  %6579 = vst.msk [vmem:[%s5 + $0xe0] sm:$0xff] %vm1985, %v6515
  %6580 = vst.msk [vmem:[%s5 + $0xe8] sm:$0xff] %vm1985, %v6516
  %6581 = vst.msk [vmem:[%s5 + $0xf0] sm:$0xff] %vm1985, %v6517
  %6582 = vst.msk [vmem:[%s5 + $0xf8] sm:$0xff] %vm1985, %v6518
  %6583 = vst.msk [vmem:[%s5 + $0x100] sm:$0xff] %vm1985, %v6519
  %6584 = vst.msk [vmem:[%s5 + $0x108] sm:$0xff] %vm1985, %v6520
  %6585 = vst.msk [vmem:[%s5 + $0x110] sm:$0xff] %vm1985, %v6521
  %6586 = vst.msk [vmem:[%s5 + $0x118] sm:$0xff] %vm1985, %v6522
  %6587 = vst.msk [vmem:[%s5 + $0x120] sm:$0xff] %vm1985, %v6523
  %6588 = vst.msk [vmem:[%s5 + $0x128] sm:$0xff] %vm1985, %v6524
  %6589 = vst.msk [vmem:[%s5 + $0x130] sm:$0xff] %vm1985, %v6525
  %6590 = vst.msk [vmem:[%s5 + $0x138] sm:$0xff] %vm1985, %v6526
  %6591 = vst.msk [vmem:[%s5 + $0x140] sm:$0xff] %vm1985, %v6527
  %6592 = vst.msk [vmem:[%s5 + $0x148] sm:$0xff] %vm1985, %v6528
  %6593 = vst.msk [vmem:[%s5 + $0x150] sm:$0xff] %vm1985, %v6529
  %6594 = vst.msk [vmem:[%s5 + $0x158] sm:$0xff] %vm1985, %v6530
  %6595 = vst.msk [vmem:[%s5 + $0x160] sm:$0xff] %vm1985, %v6531
  %6596 = vst.msk [vmem:[%s5 + $0x168] sm:$0xff] %vm1985, %v6532
  %6597 = vst.msk [vmem:[%s5 + $0x170] sm:$0xff] %vm1985, %v6533
  %6598 = vst.msk [vmem:[%s5 + $0x178] sm:$0xff] %vm1985, %v6534
  %6599 = vst.msk [vmem:[%s5 + $0x180] sm:$0xff] %vm1985, %v6535
  %6600 = vst.msk [vmem:[%s5 + $0x188] sm:$0xff] %vm1985, %v6536
  %6601 = vst.msk [vmem:[%s5 + $0x190] sm:$0xff] %vm1985, %v6537
  %6602 = vst.msk [vmem:[%s5 + $0x198] sm:$0xff] %vm1985, %v6538
  %6603 = vst.msk [vmem:[%s5 + $0x1a0] sm:$0xff] %vm1985, %v6539
  %6604 = vst.msk [vmem:[%s5 + $0x1a8] sm:$0xff] %vm1985, %v6540
  %6605 = vst.msk [vmem:[%s5 + $0x1b0] sm:$0xff] %vm1985, %v6541
  %6606 = vst.msk [vmem:[%s5 + $0x1b8] sm:$0xff] %vm1985, %v6542
  %6607 = vst.msk [vmem:[%s5 + $0x1c0] sm:$0xff] %vm1985, %v6543
  %6608 = vst.msk [vmem:[%s5 + $0x1c8] sm:$0xff] %vm1985, %v6544
  %6609 = vst.msk [vmem:[%s5 + $0x1d0] sm:$0xff] %vm1985, %v6545
  %6610 = vst.msk [vmem:[%s5 + $0x1d8] sm:$0xff] %vm1985, %v6546
  %6611 = vst.msk [vmem:[%s5 + $0x1e0] sm:$0xff] %vm1985, %v6547
  %6612 = vst.msk [vmem:[%s5 + $0x1e8] sm:$0xff] %vm1985, %v6548
  %6613 = vst.msk [vmem:[%s5 + $0x1f0] sm:$0xff] %vm1985, %v6549
  %6614 = vst.msk [vmem:[%s5 + $0x1f8] sm:$0xff] %vm1985, %v6550
  // Predicated region
  $region22: #{tpu_custom_call.1} parent=0 // pred_check
    _
  $region23: #{tpu_custom_call.1} parent=0 // pred_check_branch
    %6616 = sbr.rel (0) target = $region25
  $region24: #{tpu_custom_call.1} parent=0 // pred_region
    _
  $region25: #{tpu_custom_call.1} parent=0 // pred_fallthru
    _
  // Predicated region
  $region26: #{tpu_custom_call.1} parent=0 // pred_check
    _
  $region27: #{tpu_custom_call.1} parent=0 // pred_check_branch
    %6618 = sbr.rel (0) target = $region29
  $region28: #{tpu_custom_call.1} parent=0 // pred_region
    _
  $region29: #{tpu_custom_call.1} parent=0 // pred_fallthru
    _

</llo_original>
